<compile_context>
chip_gen: v7x
topology: tpu7x:2x2x1
jax: 0.10.0
libtpu: 0.0.40
codegen_flags: <defaults>
</compile_context>

<pallas_src>
import functools

import jax
import jax.numpy as jnp
from jax.experimental import pallas as pl
from jax.experimental.pallas import tpu as pltpu

H = 128           # lane-padded hidden width of every intermediate activation
LANE_TILE = 1024  # 8 * 128: alignment of the (1, tile_b) batch/lane axis


def _round_up(x, m):
    return (x + m - 1) // m * m


def _epilogue_dtype():
    """bf16 epilogues only on chips with bf16 VALUs (v6e / v7x); f32 otherwise."""
    kind = jax.devices()[0].device_kind.lower()
    return jnp.bfloat16 if ("v6" in kind or "v7" in kind) else jnp.float32


def _potential_kernel(x_ref,
                      w0_ref, b0_ref,
                      w1_ref, b1_ref,
                      w2_ref, b2_ref,
                      w3_ref, b3_ref,
                      wo_ref, bo_ref,
                      out_ref, *, epi):
    f32, bf16 = jnp.float32, jnp.bfloat16
    x = x_ref[...]                                            # (1, TB) f32

    # hidden0: Linear(1,32)+ReLU as a VPU outer product (K=1 -> skip the MXU).
    h = jnp.maximum(w0_ref[...] * x + b0_ref[...], 0.0)      # (H, TB) f32
    h = h.astype(bf16)

    # hidden1: Linear(32,32)+ReLU (zero-padded to 128x128), MXU, f32 acc.
    a = jnp.dot(w1_ref[...], h, preferred_element_type=f32)
    h = jnp.maximum(a.astype(epi) + b1_ref[...], 0.0).astype(bf16)

    # hidden2: Linear(32,128)+ReLU (K zero-padded to 128).
    a = jnp.dot(w2_ref[...], h, preferred_element_type=f32)
    h2 = jnp.maximum(a.astype(epi) + b2_ref[...], 0.0)        # (H, TB) epi

    # hidden3 + residual: h2 + ReLU(Linear(128,128)(h2))
    a = jnp.dot(w3_ref[...], h2.astype(bf16), preferred_element_type=f32)
    h3 = jnp.maximum(a.astype(epi) + b3_ref[...], 0.0)
    h = (h2 + h3).astype(bf16)                                 # (H, TB)

    # out head: Linear(128,1) as an 8-row-padded MXU dot (row 0 real),
    # f32 accumulation; keeps the reduction off the VALU/XLU.
    o = jnp.dot(wo_ref[...], h, preferred_element_type=f32)[0:1, :]
    o = o + bo_ref[...]                                        # (1, TB) f32
    out_ref[...] = 12.5 * jax.nn.sigmoid(o)


def prepare_params(params, epi):
    """Transpose to the batch-on-lanes layout (weights (out,in), biases (out,1)),
    zero-pad 32-wide dims to 128, cast matmul operands to bf16 and the
    epilogue biases to `epi`."""
    w0, b0, w1, b1, w2, b2, w3, b3, wo, bo = params
    f32, bf16 = jnp.float32, jnp.bfloat16
    w0c = jnp.zeros((H, 1), f32).at[:w0.shape[1], :].set(w0.T)             # (128,1)
    b0c = jnp.zeros((H, 1), f32).at[:b0.shape[1], :].set(b0.T)             # (128,1)
    w1t = jnp.zeros((H, H), f32).at[:w1.shape[1], :w1.shape[0]].set(w1.T)  # (128,128)
    b1c = jnp.zeros((H, 1), f32).at[:b1.shape[1], :].set(b1.T)             # (128,1)
    w2t = jnp.zeros((H, H), f32).at[:w2.shape[1], :w2.shape[0]].set(w2.T)  # (128,128)
    b2c = b2.T                                                             # (128,1)
    w3t = w3.T                                                             # (128,128)
    b3c = b3.T                                                             # (128,1)
    wop = jnp.zeros((8, H), f32).at[0:1, :].set(wo.T)                      # (8,128)
    return [w0c, b0c,
            w1t.astype(bf16), b1c.astype(epi),
            w2t.astype(bf16), b2c.astype(epi),
            w3t.astype(bf16), b3c.astype(epi),
            wop.astype(bf16), bo.astype(f32)]


def _choose_tiling(B, tile_b_max):
    tile_b_max = max(LANE_TILE, _round_up(tile_b_max, LANE_TILE))
    if B <= LANE_TILE:                       # tiny batch: a single aligned tile
        return LANE_TILE, LANE_TILE
    # Aim for >= 2 grid steps so the "parallel" batch axis can shard across
    # both TensorCores of a v7x chip, capped at tile_b_max.
    tile_b = min(tile_b_max, _round_up((B + 1) // 2, LANE_TILE))
    return tile_b, _round_up(B, tile_b)


def potential_forward(x, params, *, tile_b=None):
    """x: (B, 1) float32.  Returns (B, 1) float32."""
    epi = _epilogue_dtype()
    if tile_b is None:
        # Keep peak VMEM under the smallest default scoped limit (v5e: 16 MiB)
        # when epilogues are f32; bf16 chips (32 MiB default) take a bigger tile.
        tile_b = 8192 if epi is jnp.bfloat16 else 4096
    prepared = prepare_params(params, epi)

    B = x.shape[0]
    tile_b, Bp = _choose_tiling(B, tile_b)
    xT = x.reshape(1, B)                            # batch on the lane axis
    if Bp != B:
        xT = jnp.pad(xT, ((0, 0), (0, Bp - B)))     # tail columns sliced off below
    grid = (Bp // tile_b,)

    x_spec = pl.BlockSpec((1, tile_b), lambda i: (0, i))
    out_spec = pl.BlockSpec((1, tile_b), lambda i: (0, i))
    # Weights/biases: full block, constant index_map -> fetched once, resident.
    param_specs = [pl.BlockSpec(p.shape, lambda i: (0, 0)) for p in prepared]

    cost = pl.CostEstimate(
        flops=2 * Bp * (3 * H * H + 3 * H),   # 3 matmuls + hidden0/residual/head
        transcendentals=Bp,
        bytes_accessed=8 * Bp + sum(int(p.size) * p.dtype.itemsize
                                    for p in prepared),
    )

    out = pl.pallas_call(
        functools.partial(_potential_kernel, epi=epi),
        out_shape=jax.ShapeDtypeStruct((1, Bp), jnp.float32),
        grid=grid,
        in_specs=[x_spec] + param_specs,
        out_specs=out_spec,
        compiler_params=pltpu.CompilerParams(
            dimension_semantics=("parallel",)),
        cost_estimate=cost,
    )(xT, *prepared)
    return out[0, :B].reshape(B, 1)


def init_params(key):
    """Deterministic init matching Potential.__init__ shapes
    (weights stored as (in, out), biases as (1, out))."""
    dims = [(1, 32), (32, 32), (32, 128), (128, 128), (128, 1)]
    params = []
    for i, (fan_in, fan_out) in enumerate(dims):
        kw, kb = jax.random.split(jax.random.fold_in(key, i))
        bound = 1.0 / jnp.sqrt(fan_in)
        w = jax.random.uniform(kw, (fan_in, fan_out), jnp.float32, -bound, bound)
        b = jax.random.uniform(kb, (1, fan_out), jnp.float32, -bound, bound)
        params += [w, b]
    return params


def potential_reference_f32(x, params):
    """Plain-JAX f32 reference (exact module semantics)."""
    w0, b0, w1, b1, w2, b2, w3, b3, wo, bo = params
    h = jnp.maximum(x @ w0 + b0, 0.0)
    h = jnp.maximum(h @ w1 + b1, 0.0)
    h = jnp.maximum(h @ w2 + b2, 0.0)
    h = h + jnp.maximum(h @ w3 + b3, 0.0)
    return 12.5 * jax.nn.sigmoid(h @ wo + bo)


def potential_reference_matched(x, params, epi):
    """Plain-JAX reference mirroring the kernel's dtype flow
    (bf16 matmul operands, f32 accumulation, `epi` epilogues)."""
    w0, b0, w1, b1, w2, b2, w3, b3, wo, bo = params
    f32, bf16 = jnp.float32, jnp.bfloat16
    h = jnp.maximum(x * w0 + b0, 0.0).astype(bf16)            # hidden0 (K=1)
    a = jnp.dot(h, w1.astype(bf16), preferred_element_type=f32)
    h = jnp.maximum(a.astype(epi) + b1.astype(epi), 0.0).astype(bf16)
    a = jnp.dot(h, w2.astype(bf16), preferred_element_type=f32)
    h2 = jnp.maximum(a.astype(epi) + b2.astype(epi), 0.0)
    a = jnp.dot(h2.astype(bf16), w3.astype(bf16), preferred_element_type=f32)
    h3 = jnp.maximum(a.astype(epi) + b3.astype(epi), 0.0)
    h = (h2 + h3).astype(bf16)
    o = jnp.dot(h, wo.astype(bf16), preferred_element_type=f32) + bo
    return 12.5 * jax.nn.sigmoid(o)


if __name__ == "__main__":
    key = jax.random.PRNGKey(0)
    k_x, k_p = jax.random.split(key)
    params = init_params(k_p)
    epi = _epilogue_dtype()

    # Small primary test (matches the module's (batch, 1) input).
    B = 8
    x = jax.random.normal(k_x, (B, 1), jnp.float32)
    out = jax.block_until_ready(potential_forward(x, params))
    assert out.shape == (B, 1)

    # Tight check against a reference with the kernel's exact dtype flow.
    ref_m = potential_reference_matched(x, params, epi)
    assert jnp.allclose(out, ref_m, atol=5e-3, rtol=5e-3)

    # Loose check against the exact f32 module semantics (bf16 trade-off).
    ref_f = potential_reference_f32(x, params)
    assert jnp.allclose(out, ref_f, atol=2.5e-1, rtol=2.5e-1)

    # Multi-tile test: exercises tail padding and a >=2-step "parallel" grid.
    B2 = 2500
    x2 = jax.random.normal(jax.random.fold_in(k_x, 1), (B2, 1), jnp.float32)
    out2 = jax.block_until_ready(potential_forward(x2, params, tile_b=1024))
    assert out2.shape == (B2, 1)
    ref2 = potential_reference_matched(x2, params, epi)
    assert jnp.allclose(out2, ref2, atol=5e-3, rtol=5e-3)

    print("KERNEL_OK")
</pallas_src>

<mosaic_0001>
module attributes {stable_mosaic.version = 11 : i64} {
  func.func @_potential_kernel(%arg0: i32, %arg1: memref<1x1024xf32, #tpu.memory_space<vmem>>, %arg2: memref<128x1xf32, #tpu.memory_space<vmem>>, %arg3: memref<128x1xf32, #tpu.memory_space<vmem>>, %arg4: memref<128x128xbf16, #tpu.memory_space<vmem>>, %arg5: memref<128x1xf32, #tpu.memory_space<vmem>>, %arg6: memref<128x128xbf16, #tpu.memory_space<vmem>>, %arg7: memref<128x1xf32, #tpu.memory_space<vmem>>, %arg8: memref<128x128xbf16, #tpu.memory_space<vmem>>, %arg9: memref<128x1xf32, #tpu.memory_space<vmem>>, %arg10: memref<8x128xbf16, #tpu.memory_space<vmem>>, %arg11: memref<1x1xf32, #tpu.memory_space<vmem>>, %arg12: memref<1x1024xf32, #tpu.memory_space<vmem>>) attributes {dimension_semantics = [#tpu.dimension_semantics<parallel>], iteration_bounds = array<i64: 1>, scalar_prefetch = 0 : i64, scratch_operands = 0 : i64, tpu.core_type = #tpu.core_type<tc>, window_params = [{transform_indices = @transform_0, window_bounds = array<i64: 1, 1024>}, {pipeline_mode = #tpu.pipeline_mode<synchronous>, transform_indices = @transform_1, window_bounds = array<i64: 128, 1>}, {pipeline_mode = #tpu.pipeline_mode<synchronous>, transform_indices = @transform_2, window_bounds = array<i64: 128, 1>}, {pipeline_mode = #tpu.pipeline_mode<synchronous>, transform_indices = @transform_3, window_bounds = array<i64: 128, 128>}, {pipeline_mode = #tpu.pipeline_mode<synchronous>, transform_indices = @transform_4, window_bounds = array<i64: 128, 1>}, {pipeline_mode = #tpu.pipeline_mode<synchronous>, transform_indices = @transform_5, window_bounds = array<i64: 128, 128>}, {pipeline_mode = #tpu.pipeline_mode<synchronous>, transform_indices = @transform_6, window_bounds = array<i64: 128, 1>}, {pipeline_mode = #tpu.pipeline_mode<synchronous>, transform_indices = @transform_7, window_bounds = array<i64: 128, 128>}, {pipeline_mode = #tpu.pipeline_mode<synchronous>, transform_indices = @transform_8, window_bounds = array<i64: 128, 1>}, {pipeline_mode = #tpu.pipeline_mode<synchronous>, transform_indices = @transform_9, window_bounds = array<i64: 8, 128>}, {pipeline_mode = #tpu.pipeline_mode<synchronous>, transform_indices = @transform_10, window_bounds = array<i64: 1, 1>}, {transform_indices = @transform_11, window_bounds = array<i64: 1, 1024>}]} {
    %c0 = arith.constant 0 : index
    %c0_0 = arith.constant 0 : index
    %0 = vector.load %arg1[%c0, %c0_0] : memref<1x1024xf32, #tpu.memory_space<vmem>>, vector<1x1024xf32>
    %c0_1 = arith.constant 0 : index
    %c0_2 = arith.constant 0 : index
    %1 = vector.load %arg2[%c0_1, %c0_2] : memref<128x1xf32, #tpu.memory_space<vmem>>, vector<128x1xf32>
    %2 = vector.broadcast %1 : vector<128x1xf32> to vector<128x1024xf32>
    %3 = vector.broadcast %0 : vector<1x1024xf32> to vector<128x1024xf32>
    %4 = arith.mulf %2, %3 : vector<128x1024xf32>
    %c0_3 = arith.constant 0 : index
    %c0_4 = arith.constant 0 : index
    %5 = vector.load %arg3[%c0_3, %c0_4] : memref<128x1xf32, #tpu.memory_space<vmem>>, vector<128x1xf32>
    %6 = vector.broadcast %5 : vector<128x1xf32> to vector<128x1024xf32>
    %7 = arith.addf %4, %6 : vector<128x1024xf32>
    %cst = arith.constant 0.000000e+00 : f32
    %8 = vector.broadcast %cst : f32 to vector<128x1024xf32>
    %9 = arith.maximumf %7, %8 : vector<128x1024xf32>
    %10 = arith.truncf %9 : vector<128x1024xf32> to vector<128x1024xbf16>
    %c0_5 = arith.constant 0 : index
    %c0_6 = arith.constant 0 : index
    %11 = vector.load %arg4[%c0_5, %c0_6] : memref<128x128xbf16, #tpu.memory_space<vmem>>, vector<128x128xbf16>
    %cst_7 = arith.constant dense<0.000000e+00> : vector<128x1024xf32>
    %12 = tpu.matmul %11, %10, %cst_7 {dimension_numbers = #tpu.dot_dimension_numbers<[1], [0], [0], [1], [0, 0, 1, 1], [], []>} : vector<128x128xbf16>, vector<128x1024xbf16>, vector<128x1024xf32> -> vector<128x1024xf32>
    %c0_8 = arith.constant 0 : index
    %c0_9 = arith.constant 0 : index
    %13 = vector.load %arg5[%c0_8, %c0_9] : memref<128x1xf32, #tpu.memory_space<vmem>>, vector<128x1xf32>
    %14 = vector.broadcast %13 : vector<128x1xf32> to vector<128x1024xf32>
    %15 = arith.addf %12, %14 : vector<128x1024xf32>
    %cst_10 = arith.constant 0.000000e+00 : f32
    %16 = vector.broadcast %cst_10 : f32 to vector<128x1024xf32>
    %17 = arith.maximumf %15, %16 : vector<128x1024xf32>
    %18 = arith.truncf %17 : vector<128x1024xf32> to vector<128x1024xbf16>
    %c0_11 = arith.constant 0 : index
    %c0_12 = arith.constant 0 : index
    %19 = vector.load %arg6[%c0_11, %c0_12] : memref<128x128xbf16, #tpu.memory_space<vmem>>, vector<128x128xbf16>
    %cst_13 = arith.constant dense<0.000000e+00> : vector<128x1024xf32>
    %20 = tpu.matmul %19, %18, %cst_13 {dimension_numbers = #tpu.dot_dimension_numbers<[1], [0], [0], [1], [0, 0, 1, 1], [], []>} : vector<128x128xbf16>, vector<128x1024xbf16>, vector<128x1024xf32> -> vector<128x1024xf32>
    %c0_14 = arith.constant 0 : index
    %c0_15 = arith.constant 0 : index
    %21 = vector.load %arg7[%c0_14, %c0_15] : memref<128x1xf32, #tpu.memory_space<vmem>>, vector<128x1xf32>
    %22 = vector.broadcast %21 : vector<128x1xf32> to vector<128x1024xf32>
    %23 = arith.addf %20, %22 : vector<128x1024xf32>
    %cst_16 = arith.constant 0.000000e+00 : f32
    %24 = vector.broadcast %cst_16 : f32 to vector<128x1024xf32>
    %25 = arith.maximumf %23, %24 : vector<128x1024xf32>
    %c0_17 = arith.constant 0 : index
    %c0_18 = arith.constant 0 : index
    %26 = vector.load %arg8[%c0_17, %c0_18] : memref<128x128xbf16, #tpu.memory_space<vmem>>, vector<128x128xbf16>
    %27 = arith.truncf %25 : vector<128x1024xf32> to vector<128x1024xbf16>
    %cst_19 = arith.constant dense<0.000000e+00> : vector<128x1024xf32>
    %28 = tpu.matmul %26, %27, %cst_19 {dimension_numbers = #tpu.dot_dimension_numbers<[1], [0], [0], [1], [0, 0, 1, 1], [], []>} : vector<128x128xbf16>, vector<128x1024xbf16>, vector<128x1024xf32> -> vector<128x1024xf32>
    %c0_20 = arith.constant 0 : index
    %c0_21 = arith.constant 0 : index
    %29 = vector.load %arg9[%c0_20, %c0_21] : memref<128x1xf32, #tpu.memory_space<vmem>>, vector<128x1xf32>
    %30 = vector.broadcast %29 : vector<128x1xf32> to vector<128x1024xf32>
    %31 = arith.addf %28, %30 : vector<128x1024xf32>
    %cst_22 = arith.constant 0.000000e+00 : f32
    %32 = vector.broadcast %cst_22 : f32 to vector<128x1024xf32>
    %33 = arith.maximumf %31, %32 : vector<128x1024xf32>
    %34 = arith.addf %25, %33 : vector<128x1024xf32>
    %35 = arith.truncf %34 : vector<128x1024xf32> to vector<128x1024xbf16>
    %c0_23 = arith.constant 0 : index
    %c0_24 = arith.constant 0 : index
    %36 = vector.load %arg10[%c0_23, %c0_24] : memref<8x128xbf16, #tpu.memory_space<vmem>>, vector<8x128xbf16>
    %cst_25 = arith.constant dense<0.000000e+00> : vector<8x1024xf32>
    %37 = tpu.matmul %36, %35, %cst_25 {dimension_numbers = #tpu.dot_dimension_numbers<[1], [0], [0], [1], [0, 0, 1, 1], [], []>} : vector<8x128xbf16>, vector<128x1024xbf16>, vector<8x1024xf32> -> vector<8x1024xf32>
    %38 = vector.extract_strided_slice %37 {offsets = [0, 0], sizes = [1, 1024], strides = [1, 1]} : vector<8x1024xf32> to vector<1x1024xf32>
    %c0_26 = arith.constant 0 : index
    %c0_27 = arith.constant 0 : index
    %39 = vector.load %arg11[%c0_26, %c0_27] : memref<1x1xf32, #tpu.memory_space<vmem>>, vector<1x1xf32>
    %40 = vector.broadcast %39 : vector<1x1xf32> to vector<1x1024xf32>
    %41 = arith.addf %38, %40 : vector<1x1024xf32>
    %42 = arith.negf %41 : vector<1x1024xf32>
    %43 = math.exp %42 : vector<1x1024xf32>
    %cst_28 = arith.constant 1.000000e+00 : f32
    %44 = vector.broadcast %cst_28 : f32 to vector<1x1024xf32>
    %45 = arith.addf %44, %43 : vector<1x1024xf32>
    %46 = arith.divf %44, %45 : vector<1x1024xf32>
    %cst_29 = arith.constant 1.250000e+01 : f32
    %47 = vector.broadcast %cst_29 : f32 to vector<1x1024xf32>
    %48 = arith.mulf %47, %46 : vector<1x1024xf32>
    %c0_30 = arith.constant 0 : index
    %c0_31 = arith.constant 0 : index
    %49 = vector.load %arg12[%c0_30, %c0_31] : memref<1x1024xf32, #tpu.memory_space<vmem>>, vector<1x1024xf32>
    tpu.vector_store %arg12[%c0_30, %c0_31], %48 {strides = array<i32>} : memref<1x1024xf32, #tpu.memory_space<vmem>>, vector<1x1024xf32>,
    return
  }
  func.func @transform_0(%arg0: i32) -> (i32, i32) {
    %c0_i32 = arith.constant 0 : i32
    %c0_i32_0 = arith.constant 0 : i32
    return %c0_i32, %arg0 : i32, i32
  }
  func.func @transform_1(%arg0: i32) -> (i32, i32) {
    %c0_i32 = arith.constant 0 : i32
    %c0_i32_0 = arith.constant 0 : i32
    %c0_i32_1 = arith.constant 0 : i32
    return %c0_i32, %c0_i32_0 : i32, i32
  }
  func.func @transform_2(%arg0: i32) -> (i32, i32) {
    %c0_i32 = arith.constant 0 : i32
    %c0_i32_0 = arith.constant 0 : i32
    %c0_i32_1 = arith.constant 0 : i32
    return %c0_i32, %c0_i32_0 : i32, i32
  }
  func.func @transform_3(%arg0: i32) -> (i32, i32) {
    %c0_i32 = arith.constant 0 : i32
    %c0_i32_0 = arith.constant 0 : i32
    %c0_i32_1 = arith.constant 0 : i32
    return %c0_i32, %c0_i32_0 : i32, i32
  }
  func.func @transform_4(%arg0: i32) -> (i32, i32) {
    %c0_i32 = arith.constant 0 : i32
    %c0_i32_0 = arith.constant 0 : i32
    %c0_i32_1 = arith.constant 0 : i32
    return %c0_i32, %c0_i32_0 : i32, i32
  }
  func.func @transform_5(%arg0: i32) -> (i32, i32) {
    %c0_i32 = arith.constant 0 : i32
    %c0_i32_0 = arith.constant 0 : i32
    %c0_i32_1 = arith.constant 0 : i32
    return %c0_i32, %c0_i32_0 : i32, i32
  }
  func.func @transform_6(%arg0: i32) -> (i32, i32) {
    %c0_i32 = arith.constant 0 : i32
    %c0_i32_0 = arith.constant 0 : i32
    %c0_i32_1 = arith.constant 0 : i32
    return %c0_i32, %c0_i32_0 : i32, i32
  }
  func.func @transform_7(%arg0: i32) -> (i32, i32) {
    %c0_i32 = arith.constant 0 : i32
    %c0_i32_0 = arith.constant 0 : i32
    %c0_i32_1 = arith.constant 0 : i32
    return %c0_i32, %c0_i32_0 : i32, i32
  }
  func.func @transform_8(%arg0: i32) -> (i32, i32) {
    %c0_i32 = arith.constant 0 : i32
    %c0_i32_0 = arith.constant 0 : i32
    %c0_i32_1 = arith.constant 0 : i32
    return %c0_i32, %c0_i32_0 : i32, i32
  }
  func.func @transform_9(%arg0: i32) -> (i32, i32) {
    %c0_i32 = arith.constant 0 : i32
    %c0_i32_0 = arith.constant 0 : i32
    %c0_i32_1 = arith.constant 0 : i32
    return %c0_i32, %c0_i32_0 : i32, i32
  }
  func.func @transform_10(%arg0: i32) -> (i32, i32) {
    %c0_i32 = arith.constant 0 : i32
    %c0_i32_0 = arith.constant 0 : i32
    %c0_i32_1 = arith.constant 0 : i32
    return %c0_i32, %c0_i32_0 : i32, i32
  }
  func.func @transform_11(%arg0: i32) -> (i32, i32) {
    %c0_i32 = arith.constant 0 : i32
    %c0_i32_0 = arith.constant 0 : i32
    return %c0_i32, %arg0 : i32, i32
  }
}

</mosaic_0001>

<llo_original>
// kernel: tpu_custom_call.1
$region0: #{tpu_custom_call.1}
  #allocation0 [shape = 'u32[]', space=smem, size = 0x4, offset = 0x4, fixed_abs, tag = 'smem constant byte address 0x4 - core index']
  #allocation1 [shape = 'u32[144,128]{1,0:T(1,128)}', space=vmem, size = 0x12000, scoped, tag = 'internal scratch']
  #allocation2 [shape = 'f32[1,1]{1,0:T(1,128)S(1)}', space=vmem, size = 0x200, scoped, tag = 'scoped memory for tpu_custom_call.1']
  %s0 = inlined_call_operand.vmem [shape: f32[1,1024], index: 0, kind: input, shape index: {}]
  %s1 = inlined_call_operand.vmem [shape: f32[128,1], index: 1, kind: input, shape index: {}]
  %s2 = inlined_call_operand.vmem [shape: f32[128,1], index: 2, kind: input, shape index: {}]
  %s3 = inlined_call_operand.vmem [shape: bf16[128,128], index: 3, kind: input, shape index: {}]
  %s4 = inlined_call_operand.vmem [shape: f32[128,1], index: 4, kind: input, shape index: {}]
  %s5 = inlined_call_operand.vmem [shape: bf16[128,128], index: 5, kind: input, shape index: {}]
  %s6 = inlined_call_operand.vmem [shape: f32[128,1], index: 6, kind: input, shape index: {}]
  %s7 = inlined_call_operand.vmem [shape: bf16[128,128], index: 7, kind: input, shape index: {}]
  %s8 = inlined_call_operand.vmem [shape: f32[128,1], index: 8, kind: input, shape index: {}]
  %s9 = inlined_call_operand.vmem [shape: bf16[8,128], index: 9, kind: input, shape index: {}]
  %s10 = inlined_call_operand.<no memory space> [shape: f32[1,1], index: 10, kind: input, shape index: {}]
  %s11 = inlined_call_operand.hbm [shape: f32[1,1024], index: 11, kind: output, shape index: {}]
  %s12 = sld [smem:[#allocation0]]
  $region54: #{tpu_custom_call.1} parent=0
    _
  %s14 = ssub.s32 1, %s12
  %s15 = scalar_select 0, %s14, %s12
  %v16 = vstv %s10
  %17 = vst [vmem:[#allocation2] sm:$0x1] %v16
  $region1: #{tpu_custom_call.1} parent=0
    #allocation3 [shape = 'u8[4096]{0}', space=vmem, size = 0x1000, scoped, tag = 'output window, operand 0, single buffered']
    #allocation4 [shape = 's32[1]{0}', space=sflag, size = 0x4, scoped, tag = 'scoped memory for tpu_custom_call.1']
    %18 = vsyncpa [#allocation4], 0
    // Predicated region
    $region2: #{tpu_custom_call.1} parent=1 // pred_check
      _
    $region3: #{tpu_custom_call.1} parent=1 // pred_check_branch
      %20 = sbr.rel (0) target = $region5
    $region4: #{tpu_custom_call.1} parent=1 // pred_region
      _
    $region5: #{tpu_custom_call.1} parent=1 // pred_fallthru
      _
    // Predicated region
    $region6: #{tpu_custom_call.1} parent=1 // pred_check
      _
    $region7: #{tpu_custom_call.1} parent=1 // pred_check_branch
      %22 = sbr.rel (0) target = $region9
    $region8: #{tpu_custom_call.1} parent=1 // pred_region
      _
    $region9: #{tpu_custom_call.1} parent=1 // pred_fallthru
      _
    // Predicated region
    $region10: #{tpu_custom_call.1} parent=1 // pred_check
      _
    $region11: #{tpu_custom_call.1} parent=1 // pred_check_branch
      %24 = sbr.rel (0) target = $region13
    $region12: #{tpu_custom_call.1} parent=1 // pred_region
      _
    $region13: #{tpu_custom_call.1} parent=1 // pred_fallthru
      _
    // Predicated region
    $region14: #{tpu_custom_call.1} parent=1 // pred_check
      _
    $region15: #{tpu_custom_call.1} parent=1 // pred_check_branch
      %26 = sbr.rel (0) target = $region17
    $region16: #{tpu_custom_call.1} parent=1 // pred_region
      _
    $region17: #{tpu_custom_call.1} parent=1 // pred_fallthru
      _
    // Predicated region
    $region18: #{tpu_custom_call.1} parent=1 // pred_check
      _
    $region19: #{tpu_custom_call.1} parent=1 // pred_check_branch
      %28 = sbr.rel (0) target = $region21
    $region20: #{tpu_custom_call.1} parent=1 // pred_region
      _
    $region21: #{tpu_custom_call.1} parent=1 // pred_fallthru
      _
    // Predicated region
    $region22: #{tpu_custom_call.1} parent=1 // pred_check
      _
    $region23: #{tpu_custom_call.1} parent=1 // pred_check_branch
      %30 = sbr.rel (0) target = $region25
    $region24: #{tpu_custom_call.1} parent=1 // pred_region
      _
    $region25: #{tpu_custom_call.1} parent=1 // pred_fallthru
      _
    // Predicated region
    $region26: #{tpu_custom_call.1} parent=1 // pred_check
      _
    $region27: #{tpu_custom_call.1} parent=1 // pred_check_branch
      %32 = sbr.rel (0) target = $region29
    $region28: #{tpu_custom_call.1} parent=1 // pred_region
      _
    $region29: #{tpu_custom_call.1} parent=1 // pred_fallthru
      _
    // Predicated region
    $region30: #{tpu_custom_call.1} parent=1 // pred_check
      _
    $region31: #{tpu_custom_call.1} parent=1 // pred_check_branch
      %34 = sbr.rel (0) target = $region33
    $region32: #{tpu_custom_call.1} parent=1 // pred_region
      _
    $region33: #{tpu_custom_call.1} parent=1 // pred_fallthru
      _
    // Predicated region
    $region34: #{tpu_custom_call.1} parent=1 // pred_check
      _
    $region35: #{tpu_custom_call.1} parent=1 // pred_check_branch
      %36 = sbr.rel (0) target = $region37
    $region36: #{tpu_custom_call.1} parent=1 // pred_region
      _
    $region37: #{tpu_custom_call.1} parent=1 // pred_fallthru
      _
    // Predicated region
    $region38: #{tpu_custom_call.1} parent=1 // pred_check
      _
    $region39: #{tpu_custom_call.1} parent=1 // pred_check_branch
      %38 = sbr.rel (0) target = $region41
    $region40: #{tpu_custom_call.1} parent=1 // pred_region
      _
    $region41: #{tpu_custom_call.1} parent=1 // pred_fallthru
      _
    // Predicated region
    $region42: #{tpu_custom_call.1} parent=1 // pred_check
      _
    $region43: #{tpu_custom_call.1} parent=1 // pred_check_branch
      %40 = sbr.rel (0) target = $region45
    $region44: #{tpu_custom_call.1} parent=1 // pred_region
      _
    $region45: #{tpu_custom_call.1} parent=1 // pred_fallthru
      _
    %v42 = vld [vmem:[%s0] sm:$0xff]
    %v43 = vld [vmem:[%s1] sm:$0xff]
    %v44 = vld [vmem:[%s1 + $0x8] sm:$0xff]
    %v45 = vld [vmem:[%s1 + $0x10] sm:$0xff]
    %v46 = vld [vmem:[%s1 + $0x18] sm:$0xff]
    %v47 = vld [vmem:[%s1 + $0x20] sm:$0xff]
    %v48 = vld [vmem:[%s1 + $0x28] sm:$0xff]
    %v49 = vld [vmem:[%s1 + $0x30] sm:$0xff]
    %v50 = vld [vmem:[%s1 + $0x38] sm:$0xff]
    %v51 = vld [vmem:[%s1 + $0x40] sm:$0xff]
    %v52 = vld [vmem:[%s1 + $0x48] sm:$0xff]
    %v53 = vld [vmem:[%s1 + $0x50] sm:$0xff]
    %v54 = vld [vmem:[%s1 + $0x58] sm:$0xff]
    %v55 = vld [vmem:[%s1 + $0x60] sm:$0xff]
    %v56 = vld [vmem:[%s1 + $0x68] sm:$0xff]
    %v57 = vld [vmem:[%s1 + $0x70] sm:$0xff]
    %v58 = vld [vmem:[%s1 + $0x78] sm:$0xff]
    %60 = vset.pattern.permute.xlu0 0
    %61 = vperm.xlu0 %60, %v43
    %v62 = vpop.permute.xlu0 %61
    %65 = vset.pattern.permute.xlu0 0
    %66 = vperm.xlu0 %65, %v44
    %v67 = vpop.permute.xlu0 %66
    %70 = vset.pattern.permute.xlu0 0
    %71 = vperm.xlu0 %70, %v45
    %v72 = vpop.permute.xlu0 %71
    %75 = vset.pattern.permute.xlu0 0
    %76 = vperm.xlu0 %75, %v46
    %v77 = vpop.permute.xlu0 %76
    %80 = vset.pattern.permute.xlu0 0
    %81 = vperm.xlu0 %80, %v47
    %v82 = vpop.permute.xlu0 %81
    %85 = vset.pattern.permute.xlu0 0
    %86 = vperm.xlu0 %85, %v48
    %v87 = vpop.permute.xlu0 %86
    %90 = vset.pattern.permute.xlu0 0
    %91 = vperm.xlu0 %90, %v49
    %v92 = vpop.permute.xlu0 %91
    %95 = vset.pattern.permute.xlu0 0
    %96 = vperm.xlu0 %95, %v50
    %v97 = vpop.permute.xlu0 %96
    %100 = vset.pattern.permute.xlu0 0
    %101 = vperm.xlu0 %100, %v51
    %v102 = vpop.permute.xlu0 %101
    %105 = vset.pattern.permute.xlu0 0
    %106 = vperm.xlu0 %105, %v52
    %v107 = vpop.permute.xlu0 %106
    %110 = vset.pattern.permute.xlu0 0
    %111 = vperm.xlu0 %110, %v53
    %v112 = vpop.permute.xlu0 %111
    %115 = vset.pattern.permute.xlu0 0
    %116 = vperm.xlu0 %115, %v54
    %v117 = vpop.permute.xlu0 %116
    %120 = vset.pattern.permute.xlu0 0
    %121 = vperm.xlu0 %120, %v55
    %v122 = vpop.permute.xlu0 %121
    %125 = vset.pattern.permute.xlu0 0
    %126 = vperm.xlu0 %125, %v56
    %v127 = vpop.permute.xlu0 %126
    %130 = vset.pattern.permute.xlu0 0
    %131 = vperm.xlu0 %130, %v57
    %v132 = vpop.permute.xlu0 %131
    %135 = vset.pattern.permute.xlu0 0
    %136 = vperm.xlu0 %135, %v58
    %v137 = vpop.permute.xlu0 %136
    %v140 = vlaneseq
    %v141 = vshrl.u32 %v140, 7
    %v142 = vsub.s32 0, %v141
    %v143 = vrot.slane %v42, %v142
    %v144 = vlaneseq
    %v145 = vshrl.u32 %v144, 7
    %v146 = vsub.s32 1, %v145
    %v147 = vrot.slane %v42, %v146
    %v148 = vlaneseq
    %v149 = vshrl.u32 %v148, 7
    %v150 = vsub.s32 2, %v149
    %v151 = vrot.slane %v42, %v150
    %v152 = vlaneseq
    %v153 = vshrl.u32 %v152, 7
    %v154 = vsub.s32 3, %v153
    %v155 = vrot.slane %v42, %v154
    %v156 = vlaneseq
    %v157 = vshrl.u32 %v156, 7
    %v158 = vsub.s32 4, %v157
    %v159 = vrot.slane %v42, %v158
    %v160 = vlaneseq
    %v161 = vshrl.u32 %v160, 7
    %v162 = vsub.s32 5, %v161
    %v163 = vrot.slane %v42, %v162
    %v164 = vlaneseq
    %v165 = vshrl.u32 %v164, 7
    %v166 = vsub.s32 6, %v165
    %v167 = vrot.slane %v42, %v166
    %v168 = vlaneseq
    %v169 = vshrl.u32 %v168, 7
    %v170 = vsub.s32 7, %v169
    %v171 = vrot.slane %v42, %v170
    %v180 = vmul.f32 %v62, %v143
    %v181 = vmul.f32 %v62, %v147
    %v182 = vmul.f32 %v62, %v151
    %v183 = vmul.f32 %v62, %v155
    %v184 = vmul.f32 %v62, %v159
    %v185 = vmul.f32 %v62, %v163
    %v186 = vmul.f32 %v62, %v167
    %v187 = vmul.f32 %v62, %v171
    %v188 = vmul.f32 %v67, %v143
    %v189 = vmul.f32 %v67, %v147
    %v190 = vmul.f32 %v67, %v151
    %v191 = vmul.f32 %v67, %v155
    %v192 = vmul.f32 %v67, %v159
    %v193 = vmul.f32 %v67, %v163
    %v194 = vmul.f32 %v67, %v167
    %v195 = vmul.f32 %v67, %v171
    %v196 = vmul.f32 %v72, %v143
    %v197 = vmul.f32 %v72, %v147
    %v198 = vmul.f32 %v72, %v151
    %v199 = vmul.f32 %v72, %v155
    %v200 = vmul.f32 %v72, %v159
    %v201 = vmul.f32 %v72, %v163
    %v202 = vmul.f32 %v72, %v167
    %v203 = vmul.f32 %v72, %v171
    %v204 = vmul.f32 %v77, %v143
    %v205 = vmul.f32 %v77, %v147
    %v206 = vmul.f32 %v77, %v151
    %v207 = vmul.f32 %v77, %v155
    %v208 = vmul.f32 %v77, %v159
    %v209 = vmul.f32 %v77, %v163
    %v210 = vmul.f32 %v77, %v167
    %v211 = vmul.f32 %v77, %v171
    %v212 = vmul.f32 %v82, %v143
    %v213 = vmul.f32 %v82, %v147
    %v214 = vmul.f32 %v82, %v151
    %v215 = vmul.f32 %v82, %v155
    %v216 = vmul.f32 %v82, %v159
    %v217 = vmul.f32 %v82, %v163
    %v218 = vmul.f32 %v82, %v167
    %v219 = vmul.f32 %v82, %v171
    %v220 = vmul.f32 %v87, %v143
    %v221 = vmul.f32 %v87, %v147
    %v222 = vmul.f32 %v87, %v151
    %v223 = vmul.f32 %v87, %v155
    %v224 = vmul.f32 %v87, %v159
    %v225 = vmul.f32 %v87, %v163
    %v226 = vmul.f32 %v87, %v167
    %v227 = vmul.f32 %v87, %v171
    %v228 = vmul.f32 %v92, %v143
    %v229 = vmul.f32 %v92, %v147
    %v230 = vmul.f32 %v92, %v151
    %v231 = vmul.f32 %v92, %v155
    %v232 = vmul.f32 %v92, %v159
    %v233 = vmul.f32 %v92, %v163
    %v234 = vmul.f32 %v92, %v167
    %v235 = vmul.f32 %v92, %v171
    %v236 = vmul.f32 %v97, %v143
    %v237 = vmul.f32 %v97, %v147
    %v238 = vmul.f32 %v97, %v151
    %v239 = vmul.f32 %v97, %v155
    %v240 = vmul.f32 %v97, %v159
    %v241 = vmul.f32 %v97, %v163
    %v242 = vmul.f32 %v97, %v167
    %v243 = vmul.f32 %v97, %v171
    %v244 = vmul.f32 %v102, %v143
    %v245 = vmul.f32 %v102, %v147
    %v246 = vmul.f32 %v102, %v151
    %v247 = vmul.f32 %v102, %v155
    %v248 = vmul.f32 %v102, %v159
    %v249 = vmul.f32 %v102, %v163
    %v250 = vmul.f32 %v102, %v167
    %v251 = vmul.f32 %v102, %v171
    %v252 = vmul.f32 %v107, %v143
    %v253 = vmul.f32 %v107, %v147
    %v254 = vmul.f32 %v107, %v151
    %v255 = vmul.f32 %v107, %v155
    %v256 = vmul.f32 %v107, %v159
    %v257 = vmul.f32 %v107, %v163
    %v258 = vmul.f32 %v107, %v167
    %v259 = vmul.f32 %v107, %v171
    %v260 = vmul.f32 %v112, %v143
    %v261 = vmul.f32 %v112, %v147
    %v262 = vmul.f32 %v112, %v151
    %v263 = vmul.f32 %v112, %v155
    %v264 = vmul.f32 %v112, %v159
    %v265 = vmul.f32 %v112, %v163
    %v266 = vmul.f32 %v112, %v167
    %v267 = vmul.f32 %v112, %v171
    %v268 = vmul.f32 %v117, %v143
    %v269 = vmul.f32 %v117, %v147
    %v270 = vmul.f32 %v117, %v151
    %v271 = vmul.f32 %v117, %v155
    %v272 = vmul.f32 %v117, %v159
    %v273 = vmul.f32 %v117, %v163
    %v274 = vmul.f32 %v117, %v167
    %v275 = vmul.f32 %v117, %v171
    %v276 = vmul.f32 %v122, %v143
    %v277 = vmul.f32 %v122, %v147
    %v278 = vmul.f32 %v122, %v151
    %v279 = vmul.f32 %v122, %v155
    %v280 = vmul.f32 %v122, %v159
    %v281 = vmul.f32 %v122, %v163
    %v282 = vmul.f32 %v122, %v167
    %v283 = vmul.f32 %v122, %v171
    %v284 = vmul.f32 %v127, %v143
    %v285 = vmul.f32 %v127, %v147
    %v286 = vmul.f32 %v127, %v151
    %v287 = vmul.f32 %v127, %v155
    %v288 = vmul.f32 %v127, %v159
    %v289 = vmul.f32 %v127, %v163
    %v290 = vmul.f32 %v127, %v167
    %v291 = vmul.f32 %v127, %v171
    %v292 = vmul.f32 %v132, %v143
    %v293 = vmul.f32 %v132, %v147
    %v294 = vmul.f32 %v132, %v151
    %v295 = vmul.f32 %v132, %v155
    %v296 = vmul.f32 %v132, %v159
    %v297 = vmul.f32 %v132, %v163
    %v298 = vmul.f32 %v132, %v167
    %v299 = vmul.f32 %v132, %v171
    %v300 = vmul.f32 %v137, %v143
    %v301 = vmul.f32 %v137, %v147
    %v302 = vmul.f32 %v137, %v151
    %v303 = vmul.f32 %v137, %v155
    %v304 = vmul.f32 %v137, %v159
    %v305 = vmul.f32 %v137, %v163
    %v306 = vmul.f32 %v137, %v167
    %v307 = vmul.f32 %v137, %v171
    %v308 = vld [vmem:[%s2] sm:$0xff]
    %v309 = vld [vmem:[%s2 + $0x8] sm:$0xff]
    %v310 = vld [vmem:[%s2 + $0x10] sm:$0xff]
    %v311 = vld [vmem:[%s2 + $0x18] sm:$0xff]
    %v312 = vld [vmem:[%s2 + $0x20] sm:$0xff]
    %v313 = vld [vmem:[%s2 + $0x28] sm:$0xff]
    %v314 = vld [vmem:[%s2 + $0x30] sm:$0xff]
    %v315 = vld [vmem:[%s2 + $0x38] sm:$0xff]
    %v316 = vld [vmem:[%s2 + $0x40] sm:$0xff]
    %v317 = vld [vmem:[%s2 + $0x48] sm:$0xff]
    %v318 = vld [vmem:[%s2 + $0x50] sm:$0xff]
    %v319 = vld [vmem:[%s2 + $0x58] sm:$0xff]
    %v320 = vld [vmem:[%s2 + $0x60] sm:$0xff]
    %v321 = vld [vmem:[%s2 + $0x68] sm:$0xff]
    %v322 = vld [vmem:[%s2 + $0x70] sm:$0xff]
    %v323 = vld [vmem:[%s2 + $0x78] sm:$0xff]
    %325 = vset.pattern.permute.xlu0 0
    %326 = vperm.xlu0 %325, %v308
    %v327 = vpop.permute.xlu0 %326
    %330 = vset.pattern.permute.xlu0 0
    %331 = vperm.xlu0 %330, %v309
    %v332 = vpop.permute.xlu0 %331
    %335 = vset.pattern.permute.xlu0 0
    %336 = vperm.xlu0 %335, %v310
    %v337 = vpop.permute.xlu0 %336
    %340 = vset.pattern.permute.xlu0 0
    %341 = vperm.xlu0 %340, %v311
    %v342 = vpop.permute.xlu0 %341
    %345 = vset.pattern.permute.xlu0 0
    %346 = vperm.xlu0 %345, %v312
    %v347 = vpop.permute.xlu0 %346
    %350 = vset.pattern.permute.xlu0 0
    %351 = vperm.xlu0 %350, %v313
    %v352 = vpop.permute.xlu0 %351
    %355 = vset.pattern.permute.xlu0 0
    %356 = vperm.xlu0 %355, %v314
    %v357 = vpop.permute.xlu0 %356
    %360 = vset.pattern.permute.xlu0 0
    %361 = vperm.xlu0 %360, %v315
    %v362 = vpop.permute.xlu0 %361
    %365 = vset.pattern.permute.xlu0 0
    %366 = vperm.xlu0 %365, %v316
    %v367 = vpop.permute.xlu0 %366
    %370 = vset.pattern.permute.xlu0 0
    %371 = vperm.xlu0 %370, %v317
    %v372 = vpop.permute.xlu0 %371
    %375 = vset.pattern.permute.xlu0 0
    %376 = vperm.xlu0 %375, %v318
    %v377 = vpop.permute.xlu0 %376
    %380 = vset.pattern.permute.xlu0 0
    %381 = vperm.xlu0 %380, %v319
    %v382 = vpop.permute.xlu0 %381
    %385 = vset.pattern.permute.xlu0 0
    %386 = vperm.xlu0 %385, %v320
    %v387 = vpop.permute.xlu0 %386
    %390 = vset.pattern.permute.xlu0 0
    %391 = vperm.xlu0 %390, %v321
    %v392 = vpop.permute.xlu0 %391
    %395 = vset.pattern.permute.xlu0 0
    %396 = vperm.xlu0 %395, %v322
    %v397 = vpop.permute.xlu0 %396
    %400 = vset.pattern.permute.xlu0 0
    %401 = vperm.xlu0 %400, %v323
    %v402 = vpop.permute.xlu0 %401
    %v404 = vadd.f32 %v180, %v327
    %v405 = vadd.f32 %v181, %v327
    %v406 = vadd.f32 %v182, %v327
    %v407 = vadd.f32 %v183, %v327
    %v408 = vadd.f32 %v184, %v327
    %v409 = vadd.f32 %v185, %v327
    %v410 = vadd.f32 %v186, %v327
    %v411 = vadd.f32 %v187, %v327
    %v412 = vadd.f32 %v188, %v332
    %v413 = vadd.f32 %v189, %v332
    %v414 = vadd.f32 %v190, %v332
    %v415 = vadd.f32 %v191, %v332
    %v416 = vadd.f32 %v192, %v332
    %v417 = vadd.f32 %v193, %v332
    %v418 = vadd.f32 %v194, %v332
    %v419 = vadd.f32 %v195, %v332
    %v420 = vadd.f32 %v196, %v337
    %v421 = vadd.f32 %v197, %v337
    %v422 = vadd.f32 %v198, %v337
    %v423 = vadd.f32 %v199, %v337
    %v424 = vadd.f32 %v200, %v337
    %v425 = vadd.f32 %v201, %v337
    %v426 = vadd.f32 %v202, %v337
    %v427 = vadd.f32 %v203, %v337
    %v428 = vadd.f32 %v204, %v342
    %v429 = vadd.f32 %v205, %v342
    %v430 = vadd.f32 %v206, %v342
    %v431 = vadd.f32 %v207, %v342
    %v432 = vadd.f32 %v208, %v342
    %v433 = vadd.f32 %v209, %v342
    %v434 = vadd.f32 %v210, %v342
    %v435 = vadd.f32 %v211, %v342
    %v436 = vadd.f32 %v212, %v347
    %v437 = vadd.f32 %v213, %v347
    %v438 = vadd.f32 %v214, %v347
    %v439 = vadd.f32 %v215, %v347
    %v440 = vadd.f32 %v216, %v347
    %v441 = vadd.f32 %v217, %v347
    %v442 = vadd.f32 %v218, %v347
    %v443 = vadd.f32 %v219, %v347
    %v444 = vadd.f32 %v220, %v352
    %v445 = vadd.f32 %v221, %v352
    %v446 = vadd.f32 %v222, %v352
    %v447 = vadd.f32 %v223, %v352
    %v448 = vadd.f32 %v224, %v352
    %v449 = vadd.f32 %v225, %v352
    %v450 = vadd.f32 %v226, %v352
    %v451 = vadd.f32 %v227, %v352
    %v452 = vadd.f32 %v228, %v357
    %v453 = vadd.f32 %v229, %v357
    %v454 = vadd.f32 %v230, %v357
    %v455 = vadd.f32 %v231, %v357
    %v456 = vadd.f32 %v232, %v357
    %v457 = vadd.f32 %v233, %v357
    %v458 = vadd.f32 %v234, %v357
    %v459 = vadd.f32 %v235, %v357
    %v460 = vadd.f32 %v236, %v362
    %v461 = vadd.f32 %v237, %v362
    %v462 = vadd.f32 %v238, %v362
    %v463 = vadd.f32 %v239, %v362
    %v464 = vadd.f32 %v240, %v362
    %v465 = vadd.f32 %v241, %v362
    %v466 = vadd.f32 %v242, %v362
    %v467 = vadd.f32 %v243, %v362
    %v468 = vadd.f32 %v244, %v367
    %v469 = vadd.f32 %v245, %v367
    %v470 = vadd.f32 %v246, %v367
    %v471 = vadd.f32 %v247, %v367
    %v472 = vadd.f32 %v248, %v367
    %v473 = vadd.f32 %v249, %v367
    %v474 = vadd.f32 %v250, %v367
    %v475 = vadd.f32 %v251, %v367
    %v476 = vadd.f32 %v252, %v372
    %v477 = vadd.f32 %v253, %v372
    %v478 = vadd.f32 %v254, %v372
    %v479 = vadd.f32 %v255, %v372
    %v480 = vadd.f32 %v256, %v372
    %v481 = vadd.f32 %v257, %v372
    %v482 = vadd.f32 %v258, %v372
    %v483 = vadd.f32 %v259, %v372
    %v484 = vadd.f32 %v260, %v377
    %v485 = vadd.f32 %v261, %v377
    %v486 = vadd.f32 %v262, %v377
    %v487 = vadd.f32 %v263, %v377
    %v488 = vadd.f32 %v264, %v377
    %v489 = vadd.f32 %v265, %v377
    %v490 = vadd.f32 %v266, %v377
    %v491 = vadd.f32 %v267, %v377
    %v492 = vadd.f32 %v268, %v382
    %v493 = vadd.f32 %v269, %v382
    %v494 = vadd.f32 %v270, %v382
    %v495 = vadd.f32 %v271, %v382
    %v496 = vadd.f32 %v272, %v382
    %v497 = vadd.f32 %v273, %v382
    %v498 = vadd.f32 %v274, %v382
    %v499 = vadd.f32 %v275, %v382
    %v500 = vadd.f32 %v276, %v387
    %v501 = vadd.f32 %v277, %v387
    %v502 = vadd.f32 %v278, %v387
    %v503 = vadd.f32 %v279, %v387
    %v504 = vadd.f32 %v280, %v387
    %v505 = vadd.f32 %v281, %v387
    %v506 = vadd.f32 %v282, %v387
    %v507 = vadd.f32 %v283, %v387
    %v508 = vadd.f32 %v284, %v392
    %v509 = vadd.f32 %v285, %v392
    %v510 = vadd.f32 %v286, %v392
    %v511 = vadd.f32 %v287, %v392
    %v512 = vadd.f32 %v288, %v392
    %v513 = vadd.f32 %v289, %v392
    %v514 = vadd.f32 %v290, %v392
    %v515 = vadd.f32 %v291, %v392
    %v516 = vadd.f32 %v292, %v397
    %v517 = vadd.f32 %v293, %v397
    %v518 = vadd.f32 %v294, %v397
    %v519 = vadd.f32 %v295, %v397
    %v520 = vadd.f32 %v296, %v397
    %v521 = vadd.f32 %v297, %v397
    %v522 = vadd.f32 %v298, %v397
    %v523 = vadd.f32 %v299, %v397
    %v524 = vadd.f32 %v300, %v402
    %v525 = vadd.f32 %v301, %v402
    %v526 = vadd.f32 %v302, %v402
    %v527 = vadd.f32 %v303, %v402
    %v528 = vadd.f32 %v304, %v402
    %v529 = vadd.f32 %v305, %v402
    %v530 = vadd.f32 %v306, %v402
    %v531 = vadd.f32 %v307, %v402
    %v532 = vmax.f32 %v404, 0.0
    %v533 = vmax.f32 %v405, 0.0
    %v534 = vmax.f32 %v406, 0.0
    %v535 = vmax.f32 %v407, 0.0
    %v536 = vmax.f32 %v408, 0.0
    %v537 = vmax.f32 %v409, 0.0
    %v538 = vmax.f32 %v410, 0.0
    %v539 = vmax.f32 %v411, 0.0
    %v540 = vmax.f32 %v412, 0.0
    %v541 = vmax.f32 %v413, 0.0
    %v542 = vmax.f32 %v414, 0.0
    %v543 = vmax.f32 %v415, 0.0
    %v544 = vmax.f32 %v416, 0.0
    %v545 = vmax.f32 %v417, 0.0
    %v546 = vmax.f32 %v418, 0.0
    %v547 = vmax.f32 %v419, 0.0
    %v548 = vmax.f32 %v420, 0.0
    %v549 = vmax.f32 %v421, 0.0
    %v550 = vmax.f32 %v422, 0.0
    %v551 = vmax.f32 %v423, 0.0
    %v552 = vmax.f32 %v424, 0.0
    %v553 = vmax.f32 %v425, 0.0
    %v554 = vmax.f32 %v426, 0.0
    %v555 = vmax.f32 %v427, 0.0
    %v556 = vmax.f32 %v428, 0.0
    %v557 = vmax.f32 %v429, 0.0
    %v558 = vmax.f32 %v430, 0.0
    %v559 = vmax.f32 %v431, 0.0
    %v560 = vmax.f32 %v432, 0.0
    %v561 = vmax.f32 %v433, 0.0
    %v562 = vmax.f32 %v434, 0.0
    %v563 = vmax.f32 %v435, 0.0
    %v564 = vmax.f32 %v436, 0.0
    %v565 = vmax.f32 %v437, 0.0
    %v566 = vmax.f32 %v438, 0.0
    %v567 = vmax.f32 %v439, 0.0
    %v568 = vmax.f32 %v440, 0.0
    %v569 = vmax.f32 %v441, 0.0
    %v570 = vmax.f32 %v442, 0.0
    %v571 = vmax.f32 %v443, 0.0
    %v572 = vmax.f32 %v444, 0.0
    %v573 = vmax.f32 %v445, 0.0
    %v574 = vmax.f32 %v446, 0.0
    %v575 = vmax.f32 %v447, 0.0
    %v576 = vmax.f32 %v448, 0.0
    %v577 = vmax.f32 %v449, 0.0
    %v578 = vmax.f32 %v450, 0.0
    %v579 = vmax.f32 %v451, 0.0
    %v580 = vmax.f32 %v452, 0.0
    %v581 = vmax.f32 %v453, 0.0
    %v582 = vmax.f32 %v454, 0.0
    %v583 = vmax.f32 %v455, 0.0
    %v584 = vmax.f32 %v456, 0.0
    %v585 = vmax.f32 %v457, 0.0
    %v586 = vmax.f32 %v458, 0.0
    %v587 = vmax.f32 %v459, 0.0
    %v588 = vmax.f32 %v460, 0.0
    %v589 = vmax.f32 %v461, 0.0
    %v590 = vmax.f32 %v462, 0.0
    %v591 = vmax.f32 %v463, 0.0
    %v592 = vmax.f32 %v464, 0.0
    %v593 = vmax.f32 %v465, 0.0
    %v594 = vmax.f32 %v466, 0.0
    %v595 = vmax.f32 %v467, 0.0
    %v596 = vmax.f32 %v468, 0.0
    %v597 = vmax.f32 %v469, 0.0
    %v598 = vmax.f32 %v470, 0.0
    %v599 = vmax.f32 %v471, 0.0
    %v600 = vmax.f32 %v472, 0.0
    %v601 = vmax.f32 %v473, 0.0
    %v602 = vmax.f32 %v474, 0.0
    %v603 = vmax.f32 %v475, 0.0
    %v604 = vmax.f32 %v476, 0.0
    %v605 = vmax.f32 %v477, 0.0
    %v606 = vmax.f32 %v478, 0.0
    %v607 = vmax.f32 %v479, 0.0
    %v608 = vmax.f32 %v480, 0.0
    %v609 = vmax.f32 %v481, 0.0
    %v610 = vmax.f32 %v482, 0.0
    %v611 = vmax.f32 %v483, 0.0
    %v612 = vmax.f32 %v484, 0.0
    %v613 = vmax.f32 %v485, 0.0
    %v614 = vmax.f32 %v486, 0.0
    %v615 = vmax.f32 %v487, 0.0
    %v616 = vmax.f32 %v488, 0.0
    %v617 = vmax.f32 %v489, 0.0
    %v618 = vmax.f32 %v490, 0.0
    %v619 = vmax.f32 %v491, 0.0
    %v620 = vmax.f32 %v492, 0.0
    %v621 = vmax.f32 %v493, 0.0
    %v622 = vmax.f32 %v494, 0.0
    %v623 = vmax.f32 %v495, 0.0
    %v624 = vmax.f32 %v496, 0.0
    %v625 = vmax.f32 %v497, 0.0
    %v626 = vmax.f32 %v498, 0.0
    %v627 = vmax.f32 %v499, 0.0
    %v628 = vmax.f32 %v500, 0.0
    %v629 = vmax.f32 %v501, 0.0
    %v630 = vmax.f32 %v502, 0.0
    %v631 = vmax.f32 %v503, 0.0
    %v632 = vmax.f32 %v504, 0.0
    %v633 = vmax.f32 %v505, 0.0
    %v634 = vmax.f32 %v506, 0.0
    %v635 = vmax.f32 %v507, 0.0
    %v636 = vmax.f32 %v508, 0.0
    %v637 = vmax.f32 %v509, 0.0
    %v638 = vmax.f32 %v510, 0.0
    %v639 = vmax.f32 %v511, 0.0
    %v640 = vmax.f32 %v512, 0.0
    %v641 = vmax.f32 %v513, 0.0
    %v642 = vmax.f32 %v514, 0.0
    %v643 = vmax.f32 %v515, 0.0
    %v644 = vmax.f32 %v516, 0.0
    %v645 = vmax.f32 %v517, 0.0
    %v646 = vmax.f32 %v518, 0.0
    %v647 = vmax.f32 %v519, 0.0
    %v648 = vmax.f32 %v520, 0.0
    %v649 = vmax.f32 %v521, 0.0
    %v650 = vmax.f32 %v522, 0.0
    %v651 = vmax.f32 %v523, 0.0
    %v652 = vmax.f32 %v524, 0.0
    %v653 = vmax.f32 %v525, 0.0
    %v654 = vmax.f32 %v526, 0.0
    %v655 = vmax.f32 %v527, 0.0
    %v656 = vmax.f32 %v528, 0.0
    %v657 = vmax.f32 %v529, 0.0
    %v658 = vmax.f32 %v530, 0.0
    %v659 = vmax.f32 %v531, 0.0
    %v660 = vpack.c.bf16 %v540, %v532
    %v661 = vpack.c.bf16 %v541, %v533
    %v662 = vpack.c.bf16 %v542, %v534
    %v663 = vpack.c.bf16 %v543, %v535
    %v664 = vpack.c.bf16 %v544, %v536
    %v665 = vpack.c.bf16 %v545, %v537
    %v666 = vpack.c.bf16 %v546, %v538
    %v667 = vpack.c.bf16 %v547, %v539
    %v668 = vpack.c.bf16 %v556, %v548
    %v669 = vpack.c.bf16 %v557, %v549
    %v670 = vpack.c.bf16 %v558, %v550
    %v671 = vpack.c.bf16 %v559, %v551
    %v672 = vpack.c.bf16 %v560, %v552
    %v673 = vpack.c.bf16 %v561, %v553
    %v674 = vpack.c.bf16 %v562, %v554
    %v675 = vpack.c.bf16 %v563, %v555
    %v676 = vpack.c.bf16 %v572, %v564
    %v677 = vpack.c.bf16 %v573, %v565
    %v678 = vpack.c.bf16 %v574, %v566
    %v679 = vpack.c.bf16 %v575, %v567
    %v680 = vpack.c.bf16 %v576, %v568
    %v681 = vpack.c.bf16 %v577, %v569
    %v682 = vpack.c.bf16 %v578, %v570
    %v683 = vpack.c.bf16 %v579, %v571
    %v684 = vpack.c.bf16 %v588, %v580
    %v685 = vpack.c.bf16 %v589, %v581
    %v686 = vpack.c.bf16 %v590, %v582
    %v687 = vpack.c.bf16 %v591, %v583
    %v688 = vpack.c.bf16 %v592, %v584
    %v689 = vpack.c.bf16 %v593, %v585
    %v690 = vpack.c.bf16 %v594, %v586
    %v691 = vpack.c.bf16 %v595, %v587
    %v692 = vpack.c.bf16 %v604, %v596
    %v693 = vpack.c.bf16 %v605, %v597
    %v694 = vpack.c.bf16 %v606, %v598
    %v695 = vpack.c.bf16 %v607, %v599
    %v696 = vpack.c.bf16 %v608, %v600
    %v697 = vpack.c.bf16 %v609, %v601
    %v698 = vpack.c.bf16 %v610, %v602
    %v699 = vpack.c.bf16 %v611, %v603
    %v700 = vpack.c.bf16 %v620, %v612
    %v701 = vpack.c.bf16 %v621, %v613
    %v702 = vpack.c.bf16 %v622, %v614
    %v703 = vpack.c.bf16 %v623, %v615
    %v704 = vpack.c.bf16 %v624, %v616
    %v705 = vpack.c.bf16 %v625, %v617
    %v706 = vpack.c.bf16 %v626, %v618
    %v707 = vpack.c.bf16 %v627, %v619
    %v708 = vpack.c.bf16 %v636, %v628
    %v709 = vpack.c.bf16 %v637, %v629
    %v710 = vpack.c.bf16 %v638, %v630
    %v711 = vpack.c.bf16 %v639, %v631
    %v712 = vpack.c.bf16 %v640, %v632
    %v713 = vpack.c.bf16 %v641, %v633
    %v714 = vpack.c.bf16 %v642, %v634
    %v715 = vpack.c.bf16 %v643, %v635
    %v716 = vpack.c.bf16 %v652, %v644
    %v717 = vpack.c.bf16 %v653, %v645
    %v718 = vpack.c.bf16 %v654, %v646
    %v719 = vpack.c.bf16 %v655, %v647
    %v720 = vpack.c.bf16 %v656, %v648
    %v721 = vpack.c.bf16 %v657, %v649
    %v722 = vpack.c.bf16 %v658, %v650
    %v723 = vpack.c.bf16 %v659, %v651
    %v724 = vld [vmem:[%s3] sm:$0xf]
    %v725 = vld [vmem:[%s3 + $0x4] sm:$0xf]
    %v726 = vld [vmem:[%s3 + $0x8] sm:$0xf]
    %v727 = vld [vmem:[%s3 + $0xc] sm:$0xf]
    %v728 = vld [vmem:[%s3 + $0x10] sm:$0xf]
    %v729 = vld [vmem:[%s3 + $0x14] sm:$0xf]
    %v730 = vld [vmem:[%s3 + $0x18] sm:$0xf]
    %v731 = vld [vmem:[%s3 + $0x1c] sm:$0xf]
    %v732 = vld [vmem:[%s3 + $0x20] sm:$0xf]
    %v733 = vld [vmem:[%s3 + $0x24] sm:$0xf]
    %v734 = vld [vmem:[%s3 + $0x28] sm:$0xf]
    %v735 = vld [vmem:[%s3 + $0x2c] sm:$0xf]
    %v736 = vld [vmem:[%s3 + $0x30] sm:$0xf]
    %v737 = vld [vmem:[%s3 + $0x34] sm:$0xf]
    %v738 = vld [vmem:[%s3 + $0x38] sm:$0xf]
    %v739 = vld [vmem:[%s3 + $0x3c] sm:$0xf]
    %v740 = vld [vmem:[%s4] sm:$0xff]
    %v741 = vld [vmem:[%s4 + $0x8] sm:$0xff]
    %v742 = vld [vmem:[%s4 + $0x10] sm:$0xff]
    %v743 = vld [vmem:[%s4 + $0x18] sm:$0xff]
    %v744 = vld [vmem:[%s4 + $0x20] sm:$0xff]
    %v745 = vld [vmem:[%s4 + $0x28] sm:$0xff]
    %v746 = vld [vmem:[%s4 + $0x30] sm:$0xff]
    %v747 = vld [vmem:[%s4 + $0x38] sm:$0xff]
    %v748 = vld [vmem:[%s4 + $0x40] sm:$0xff]
    %v749 = vld [vmem:[%s4 + $0x48] sm:$0xff]
    %v750 = vld [vmem:[%s4 + $0x50] sm:$0xff]
    %v751 = vld [vmem:[%s4 + $0x58] sm:$0xff]
    %v752 = vld [vmem:[%s4 + $0x60] sm:$0xff]
    %v753 = vld [vmem:[%s4 + $0x68] sm:$0xff]
    %v754 = vld [vmem:[%s4 + $0x70] sm:$0xff]
    %v755 = vld [vmem:[%s4 + $0x78] sm:$0xff]
    %757 = vset.pattern.permute.xlu0 0
    %758 = vperm.xlu0 %757, %v740
    %v759 = vpop.permute.xlu0 %758
    %762 = vset.pattern.permute.xlu0 0
    %763 = vperm.xlu0 %762, %v741
    %v764 = vpop.permute.xlu0 %763
    %767 = vset.pattern.permute.xlu0 0
    %768 = vperm.xlu0 %767, %v742
    %v769 = vpop.permute.xlu0 %768
    %772 = vset.pattern.permute.xlu0 0
    %773 = vperm.xlu0 %772, %v743
    %v774 = vpop.permute.xlu0 %773
    %777 = vset.pattern.permute.xlu0 0
    %778 = vperm.xlu0 %777, %v744
    %v779 = vpop.permute.xlu0 %778
    %782 = vset.pattern.permute.xlu0 0
    %783 = vperm.xlu0 %782, %v745
    %v784 = vpop.permute.xlu0 %783
    %787 = vset.pattern.permute.xlu0 0
    %788 = vperm.xlu0 %787, %v746
    %v789 = vpop.permute.xlu0 %788
    %792 = vset.pattern.permute.xlu0 0
    %793 = vperm.xlu0 %792, %v747
    %v794 = vpop.permute.xlu0 %793
    %797 = vset.pattern.permute.xlu0 0
    %798 = vperm.xlu0 %797, %v748
    %v799 = vpop.permute.xlu0 %798
    %802 = vset.pattern.permute.xlu0 0
    %803 = vperm.xlu0 %802, %v749
    %v804 = vpop.permute.xlu0 %803
    %807 = vset.pattern.permute.xlu0 0
    %808 = vperm.xlu0 %807, %v750
    %v809 = vpop.permute.xlu0 %808
    %812 = vset.pattern.permute.xlu0 0
    %813 = vperm.xlu0 %812, %v751
    %v814 = vpop.permute.xlu0 %813
    %817 = vset.pattern.permute.xlu0 0
    %818 = vperm.xlu0 %817, %v752
    %v819 = vpop.permute.xlu0 %818
    %822 = vset.pattern.permute.xlu0 0
    %823 = vperm.xlu0 %822, %v753
    %v824 = vpop.permute.xlu0 %823
    %827 = vset.pattern.permute.xlu0 0
    %828 = vperm.xlu0 %827, %v754
    %v829 = vpop.permute.xlu0 %828
    %832 = vset.pattern.permute.xlu0 0
    %833 = vperm.xlu0 %832, %v755
    %v834 = vpop.permute.xlu0 %833
    %v852 = vunpack.c.l.b16 %v724
    %v853 = vunpack.c.l.b16 %v725
    %v854 = vunpack.c.l.b16 %v726
    %v855 = vunpack.c.l.b16 %v727
    %v856 = vunpack.c.l.b16 %v728
    %v857 = vunpack.c.l.b16 %v729
    %v858 = vunpack.c.l.b16 %v730
    %v859 = vunpack.c.l.b16 %v731
    %v860 = vunpack.c.l.b16 %v732
    %v861 = vunpack.c.l.b16 %v733
    %v862 = vunpack.c.l.b16 %v734
    %v863 = vunpack.c.l.b16 %v735
    %v864 = vunpack.c.l.b16 %v736
    %v865 = vunpack.c.l.b16 %v737
    %v866 = vunpack.c.l.b16 %v738
    %v867 = vunpack.c.l.b16 %v739
    %v868 = vpack.c.b16 %v853, %v852
    %v869 = vpack.c.b16 %v855, %v854
    %v870 = vpack.c.b16 %v857, %v856
    %v871 = vpack.c.b16 %v859, %v858
    %v872 = vpack.c.b16 %v861, %v860
    %v873 = vpack.c.b16 %v863, %v862
    %v874 = vpack.c.b16 %v865, %v864
    %v875 = vpack.c.b16 %v867, %v866
    %884 = vmatprep.subr.bf16.mxu0 %v661
    %885 = vmatpush1.bf16.msra.mxu0 %v660
    %886 = vmatprep.subr.bf16.mxu0 %v669
    %887 = vmatpush1.bf16.msra.mxu0 %v668
    %888 = vmatprep.subr.bf16.mxu0 %v677
    %889 = vmatpush1.bf16.msra.mxu0 %v676
    %890 = vmatprep.subr.bf16.mxu0 %v685
    %891 = vmatpush1.bf16.msra.mxu0 %v684
    %892 = vmatprep.subr.bf16.mxu0 %v693
    %893 = vmatpush1.bf16.msra.mxu0 %v692
    %894 = vmatprep.subr.bf16.mxu0 %v701
    %895 = vmatpush1.bf16.msra.mxu0 %v700
    %896 = vmatprep.subr.bf16.mxu0 %v709
    %897 = vmatpush1.bf16.msra.mxu0 %v708
    %898 = vmatprep.subr.bf16.mxu0 %v717
    %899 = vmatpush1.bf16.msra.mxu0 %v716
    %900 = vmatprep.subr.bf16.mxu0 0
    %901 = vmatpush1.bf16.msra.mxu0 0
    %902 = vmatprep.subr.bf16.mxu0 0
    %903 = vmatpush1.bf16.msra.mxu0 0
    %904 = vmatprep.subr.bf16.mxu0 0
    %905 = vmatpush1.bf16.msra.mxu0 0
    %906 = vmatprep.subr.bf16.mxu0 0
    %907 = vmatpush1.bf16.msra.mxu0 0
    %908 = vmatprep.subr.bf16.mxu0 0
    %909 = vmatpush1.bf16.msra.mxu0 0
    %910 = vmatprep.subr.bf16.mxu0 0
    %911 = vmatpush1.bf16.msra.mxu0 0
    %912 = vmatprep.subr.bf16.mxu0 0
    %913 = vmatpush1.bf16.msra.mxu0 0
    %914 = vmatprep.subr.bf16.mxu0 0
    %915 = vmatpush1.bf16.msra.mxu0 0
    %916 = vmatprep.mubr.bf16.mxu0 0
    %917 = vmatmul.mubr.bf16.gmra.mrb[0].mxu0 %v868
    %v918 = vpop.f32.mrb[0].mxu0
    %v919 = vadd.f32 %v759, %v918
    %v920 = vpop.f32.mrb[0].mxu0
    %v921 = vadd.f32 %v759, %v920
    %v922 = vpop.f32.mrb[0].mxu0
    %v923 = vadd.f32 %v764, %v922
    %v924 = vpop.f32.mrb[0].mxu0
    %v925 = vadd.f32 %v764, %v924
    %926 = vmatprep.mubr.bf16.mxu0 0
    %927 = vmatmul.mubr.bf16.gmra.mrb[0].mxu0 %v869
    %v928 = vpop.f32.mrb[0].mxu0
    %v929 = vadd.f32 %v769, %v928
    %v930 = vpop.f32.mrb[0].mxu0
    %v931 = vadd.f32 %v769, %v930
    %v932 = vpop.f32.mrb[0].mxu0
    %v933 = vadd.f32 %v774, %v932
    %v934 = vpop.f32.mrb[0].mxu0
    %v935 = vadd.f32 %v774, %v934
    %936 = vmatprep.mubr.bf16.mxu0 0
    %937 = vmatmul.mubr.bf16.gmra.mrb[0].mxu0 %v870
    %v938 = vpop.f32.mrb[0].mxu0
    %v939 = vadd.f32 %v779, %v938
    %v940 = vpop.f32.mrb[0].mxu0
    %v941 = vadd.f32 %v779, %v940
    %v942 = vpop.f32.mrb[0].mxu0
    %v943 = vadd.f32 %v784, %v942
    %v944 = vpop.f32.mrb[0].mxu0
    %v945 = vadd.f32 %v784, %v944
    %946 = vmatprep.mubr.bf16.mxu0 0
    %947 = vmatmul.mubr.bf16.gmra.mrb[0].mxu0 %v871
    %v948 = vpop.f32.mrb[0].mxu0
    %v949 = vadd.f32 %v789, %v948
    %v950 = vpop.f32.mrb[0].mxu0
    %v951 = vadd.f32 %v789, %v950
    %v952 = vpop.f32.mrb[0].mxu0
    %v953 = vadd.f32 %v794, %v952
    %v954 = vpop.f32.mrb[0].mxu0
    %v955 = vadd.f32 %v794, %v954
    %956 = vmatprep.mubr.bf16.mxu0 0
    %957 = vmatmul.mubr.bf16.gmra.mrb[0].mxu0 %v872
    %v958 = vpop.f32.mrb[0].mxu0
    %v959 = vadd.f32 %v799, %v958
    %v960 = vpop.f32.mrb[0].mxu0
    %v961 = vadd.f32 %v799, %v960
    %v962 = vpop.f32.mrb[0].mxu0
    %v963 = vadd.f32 %v804, %v962
    %v964 = vpop.f32.mrb[0].mxu0
    %v965 = vadd.f32 %v804, %v964
    %966 = vmatprep.mubr.bf16.mxu0 0
    %967 = vmatmul.mubr.bf16.gmra.mrb[0].mxu0 %v873
    %v968 = vpop.f32.mrb[0].mxu0
    %v969 = vadd.f32 %v809, %v968
    %v970 = vpop.f32.mrb[0].mxu0
    %v971 = vadd.f32 %v809, %v970
    %v972 = vpop.f32.mrb[0].mxu0
    %v973 = vadd.f32 %v814, %v972
    %v974 = vpop.f32.mrb[0].mxu0
    %v975 = vadd.f32 %v814, %v974
    %976 = vmatprep.mubr.bf16.mxu0 0
    %977 = vmatmul.mubr.bf16.gmra.mrb[0].mxu0 %v874
    %v978 = vpop.f32.mrb[0].mxu0
    %v979 = vadd.f32 %v819, %v978
    %v980 = vpop.f32.mrb[0].mxu0
    %v981 = vadd.f32 %v819, %v980
    %v982 = vpop.f32.mrb[0].mxu0
    %v983 = vadd.f32 %v824, %v982
    %v984 = vpop.f32.mrb[0].mxu0
    %v985 = vadd.f32 %v824, %v984
    %986 = vmatprep.mubr.bf16.mxu0 0
    %987 = vmatmul.mubr.bf16.gmra.mrb[0].mxu0 %v875
    %v988 = vpop.f32.mrb[0].mxu0
    %v989 = vadd.f32 %v829, %v988
    %v990 = vpop.f32.mrb[0].mxu0
    %v991 = vadd.f32 %v829, %v990
    %v992 = vpop.f32.mrb[0].mxu0
    %v993 = vadd.f32 %v834, %v992
    %v994 = vpop.f32.mrb[0].mxu0
    %v995 = vadd.f32 %v834, %v994
    %996 = vdwg.mxu0
    %997 = vmatprep.subr.bf16.mxu0 %v663
    %998 = vmatpush1.bf16.msra.mxu0 %v662
    %999 = vmatprep.subr.bf16.mxu0 %v671
    %1000 = vmatpush1.bf16.msra.mxu0 %v670
    %1001 = vmatprep.subr.bf16.mxu0 %v679
    %1002 = vmatpush1.bf16.msra.mxu0 %v678
    %1003 = vmatprep.subr.bf16.mxu0 %v687
    %1004 = vmatpush1.bf16.msra.mxu0 %v686
    %1005 = vmatprep.subr.bf16.mxu0 %v695
    %1006 = vmatpush1.bf16.msra.mxu0 %v694
    %1007 = vmatprep.subr.bf16.mxu0 %v703
    %1008 = vmatpush1.bf16.msra.mxu0 %v702
    %1009 = vmatprep.subr.bf16.mxu0 %v711
    %1010 = vmatpush1.bf16.msra.mxu0 %v710
    %1011 = vmatprep.subr.bf16.mxu0 %v719
    %1012 = vmatpush1.bf16.msra.mxu0 %v718
    %1013 = vmatprep.subr.bf16.mxu0 0
    %1014 = vmatpush1.bf16.msra.mxu0 0
    %1015 = vmatprep.subr.bf16.mxu0 0
    %1016 = vmatpush1.bf16.msra.mxu0 0
    %1017 = vmatprep.subr.bf16.mxu0 0
    %1018 = vmatpush1.bf16.msra.mxu0 0
    %1019 = vmatprep.subr.bf16.mxu0 0
    %1020 = vmatpush1.bf16.msra.mxu0 0
    %1021 = vmatprep.subr.bf16.mxu0 0
    %1022 = vmatpush1.bf16.msra.mxu0 0
    %1023 = vmatprep.subr.bf16.mxu0 0
    %1024 = vmatpush1.bf16.msra.mxu0 0
    %1025 = vmatprep.subr.bf16.mxu0 0
    %1026 = vmatpush1.bf16.msra.mxu0 0
    %1027 = vmatprep.subr.bf16.mxu0 0
    %1028 = vmatpush1.bf16.msra.mxu0 0
    %1029 = vmatprep.mubr.bf16.mxu0 0
    %1030 = vmatmul.mubr.bf16.gmra.mrb[0].mxu0 %v868
    %v1031 = vpop.f32.mrb[0].mxu0
    %v1032 = vadd.f32 %v759, %v1031
    %v1033 = vpop.f32.mrb[0].mxu0
    %v1034 = vadd.f32 %v759, %v1033
    %v1035 = vpop.f32.mrb[0].mxu0
    %v1036 = vadd.f32 %v764, %v1035
    %v1037 = vpop.f32.mrb[0].mxu0
    %v1038 = vadd.f32 %v764, %v1037
    %1039 = vmatprep.mubr.bf16.mxu0 0
    %1040 = vmatmul.mubr.bf16.gmra.mrb[0].mxu0 %v869
    %v1041 = vpop.f32.mrb[0].mxu0
    %v1042 = vadd.f32 %v769, %v1041
    %v1043 = vpop.f32.mrb[0].mxu0
    %v1044 = vadd.f32 %v769, %v1043
    %v1045 = vpop.f32.mrb[0].mxu0
    %v1046 = vadd.f32 %v774, %v1045
    %v1047 = vpop.f32.mrb[0].mxu0
    %v1048 = vadd.f32 %v774, %v1047
    %1049 = vmatprep.mubr.bf16.mxu0 0
    %1050 = vmatmul.mubr.bf16.gmra.mrb[0].mxu0 %v870
    %v1051 = vpop.f32.mrb[0].mxu0
    %v1052 = vadd.f32 %v779, %v1051
    %v1053 = vpop.f32.mrb[0].mxu0
    %v1054 = vadd.f32 %v779, %v1053
    %v1055 = vpop.f32.mrb[0].mxu0
    %v1056 = vadd.f32 %v784, %v1055
    %v1057 = vpop.f32.mrb[0].mxu0
    %v1058 = vadd.f32 %v784, %v1057
    %1059 = vmatprep.mubr.bf16.mxu0 0
    %1060 = vmatmul.mubr.bf16.gmra.mrb[0].mxu0 %v871
    %v1061 = vpop.f32.mrb[0].mxu0
    %v1062 = vadd.f32 %v789, %v1061
    %v1063 = vpop.f32.mrb[0].mxu0
    %v1064 = vadd.f32 %v789, %v1063
    %v1065 = vpop.f32.mrb[0].mxu0
    %v1066 = vadd.f32 %v794, %v1065
    %v1067 = vpop.f32.mrb[0].mxu0
    %v1068 = vadd.f32 %v794, %v1067
    %1069 = vmatprep.mubr.bf16.mxu0 0
    %1070 = vmatmul.mubr.bf16.gmra.mrb[0].mxu0 %v872
    %v1071 = vpop.f32.mrb[0].mxu0
    %v1072 = vadd.f32 %v799, %v1071
    %v1073 = vpop.f32.mrb[0].mxu0
    %v1074 = vadd.f32 %v799, %v1073
    %v1075 = vpop.f32.mrb[0].mxu0
    %v1076 = vadd.f32 %v804, %v1075
    %v1077 = vpop.f32.mrb[0].mxu0
    %v1078 = vadd.f32 %v804, %v1077
    %1079 = vmatprep.mubr.bf16.mxu0 0
    %1080 = vmatmul.mubr.bf16.gmra.mrb[0].mxu0 %v873
    %v1081 = vpop.f32.mrb[0].mxu0
    %v1082 = vadd.f32 %v809, %v1081
    %v1083 = vpop.f32.mrb[0].mxu0
    %v1084 = vadd.f32 %v809, %v1083
    %v1085 = vpop.f32.mrb[0].mxu0
    %v1086 = vadd.f32 %v814, %v1085
    %v1087 = vpop.f32.mrb[0].mxu0
    %v1088 = vadd.f32 %v814, %v1087
    %1089 = vmatprep.mubr.bf16.mxu0 0
    %1090 = vmatmul.mubr.bf16.gmra.mrb[0].mxu0 %v874
    %v1091 = vpop.f32.mrb[0].mxu0
    %v1092 = vadd.f32 %v819, %v1091
    %v1093 = vpop.f32.mrb[0].mxu0
    %v1094 = vadd.f32 %v819, %v1093
    %v1095 = vpop.f32.mrb[0].mxu0
    %v1096 = vadd.f32 %v824, %v1095
    %v1097 = vpop.f32.mrb[0].mxu0
    %v1098 = vadd.f32 %v824, %v1097
    %1099 = vmatprep.mubr.bf16.mxu0 0
    %1100 = vmatmul.mubr.bf16.gmra.mrb[0].mxu0 %v875
    %v1101 = vpop.f32.mrb[0].mxu0
    %v1102 = vadd.f32 %v829, %v1101
    %v1103 = vpop.f32.mrb[0].mxu0
    %v1104 = vadd.f32 %v829, %v1103
    %v1105 = vpop.f32.mrb[0].mxu0
    %v1106 = vadd.f32 %v834, %v1105
    %v1107 = vpop.f32.mrb[0].mxu0
    %v1108 = vadd.f32 %v834, %v1107
    %1109 = vdwg.mxu0
    %1110 = vmatprep.subr.bf16.mxu0 %v665
    %1111 = vmatpush1.bf16.msra.mxu0 %v664
    %1112 = vmatprep.subr.bf16.mxu0 %v673
    %1113 = vmatpush1.bf16.msra.mxu0 %v672
    %1114 = vmatprep.subr.bf16.mxu0 %v681
    %1115 = vmatpush1.bf16.msra.mxu0 %v680
    %1116 = vmatprep.subr.bf16.mxu0 %v689
    %1117 = vmatpush1.bf16.msra.mxu0 %v688
    %1118 = vmatprep.subr.bf16.mxu0 %v697
    %1119 = vmatpush1.bf16.msra.mxu0 %v696
    %1120 = vmatprep.subr.bf16.mxu0 %v705
    %1121 = vmatpush1.bf16.msra.mxu0 %v704
    %1122 = vmatprep.subr.bf16.mxu0 %v713
    %1123 = vmatpush1.bf16.msra.mxu0 %v712
    %1124 = vmatprep.subr.bf16.mxu0 %v721
    %1125 = vmatpush1.bf16.msra.mxu0 %v720
    %1126 = vmatprep.subr.bf16.mxu0 0
    %1127 = vmatpush1.bf16.msra.mxu0 0
    %1128 = vmatprep.subr.bf16.mxu0 0
    %1129 = vmatpush1.bf16.msra.mxu0 0
    %1130 = vmatprep.subr.bf16.mxu0 0
    %1131 = vmatpush1.bf16.msra.mxu0 0
    %1132 = vmatprep.subr.bf16.mxu0 0
    %1133 = vmatpush1.bf16.msra.mxu0 0
    %1134 = vmatprep.subr.bf16.mxu0 0
    %1135 = vmatpush1.bf16.msra.mxu0 0
    %1136 = vmatprep.subr.bf16.mxu0 0
    %1137 = vmatpush1.bf16.msra.mxu0 0
    %1138 = vmatprep.subr.bf16.mxu0 0
    %1139 = vmatpush1.bf16.msra.mxu0 0
    %1140 = vmatprep.subr.bf16.mxu0 0
    %1141 = vmatpush1.bf16.msra.mxu0 0
    %1142 = vmatprep.mubr.bf16.mxu0 0
    %1143 = vmatmul.mubr.bf16.gmra.mrb[0].mxu0 %v868
    %v1144 = vpop.f32.mrb[0].mxu0
    %v1145 = vadd.f32 %v759, %v1144
    %v1146 = vpop.f32.mrb[0].mxu0
    %v1147 = vadd.f32 %v759, %v1146
    %v1148 = vpop.f32.mrb[0].mxu0
    %v1149 = vadd.f32 %v764, %v1148
    %v1150 = vpop.f32.mrb[0].mxu0
    %v1151 = vadd.f32 %v764, %v1150
    %1152 = vmatprep.mubr.bf16.mxu0 0
    %1153 = vmatmul.mubr.bf16.gmra.mrb[0].mxu0 %v869
    %v1154 = vpop.f32.mrb[0].mxu0
    %v1155 = vadd.f32 %v769, %v1154
    %v1156 = vpop.f32.mrb[0].mxu0
    %v1157 = vadd.f32 %v769, %v1156
    %v1158 = vpop.f32.mrb[0].mxu0
    %v1159 = vadd.f32 %v774, %v1158
    %v1160 = vpop.f32.mrb[0].mxu0
    %v1161 = vadd.f32 %v774, %v1160
    %1162 = vmatprep.mubr.bf16.mxu0 0
    %1163 = vmatmul.mubr.bf16.gmra.mrb[0].mxu0 %v870
    %v1164 = vpop.f32.mrb[0].mxu0
    %v1165 = vadd.f32 %v779, %v1164
    %v1166 = vpop.f32.mrb[0].mxu0
    %v1167 = vadd.f32 %v779, %v1166
    %v1168 = vpop.f32.mrb[0].mxu0
    %v1169 = vadd.f32 %v784, %v1168
    %v1170 = vpop.f32.mrb[0].mxu0
    %v1171 = vadd.f32 %v784, %v1170
    %1172 = vmatprep.mubr.bf16.mxu0 0
    %1173 = vmatmul.mubr.bf16.gmra.mrb[0].mxu0 %v871
    %v1174 = vpop.f32.mrb[0].mxu0
    %v1175 = vadd.f32 %v789, %v1174
    %v1176 = vpop.f32.mrb[0].mxu0
    %v1177 = vadd.f32 %v789, %v1176
    %v1178 = vpop.f32.mrb[0].mxu0
    %v1179 = vadd.f32 %v794, %v1178
    %v1180 = vpop.f32.mrb[0].mxu0
    %v1181 = vadd.f32 %v794, %v1180
    %1182 = vmatprep.mubr.bf16.mxu0 0
    %1183 = vmatmul.mubr.bf16.gmra.mrb[0].mxu0 %v872
    %v1184 = vpop.f32.mrb[0].mxu0
    %v1185 = vadd.f32 %v799, %v1184
    %v1186 = vpop.f32.mrb[0].mxu0
    %v1187 = vadd.f32 %v799, %v1186
    %v1188 = vpop.f32.mrb[0].mxu0
    %v1189 = vadd.f32 %v804, %v1188
    %v1190 = vpop.f32.mrb[0].mxu0
    %v1191 = vadd.f32 %v804, %v1190
    %1192 = vmatprep.mubr.bf16.mxu0 0
    %1193 = vmatmul.mubr.bf16.gmra.mrb[0].mxu0 %v873
    %v1194 = vpop.f32.mrb[0].mxu0
    %v1195 = vadd.f32 %v809, %v1194
    %v1196 = vpop.f32.mrb[0].mxu0
    %v1197 = vadd.f32 %v809, %v1196
    %v1198 = vpop.f32.mrb[0].mxu0
    %v1199 = vadd.f32 %v814, %v1198
    %v1200 = vpop.f32.mrb[0].mxu0
    %v1201 = vadd.f32 %v814, %v1200
    %1202 = vmatprep.mubr.bf16.mxu0 0
    %1203 = vmatmul.mubr.bf16.gmra.mrb[0].mxu0 %v874
    %v1204 = vpop.f32.mrb[0].mxu0
    %v1205 = vadd.f32 %v819, %v1204
    %v1206 = vpop.f32.mrb[0].mxu0
    %v1207 = vadd.f32 %v819, %v1206
    %v1208 = vpop.f32.mrb[0].mxu0
    %v1209 = vadd.f32 %v824, %v1208
    %v1210 = vpop.f32.mrb[0].mxu0
    %v1211 = vadd.f32 %v824, %v1210
    %1212 = vmatprep.mubr.bf16.mxu0 0
    %1213 = vmatmul.mubr.bf16.gmra.mrb[0].mxu0 %v875
    %v1214 = vpop.f32.mrb[0].mxu0
    %v1215 = vadd.f32 %v829, %v1214
    %v1216 = vpop.f32.mrb[0].mxu0
    %v1217 = vadd.f32 %v829, %v1216
    %v1218 = vpop.f32.mrb[0].mxu0
    %v1219 = vadd.f32 %v834, %v1218
    %v1220 = vpop.f32.mrb[0].mxu0
    %v1221 = vadd.f32 %v834, %v1220
    %1222 = vdwg.mxu0
    %1223 = vmatprep.subr.bf16.mxu0 %v667
    %1224 = vmatpush1.bf16.msra.mxu0 %v666
    %1225 = vmatprep.subr.bf16.mxu0 %v675
    %1226 = vmatpush1.bf16.msra.mxu0 %v674
    %1227 = vmatprep.subr.bf16.mxu0 %v683
    %1228 = vmatpush1.bf16.msra.mxu0 %v682
    %1229 = vmatprep.subr.bf16.mxu0 %v691
    %1230 = vmatpush1.bf16.msra.mxu0 %v690
    %1231 = vmatprep.subr.bf16.mxu0 %v699
    %1232 = vmatpush1.bf16.msra.mxu0 %v698
    %1233 = vmatprep.subr.bf16.mxu0 %v707
    %1234 = vmatpush1.bf16.msra.mxu0 %v706
    %1235 = vmatprep.subr.bf16.mxu0 %v715
    %1236 = vmatpush1.bf16.msra.mxu0 %v714
    %1237 = vmatprep.subr.bf16.mxu0 %v723
    %1238 = vmatpush1.bf16.msra.mxu0 %v722
    %1239 = vmatprep.subr.bf16.mxu0 0
    %1240 = vmatpush1.bf16.msra.mxu0 0
    %1241 = vmatprep.subr.bf16.mxu0 0
    %1242 = vmatpush1.bf16.msra.mxu0 0
    %1243 = vmatprep.subr.bf16.mxu0 0
    %1244 = vmatpush1.bf16.msra.mxu0 0
    %1245 = vmatprep.subr.bf16.mxu0 0
    %1246 = vmatpush1.bf16.msra.mxu0 0
    %1247 = vmatprep.subr.bf16.mxu0 0
    %1248 = vmatpush1.bf16.msra.mxu0 0
    %1249 = vmatprep.subr.bf16.mxu0 0
    %1250 = vmatpush1.bf16.msra.mxu0 0
    %1251 = vmatprep.subr.bf16.mxu0 0
    %1252 = vmatpush1.bf16.msra.mxu0 0
    %1253 = vmatprep.subr.bf16.mxu0 0
    %1254 = vmatpush1.bf16.msra.mxu0 0
    %1255 = vmatprep.mubr.bf16.mxu0 0
    %1256 = vmatmul.mubr.bf16.gmra.mrb[0].mxu0 %v868
    %v1257 = vpop.f32.mrb[0].mxu0
    %v1258 = vadd.f32 %v759, %v1257
    %v1259 = vpop.f32.mrb[0].mxu0
    %v1260 = vadd.f32 %v759, %v1259
    %v1261 = vpop.f32.mrb[0].mxu0
    %v1262 = vadd.f32 %v764, %v1261
    %v1263 = vpop.f32.mrb[0].mxu0
    %v1264 = vadd.f32 %v764, %v1263
    %1265 = vmatprep.mubr.bf16.mxu0 0
    %1266 = vmatmul.mubr.bf16.gmra.mrb[0].mxu0 %v869
    %v1267 = vpop.f32.mrb[0].mxu0
    %v1268 = vadd.f32 %v769, %v1267
    %v1269 = vpop.f32.mrb[0].mxu0
    %v1270 = vadd.f32 %v769, %v1269
    %v1271 = vpop.f32.mrb[0].mxu0
    %v1272 = vadd.f32 %v774, %v1271
    %v1273 = vpop.f32.mrb[0].mxu0
    %v1274 = vadd.f32 %v774, %v1273
    %1275 = vmatprep.mubr.bf16.mxu0 0
    %1276 = vmatmul.mubr.bf16.gmra.mrb[0].mxu0 %v870
    %v1277 = vpop.f32.mrb[0].mxu0
    %v1278 = vadd.f32 %v779, %v1277
    %v1279 = vpop.f32.mrb[0].mxu0
    %v1280 = vadd.f32 %v779, %v1279
    %v1281 = vpop.f32.mrb[0].mxu0
    %v1282 = vadd.f32 %v784, %v1281
    %v1283 = vpop.f32.mrb[0].mxu0
    %v1284 = vadd.f32 %v784, %v1283
    %1285 = vmatprep.mubr.bf16.mxu0 0
    %1286 = vmatmul.mubr.bf16.gmra.mrb[0].mxu0 %v871
    %v1287 = vpop.f32.mrb[0].mxu0
    %v1288 = vadd.f32 %v789, %v1287
    %v1289 = vpop.f32.mrb[0].mxu0
    %v1290 = vadd.f32 %v789, %v1289
    %v1291 = vpop.f32.mrb[0].mxu0
    %v1292 = vadd.f32 %v794, %v1291
    %v1293 = vpop.f32.mrb[0].mxu0
    %v1294 = vadd.f32 %v794, %v1293
    %1295 = vmatprep.mubr.bf16.mxu0 0
    %1296 = vmatmul.mubr.bf16.gmra.mrb[0].mxu0 %v872
    %v1297 = vpop.f32.mrb[0].mxu0
    %v1298 = vadd.f32 %v799, %v1297
    %v1299 = vpop.f32.mrb[0].mxu0
    %v1300 = vadd.f32 %v799, %v1299
    %v1301 = vpop.f32.mrb[0].mxu0
    %v1302 = vadd.f32 %v804, %v1301
    %v1303 = vpop.f32.mrb[0].mxu0
    %v1304 = vadd.f32 %v804, %v1303
    %1305 = vmatprep.mubr.bf16.mxu0 0
    %1306 = vmatmul.mubr.bf16.gmra.mrb[0].mxu0 %v873
    %v1307 = vpop.f32.mrb[0].mxu0
    %v1308 = vadd.f32 %v809, %v1307
    %v1309 = vpop.f32.mrb[0].mxu0
    %v1310 = vadd.f32 %v809, %v1309
    %v1311 = vpop.f32.mrb[0].mxu0
    %v1312 = vadd.f32 %v814, %v1311
    %v1313 = vpop.f32.mrb[0].mxu0
    %v1314 = vadd.f32 %v814, %v1313
    %1315 = vmatprep.mubr.bf16.mxu0 0
    %1316 = vmatmul.mubr.bf16.gmra.mrb[0].mxu0 %v874
    %v1317 = vpop.f32.mrb[0].mxu0
    %v1318 = vadd.f32 %v819, %v1317
    %v1319 = vpop.f32.mrb[0].mxu0
    %v1320 = vadd.f32 %v819, %v1319
    %v1321 = vpop.f32.mrb[0].mxu0
    %v1322 = vadd.f32 %v824, %v1321
    %v1323 = vpop.f32.mrb[0].mxu0
    %v1324 = vadd.f32 %v824, %v1323
    %1325 = vmatprep.mubr.bf16.mxu0 0
    %1326 = vmatmul.mubr.bf16.gmra.mrb[0].mxu0 %v875
    %v1327 = vpop.f32.mrb[0].mxu0
    %v1328 = vadd.f32 %v829, %v1327
    %v1329 = vpop.f32.mrb[0].mxu0
    %v1330 = vadd.f32 %v829, %v1329
    %v1331 = vpop.f32.mrb[0].mxu0
    %v1332 = vadd.f32 %v834, %v1331
    %v1333 = vpop.f32.mrb[0].mxu0
    %v1334 = vadd.f32 %v834, %v1333
    %1335 = vdwg.mxu0
    %v1336 = vmax.f32 %v919, 0.0
    %v1337 = vmax.f32 %v921, 0.0
    %v1338 = vmax.f32 %v1032, 0.0
    %v1339 = vmax.f32 %v1034, 0.0
    %v1340 = vmax.f32 %v1145, 0.0
    %v1341 = vmax.f32 %v1147, 0.0
    %v1342 = vmax.f32 %v1258, 0.0
    %v1343 = vmax.f32 %v1260, 0.0
    %v1344 = vmax.f32 %v923, 0.0
    %v1345 = vmax.f32 %v925, 0.0
    %v1346 = vmax.f32 %v1036, 0.0
    %v1347 = vmax.f32 %v1038, 0.0
    %v1348 = vmax.f32 %v1149, 0.0
    %v1349 = vmax.f32 %v1151, 0.0
    %v1350 = vmax.f32 %v1262, 0.0
    %v1351 = vmax.f32 %v1264, 0.0
    %v1352 = vmax.f32 %v929, 0.0
    %v1353 = vmax.f32 %v931, 0.0
    %v1354 = vmax.f32 %v1042, 0.0
    %v1355 = vmax.f32 %v1044, 0.0
    %v1356 = vmax.f32 %v1155, 0.0
    %v1357 = vmax.f32 %v1157, 0.0
    %v1358 = vmax.f32 %v1268, 0.0
    %v1359 = vmax.f32 %v1270, 0.0
    %v1360 = vmax.f32 %v933, 0.0
    %v1361 = vmax.f32 %v935, 0.0
    %v1362 = vmax.f32 %v1046, 0.0
    %v1363 = vmax.f32 %v1048, 0.0
    %v1364 = vmax.f32 %v1159, 0.0
    %v1365 = vmax.f32 %v1161, 0.0
    %v1366 = vmax.f32 %v1272, 0.0
    %v1367 = vmax.f32 %v1274, 0.0
    %v1368 = vmax.f32 %v939, 0.0
    %v1369 = vmax.f32 %v941, 0.0
    %v1370 = vmax.f32 %v1052, 0.0
    %v1371 = vmax.f32 %v1054, 0.0
    %v1372 = vmax.f32 %v1165, 0.0
    %v1373 = vmax.f32 %v1167, 0.0
    %v1374 = vmax.f32 %v1278, 0.0
    %v1375 = vmax.f32 %v1280, 0.0
    %v1376 = vmax.f32 %v943, 0.0
    %v1377 = vmax.f32 %v945, 0.0
    %v1378 = vmax.f32 %v1056, 0.0
    %v1379 = vmax.f32 %v1058, 0.0
    %v1380 = vmax.f32 %v1169, 0.0
    %v1381 = vmax.f32 %v1171, 0.0
    %v1382 = vmax.f32 %v1282, 0.0
    %v1383 = vmax.f32 %v1284, 0.0
    %v1384 = vmax.f32 %v949, 0.0
    %v1385 = vmax.f32 %v951, 0.0
    %v1386 = vmax.f32 %v1062, 0.0
    %v1387 = vmax.f32 %v1064, 0.0
    %v1388 = vmax.f32 %v1175, 0.0
    %v1389 = vmax.f32 %v1177, 0.0
    %v1390 = vmax.f32 %v1288, 0.0
    %v1391 = vmax.f32 %v1290, 0.0
    %v1392 = vmax.f32 %v953, 0.0
    %v1393 = vmax.f32 %v955, 0.0
    %v1394 = vmax.f32 %v1066, 0.0
    %v1395 = vmax.f32 %v1068, 0.0
    %v1396 = vmax.f32 %v1179, 0.0
    %v1397 = vmax.f32 %v1181, 0.0
    %v1398 = vmax.f32 %v1292, 0.0
    %v1399 = vmax.f32 %v1294, 0.0
    %v1400 = vmax.f32 %v959, 0.0
    %v1401 = vmax.f32 %v961, 0.0
    %v1402 = vmax.f32 %v1072, 0.0
    %v1403 = vmax.f32 %v1074, 0.0
    %v1404 = vmax.f32 %v1185, 0.0
    %v1405 = vmax.f32 %v1187, 0.0
    %v1406 = vmax.f32 %v1298, 0.0
    %v1407 = vmax.f32 %v1300, 0.0
    %v1408 = vmax.f32 %v963, 0.0
    %v1409 = vmax.f32 %v965, 0.0
    %v1410 = vmax.f32 %v1076, 0.0
    %v1411 = vmax.f32 %v1078, 0.0
    %v1412 = vmax.f32 %v1189, 0.0
    %v1413 = vmax.f32 %v1191, 0.0
    %v1414 = vmax.f32 %v1302, 0.0
    %v1415 = vmax.f32 %v1304, 0.0
    %v1416 = vmax.f32 %v969, 0.0
    %v1417 = vmax.f32 %v971, 0.0
    %v1418 = vmax.f32 %v1082, 0.0
    %v1419 = vmax.f32 %v1084, 0.0
    %v1420 = vmax.f32 %v1195, 0.0
    %v1421 = vmax.f32 %v1197, 0.0
    %v1422 = vmax.f32 %v1308, 0.0
    %v1423 = vmax.f32 %v1310, 0.0
    %v1424 = vmax.f32 %v973, 0.0
    %v1425 = vmax.f32 %v975, 0.0
    %v1426 = vmax.f32 %v1086, 0.0
    %v1427 = vmax.f32 %v1088, 0.0
    %v1428 = vmax.f32 %v1199, 0.0
    %v1429 = vmax.f32 %v1201, 0.0
    %v1430 = vmax.f32 %v1312, 0.0
    %v1431 = vmax.f32 %v1314, 0.0
    %v1432 = vmax.f32 %v979, 0.0
    %v1433 = vmax.f32 %v981, 0.0
    %v1434 = vmax.f32 %v1092, 0.0
    %v1435 = vmax.f32 %v1094, 0.0
    %v1436 = vmax.f32 %v1205, 0.0
    %v1437 = vmax.f32 %v1207, 0.0
    %v1438 = vmax.f32 %v1318, 0.0
    %v1439 = vmax.f32 %v1320, 0.0
    %v1440 = vmax.f32 %v983, 0.0
    %v1441 = vmax.f32 %v985, 0.0
    %v1442 = vmax.f32 %v1096, 0.0
    %v1443 = vmax.f32 %v1098, 0.0
    %v1444 = vmax.f32 %v1209, 0.0
    %v1445 = vmax.f32 %v1211, 0.0
    %v1446 = vmax.f32 %v1322, 0.0
    %v1447 = vmax.f32 %v1324, 0.0
    %v1448 = vmax.f32 %v989, 0.0
    %v1449 = vmax.f32 %v991, 0.0
    %v1450 = vmax.f32 %v1102, 0.0
    %v1451 = vmax.f32 %v1104, 0.0
    %v1452 = vmax.f32 %v1215, 0.0
    %v1453 = vmax.f32 %v1217, 0.0
    %v1454 = vmax.f32 %v1328, 0.0
    %v1455 = vmax.f32 %v1330, 0.0
    %v1456 = vmax.f32 %v993, 0.0
    %v1457 = vmax.f32 %v995, 0.0
    %v1458 = vmax.f32 %v1106, 0.0
    %v1459 = vmax.f32 %v1108, 0.0
    %v1460 = vmax.f32 %v1219, 0.0
    %v1461 = vmax.f32 %v1221, 0.0
    %v1462 = vmax.f32 %v1332, 0.0
    %v1463 = vmax.f32 %v1334, 0.0
    %v1464 = vpack.c.bf16 %v1344, %v1336
    %v1465 = vpack.c.bf16 %v1345, %v1337
    %v1466 = vpack.c.bf16 %v1346, %v1338
    %v1467 = vpack.c.bf16 %v1347, %v1339
    %v1468 = vpack.c.bf16 %v1348, %v1340
    %v1469 = vpack.c.bf16 %v1349, %v1341
    %v1470 = vpack.c.bf16 %v1350, %v1342
    %v1471 = vpack.c.bf16 %v1351, %v1343
    %v1472 = vpack.c.bf16 %v1360, %v1352
    %v1473 = vpack.c.bf16 %v1361, %v1353
    %v1474 = vpack.c.bf16 %v1362, %v1354
    %v1475 = vpack.c.bf16 %v1363, %v1355
    %v1476 = vpack.c.bf16 %v1364, %v1356
    %v1477 = vpack.c.bf16 %v1365, %v1357
    %v1478 = vpack.c.bf16 %v1366, %v1358
    %v1479 = vpack.c.bf16 %v1367, %v1359
    %v1480 = vpack.c.bf16 %v1376, %v1368
    %v1481 = vpack.c.bf16 %v1377, %v1369
    %v1482 = vpack.c.bf16 %v1378, %v1370
    %v1483 = vpack.c.bf16 %v1379, %v1371
    %v1484 = vpack.c.bf16 %v1380, %v1372
    %v1485 = vpack.c.bf16 %v1381, %v1373
    %v1486 = vpack.c.bf16 %v1382, %v1374
    %v1487 = vpack.c.bf16 %v1383, %v1375
    %v1488 = vpack.c.bf16 %v1392, %v1384
    %v1489 = vpack.c.bf16 %v1393, %v1385
    %v1490 = vpack.c.bf16 %v1394, %v1386
    %v1491 = vpack.c.bf16 %v1395, %v1387
    %v1492 = vpack.c.bf16 %v1396, %v1388
    %v1493 = vpack.c.bf16 %v1397, %v1389
    %v1494 = vpack.c.bf16 %v1398, %v1390
    %v1495 = vpack.c.bf16 %v1399, %v1391
    %v1496 = vpack.c.bf16 %v1408, %v1400
    %v1497 = vpack.c.bf16 %v1409, %v1401
    %v1498 = vpack.c.bf16 %v1410, %v1402
    %v1499 = vpack.c.bf16 %v1411, %v1403
    %v1500 = vpack.c.bf16 %v1412, %v1404
    %v1501 = vpack.c.bf16 %v1413, %v1405
    %v1502 = vpack.c.bf16 %v1414, %v1406
    %v1503 = vpack.c.bf16 %v1415, %v1407
    %v1504 = vpack.c.bf16 %v1424, %v1416
    %v1505 = vpack.c.bf16 %v1425, %v1417
    %v1506 = vpack.c.bf16 %v1426, %v1418
    %v1507 = vpack.c.bf16 %v1427, %v1419
    %v1508 = vpack.c.bf16 %v1428, %v1420
    %v1509 = vpack.c.bf16 %v1429, %v1421
    %v1510 = vpack.c.bf16 %v1430, %v1422
    %v1511 = vpack.c.bf16 %v1431, %v1423
    %v1512 = vpack.c.bf16 %v1440, %v1432
    %v1513 = vpack.c.bf16 %v1441, %v1433
    %v1514 = vpack.c.bf16 %v1442, %v1434
    %v1515 = vpack.c.bf16 %v1443, %v1435
    %v1516 = vpack.c.bf16 %v1444, %v1436
    %v1517 = vpack.c.bf16 %v1445, %v1437
    %v1518 = vpack.c.bf16 %v1446, %v1438
    %v1519 = vpack.c.bf16 %v1447, %v1439
    %v1520 = vpack.c.bf16 %v1456, %v1448
    %v1521 = vpack.c.bf16 %v1457, %v1449
    %v1522 = vpack.c.bf16 %v1458, %v1450
    %v1523 = vpack.c.bf16 %v1459, %v1451
    %v1524 = vpack.c.bf16 %v1460, %v1452
    %v1525 = vpack.c.bf16 %v1461, %v1453
    %v1526 = vpack.c.bf16 %v1462, %v1454
    %v1527 = vpack.c.bf16 %v1463, %v1455
    %v1528 = vld [vmem:[%s5] sm:$0xf]
    %v1529 = vld [vmem:[%s5 + $0x4] sm:$0xf]
    %v1530 = vld [vmem:[%s5 + $0x8] sm:$0xf]
    %v1531 = vld [vmem:[%s5 + $0xc] sm:$0xf]
    %v1532 = vld [vmem:[%s5 + $0x10] sm:$0xf]
    %v1533 = vld [vmem:[%s5 + $0x14] sm:$0xf]
    %v1534 = vld [vmem:[%s5 + $0x18] sm:$0xf]
    %v1535 = vld [vmem:[%s5 + $0x1c] sm:$0xf]
    %v1536 = vld [vmem:[%s5 + $0x20] sm:$0xf]
    %v1537 = vld [vmem:[%s5 + $0x24] sm:$0xf]
    %v1538 = vld [vmem:[%s5 + $0x28] sm:$0xf]
    %v1539 = vld [vmem:[%s5 + $0x2c] sm:$0xf]
    %v1540 = vld [vmem:[%s5 + $0x30] sm:$0xf]
    %v1541 = vld [vmem:[%s5 + $0x34] sm:$0xf]
    %v1542 = vld [vmem:[%s5 + $0x38] sm:$0xf]
    %v1543 = vld [vmem:[%s5 + $0x3c] sm:$0xf]
    %v1544 = vld [vmem:[%s6] sm:$0xff]
    %v1545 = vld [vmem:[%s6 + $0x8] sm:$0xff]
    %v1546 = vld [vmem:[%s6 + $0x10] sm:$0xff]
    %v1547 = vld [vmem:[%s6 + $0x18] sm:$0xff]
    %v1548 = vld [vmem:[%s6 + $0x20] sm:$0xff]
    %v1549 = vld [vmem:[%s6 + $0x28] sm:$0xff]
    %v1550 = vld [vmem:[%s6 + $0x30] sm:$0xff]
    %v1551 = vld [vmem:[%s6 + $0x38] sm:$0xff]
    %v1552 = vld [vmem:[%s6 + $0x40] sm:$0xff]
    %v1553 = vld [vmem:[%s6 + $0x48] sm:$0xff]
    %v1554 = vld [vmem:[%s6 + $0x50] sm:$0xff]
    %v1555 = vld [vmem:[%s6 + $0x58] sm:$0xff]
    %v1556 = vld [vmem:[%s6 + $0x60] sm:$0xff]
    %v1557 = vld [vmem:[%s6 + $0x68] sm:$0xff]
    %v1558 = vld [vmem:[%s6 + $0x70] sm:$0xff]
    %v1559 = vld [vmem:[%s6 + $0x78] sm:$0xff]
    %1561 = vset.pattern.permute.xlu0 0
    %1562 = vperm.xlu0 %1561, %v1544
    %v1563 = vpop.permute.xlu0 %1562
    %1566 = vset.pattern.permute.xlu0 0
    %1567 = vperm.xlu0 %1566, %v1545
    %v1568 = vpop.permute.xlu0 %1567
    %1571 = vset.pattern.permute.xlu0 0
    %1572 = vperm.xlu0 %1571, %v1546
    %v1573 = vpop.permute.xlu0 %1572
    %1576 = vset.pattern.permute.xlu0 0
    %1577 = vperm.xlu0 %1576, %v1547
    %v1578 = vpop.permute.xlu0 %1577
    %1581 = vset.pattern.permute.xlu0 0
    %1582 = vperm.xlu0 %1581, %v1548
    %v1583 = vpop.permute.xlu0 %1582
    %1586 = vset.pattern.permute.xlu0 0
    %1587 = vperm.xlu0 %1586, %v1549
    %v1588 = vpop.permute.xlu0 %1587
    %1591 = vset.pattern.permute.xlu0 0
    %1592 = vperm.xlu0 %1591, %v1550
    %v1593 = vpop.permute.xlu0 %1592
    %1596 = vset.pattern.permute.xlu0 0
    %1597 = vperm.xlu0 %1596, %v1551
    %v1598 = vpop.permute.xlu0 %1597
    %1601 = vset.pattern.permute.xlu0 0
    %1602 = vperm.xlu0 %1601, %v1552
    %v1603 = vpop.permute.xlu0 %1602
    %1606 = vset.pattern.permute.xlu0 0
    %1607 = vperm.xlu0 %1606, %v1553
    %v1608 = vpop.permute.xlu0 %1607
    %1611 = vset.pattern.permute.xlu0 0
    %1612 = vperm.xlu0 %1611, %v1554
    %v1613 = vpop.permute.xlu0 %1612
    %1616 = vset.pattern.permute.xlu0 0
    %1617 = vperm.xlu0 %1616, %v1555
    %v1618 = vpop.permute.xlu0 %1617
    %1621 = vset.pattern.permute.xlu0 0
    %1622 = vperm.xlu0 %1621, %v1556
    %v1623 = vpop.permute.xlu0 %1622
    %1626 = vset.pattern.permute.xlu0 0
    %1627 = vperm.xlu0 %1626, %v1557
    %v1628 = vpop.permute.xlu0 %1627
    %1631 = vset.pattern.permute.xlu0 0
    %1632 = vperm.xlu0 %1631, %v1558
    %v1633 = vpop.permute.xlu0 %1632
    %1636 = vset.pattern.permute.xlu0 0
    %1637 = vperm.xlu0 %1636, %v1559
    %v1638 = vpop.permute.xlu0 %1637
    %v1656 = vunpack.c.l.b16 %v1528
    %v1657 = vunpack.c.l.b16 %v1529
    %v1658 = vunpack.c.l.b16 %v1530
    %v1659 = vunpack.c.l.b16 %v1531
    %v1660 = vunpack.c.l.b16 %v1532
    %v1661 = vunpack.c.l.b16 %v1533
    %v1662 = vunpack.c.l.b16 %v1534
    %v1663 = vunpack.c.l.b16 %v1535
    %v1664 = vunpack.c.l.b16 %v1536
    %v1665 = vunpack.c.l.b16 %v1537
    %v1666 = vunpack.c.l.b16 %v1538
    %v1667 = vunpack.c.l.b16 %v1539
    %v1668 = vunpack.c.l.b16 %v1540
    %v1669 = vunpack.c.l.b16 %v1541
    %v1670 = vunpack.c.l.b16 %v1542
    %v1671 = vunpack.c.l.b16 %v1543
    %v1672 = vpack.c.b16 %v1657, %v1656
    %v1673 = vpack.c.b16 %v1659, %v1658
    %v1674 = vpack.c.b16 %v1661, %v1660
    %v1675 = vpack.c.b16 %v1663, %v1662
    %v1676 = vpack.c.b16 %v1665, %v1664
    %v1677 = vpack.c.b16 %v1667, %v1666
    %v1678 = vpack.c.b16 %v1669, %v1668
    %v1679 = vpack.c.b16 %v1671, %v1670
    %1688 = vmatprep.subr.bf16.mxu0 %v1465
    %1689 = vmatpush1.bf16.msra.mxu0 %v1464
    %1690 = vmatprep.subr.bf16.mxu0 %v1473
    %1691 = vmatpush1.bf16.msra.mxu0 %v1472
    %1692 = vmatprep.subr.bf16.mxu0 %v1481
    %1693 = vmatpush1.bf16.msra.mxu0 %v1480
    %1694 = vmatprep.subr.bf16.mxu0 %v1489
    %1695 = vmatpush1.bf16.msra.mxu0 %v1488
    %1696 = vmatprep.subr.bf16.mxu0 %v1497
    %1697 = vmatpush1.bf16.msra.mxu0 %v1496
    %1698 = vmatprep.subr.bf16.mxu0 %v1505
    %1699 = vmatpush1.bf16.msra.mxu0 %v1504
    %1700 = vmatprep.subr.bf16.mxu0 %v1513
    %1701 = vmatpush1.bf16.msra.mxu0 %v1512
    %1702 = vmatprep.subr.bf16.mxu0 %v1521
    %1703 = vmatpush1.bf16.msra.mxu0 %v1520
    %1704 = vmatprep.subr.bf16.mxu0 0
    %1705 = vmatpush1.bf16.msra.mxu0 0
    %1706 = vmatprep.subr.bf16.mxu0 0
    %1707 = vmatpush1.bf16.msra.mxu0 0
    %1708 = vmatprep.subr.bf16.mxu0 0
    %1709 = vmatpush1.bf16.msra.mxu0 0
    %1710 = vmatprep.subr.bf16.mxu0 0
    %1711 = vmatpush1.bf16.msra.mxu0 0
    %1712 = vmatprep.subr.bf16.mxu0 0
    %1713 = vmatpush1.bf16.msra.mxu0 0
    %1714 = vmatprep.subr.bf16.mxu0 0
    %1715 = vmatpush1.bf16.msra.mxu0 0
    %1716 = vmatprep.subr.bf16.mxu0 0
    %1717 = vmatpush1.bf16.msra.mxu0 0
    %1718 = vmatprep.subr.bf16.mxu0 0
    %1719 = vmatpush1.bf16.msra.mxu0 0
    %1720 = vmatprep.mubr.bf16.mxu0 0
    %1721 = vmatmul.mubr.bf16.gmra.mrb[0].mxu0 %v1672
    %v1722 = vpop.f32.mrb[0].mxu0
    %v1723 = vadd.f32 %v1563, %v1722
    %v1724 = vpop.f32.mrb[0].mxu0
    %v1725 = vadd.f32 %v1563, %v1724
    %v1726 = vpop.f32.mrb[0].mxu0
    %v1727 = vadd.f32 %v1568, %v1726
    %v1728 = vpop.f32.mrb[0].mxu0
    %v1729 = vadd.f32 %v1568, %v1728
    %1730 = vmatprep.mubr.bf16.mxu0 0
    %1731 = vmatmul.mubr.bf16.gmra.mrb[0].mxu0 %v1673
    %v1732 = vpop.f32.mrb[0].mxu0
    %v1733 = vadd.f32 %v1573, %v1732
    %v1734 = vpop.f32.mrb[0].mxu0
    %v1735 = vadd.f32 %v1573, %v1734
    %v1736 = vpop.f32.mrb[0].mxu0
    %v1737 = vadd.f32 %v1578, %v1736
    %v1738 = vpop.f32.mrb[0].mxu0
    %v1739 = vadd.f32 %v1578, %v1738
    %1740 = vmatprep.mubr.bf16.mxu0 0
    %1741 = vmatmul.mubr.bf16.gmra.mrb[0].mxu0 %v1674
    %v1742 = vpop.f32.mrb[0].mxu0
    %v1743 = vadd.f32 %v1583, %v1742
    %v1744 = vpop.f32.mrb[0].mxu0
    %v1745 = vadd.f32 %v1583, %v1744
    %v1746 = vpop.f32.mrb[0].mxu0
    %v1747 = vadd.f32 %v1588, %v1746
    %v1748 = vpop.f32.mrb[0].mxu0
    %v1749 = vadd.f32 %v1588, %v1748
    %1750 = vmatprep.mubr.bf16.mxu0 0
    %1751 = vmatmul.mubr.bf16.gmra.mrb[0].mxu0 %v1675
    %v1752 = vpop.f32.mrb[0].mxu0
    %v1753 = vadd.f32 %v1593, %v1752
    %v1754 = vpop.f32.mrb[0].mxu0
    %v1755 = vadd.f32 %v1593, %v1754
    %v1756 = vpop.f32.mrb[0].mxu0
    %v1757 = vadd.f32 %v1598, %v1756
    %v1758 = vpop.f32.mrb[0].mxu0
    %v1759 = vadd.f32 %v1598, %v1758
    %1760 = vmatprep.mubr.bf16.mxu0 0
    %1761 = vmatmul.mubr.bf16.gmra.mrb[0].mxu0 %v1676
    %v1762 = vpop.f32.mrb[0].mxu0
    %v1763 = vadd.f32 %v1603, %v1762
    %v1764 = vpop.f32.mrb[0].mxu0
    %v1765 = vadd.f32 %v1603, %v1764
    %v1766 = vpop.f32.mrb[0].mxu0
    %v1767 = vadd.f32 %v1608, %v1766
    %v1768 = vpop.f32.mrb[0].mxu0
    %v1769 = vadd.f32 %v1608, %v1768
    %1770 = vmatprep.mubr.bf16.mxu0 0
    %1771 = vmatmul.mubr.bf16.gmra.mrb[0].mxu0 %v1677
    %v1772 = vpop.f32.mrb[0].mxu0
    %v1773 = vadd.f32 %v1613, %v1772
    %v1774 = vpop.f32.mrb[0].mxu0
    %v1775 = vadd.f32 %v1613, %v1774
    %v1776 = vpop.f32.mrb[0].mxu0
    %v1777 = vadd.f32 %v1618, %v1776
    %v1778 = vpop.f32.mrb[0].mxu0
    %v1779 = vadd.f32 %v1618, %v1778
    %1780 = vmatprep.mubr.bf16.mxu0 0
    %1781 = vmatmul.mubr.bf16.gmra.mrb[0].mxu0 %v1678
    %v1782 = vpop.f32.mrb[0].mxu0
    %v1783 = vadd.f32 %v1623, %v1782
    %v1784 = vpop.f32.mrb[0].mxu0
    %v1785 = vadd.f32 %v1623, %v1784
    %v1786 = vpop.f32.mrb[0].mxu0
    %v1787 = vadd.f32 %v1628, %v1786
    %v1788 = vpop.f32.mrb[0].mxu0
    %v1789 = vadd.f32 %v1628, %v1788
    %1790 = vmatprep.mubr.bf16.mxu0 0
    %1791 = vmatmul.mubr.bf16.gmra.mrb[0].mxu0 %v1679
    %v1792 = vpop.f32.mrb[0].mxu0
    %v1793 = vadd.f32 %v1633, %v1792
    %v1794 = vpop.f32.mrb[0].mxu0
    %v1795 = vadd.f32 %v1633, %v1794
    %v1796 = vpop.f32.mrb[0].mxu0
    %v1797 = vadd.f32 %v1638, %v1796
    %v1798 = vpop.f32.mrb[0].mxu0
    %v1799 = vadd.f32 %v1638, %v1798
    %1800 = vdwg.mxu0
    %1801 = vmatprep.subr.bf16.mxu0 %v1467
    %1802 = vmatpush1.bf16.msra.mxu0 %v1466
    %1803 = vmatprep.subr.bf16.mxu0 %v1475
    %1804 = vmatpush1.bf16.msra.mxu0 %v1474
    %1805 = vmatprep.subr.bf16.mxu0 %v1483
    %1806 = vmatpush1.bf16.msra.mxu0 %v1482
    %1807 = vmatprep.subr.bf16.mxu0 %v1491
    %1808 = vmatpush1.bf16.msra.mxu0 %v1490
    %1809 = vmatprep.subr.bf16.mxu0 %v1499
    %1810 = vmatpush1.bf16.msra.mxu0 %v1498
    %1811 = vmatprep.subr.bf16.mxu0 %v1507
    %1812 = vmatpush1.bf16.msra.mxu0 %v1506
    %1813 = vmatprep.subr.bf16.mxu0 %v1515
    %1814 = vmatpush1.bf16.msra.mxu0 %v1514
    %1815 = vmatprep.subr.bf16.mxu0 %v1523
    %1816 = vmatpush1.bf16.msra.mxu0 %v1522
    %1817 = vmatprep.subr.bf16.mxu0 0
    %1818 = vmatpush1.bf16.msra.mxu0 0
    %1819 = vmatprep.subr.bf16.mxu0 0
    %1820 = vmatpush1.bf16.msra.mxu0 0
    %1821 = vmatprep.subr.bf16.mxu0 0
    %1822 = vmatpush1.bf16.msra.mxu0 0
    %1823 = vmatprep.subr.bf16.mxu0 0
    %1824 = vmatpush1.bf16.msra.mxu0 0
    %1825 = vmatprep.subr.bf16.mxu0 0
    %1826 = vmatpush1.bf16.msra.mxu0 0
    %1827 = vmatprep.subr.bf16.mxu0 0
    %1828 = vmatpush1.bf16.msra.mxu0 0
    %1829 = vmatprep.subr.bf16.mxu0 0
    %1830 = vmatpush1.bf16.msra.mxu0 0
    %1831 = vmatprep.subr.bf16.mxu0 0
    %1832 = vmatpush1.bf16.msra.mxu0 0
    %1833 = vmatprep.mubr.bf16.mxu0 0
    %1834 = vmatmul.mubr.bf16.gmra.mrb[0].mxu0 %v1672
    %v1835 = vpop.f32.mrb[0].mxu0
    %v1836 = vadd.f32 %v1563, %v1835
    %v1837 = vpop.f32.mrb[0].mxu0
    %v1838 = vadd.f32 %v1563, %v1837
    %v1839 = vpop.f32.mrb[0].mxu0
    %v1840 = vadd.f32 %v1568, %v1839
    %v1841 = vpop.f32.mrb[0].mxu0
    %v1842 = vadd.f32 %v1568, %v1841
    %1843 = vmatprep.mubr.bf16.mxu0 0
    %1844 = vmatmul.mubr.bf16.gmra.mrb[0].mxu0 %v1673
    %v1845 = vpop.f32.mrb[0].mxu0
    %v1846 = vadd.f32 %v1573, %v1845
    %v1847 = vpop.f32.mrb[0].mxu0
    %v1848 = vadd.f32 %v1573, %v1847
    %v1849 = vpop.f32.mrb[0].mxu0
    %v1850 = vadd.f32 %v1578, %v1849
    %v1851 = vpop.f32.mrb[0].mxu0
    %v1852 = vadd.f32 %v1578, %v1851
    %1853 = vmatprep.mubr.bf16.mxu0 0
    %1854 = vmatmul.mubr.bf16.gmra.mrb[0].mxu0 %v1674
    %v1855 = vpop.f32.mrb[0].mxu0
    %v1856 = vadd.f32 %v1583, %v1855
    %v1857 = vpop.f32.mrb[0].mxu0
    %v1858 = vadd.f32 %v1583, %v1857
    %v1859 = vpop.f32.mrb[0].mxu0
    %v1860 = vadd.f32 %v1588, %v1859
    %v1861 = vpop.f32.mrb[0].mxu0
    %v1862 = vadd.f32 %v1588, %v1861
    %1863 = vmatprep.mubr.bf16.mxu0 0
    %1864 = vmatmul.mubr.bf16.gmra.mrb[0].mxu0 %v1675
    %v1865 = vpop.f32.mrb[0].mxu0
    %v1866 = vadd.f32 %v1593, %v1865
    %v1867 = vpop.f32.mrb[0].mxu0
    %v1868 = vadd.f32 %v1593, %v1867
    %v1869 = vpop.f32.mrb[0].mxu0
    %v1870 = vadd.f32 %v1598, %v1869
    %v1871 = vpop.f32.mrb[0].mxu0
    %v1872 = vadd.f32 %v1598, %v1871
    %1873 = vmatprep.mubr.bf16.mxu0 0
    %1874 = vmatmul.mubr.bf16.gmra.mrb[0].mxu0 %v1676
    %v1875 = vpop.f32.mrb[0].mxu0
    %v1876 = vadd.f32 %v1603, %v1875
    %v1877 = vpop.f32.mrb[0].mxu0
    %v1878 = vadd.f32 %v1603, %v1877
    %v1879 = vpop.f32.mrb[0].mxu0
    %v1880 = vadd.f32 %v1608, %v1879
    %v1881 = vpop.f32.mrb[0].mxu0
    %v1882 = vadd.f32 %v1608, %v1881
    %1883 = vmatprep.mubr.bf16.mxu0 0
    %1884 = vmatmul.mubr.bf16.gmra.mrb[0].mxu0 %v1677
    %v1885 = vpop.f32.mrb[0].mxu0
    %v1886 = vadd.f32 %v1613, %v1885
    %v1887 = vpop.f32.mrb[0].mxu0
    %v1888 = vadd.f32 %v1613, %v1887
    %v1889 = vpop.f32.mrb[0].mxu0
    %v1890 = vadd.f32 %v1618, %v1889
    %v1891 = vpop.f32.mrb[0].mxu0
    %v1892 = vadd.f32 %v1618, %v1891
    %1893 = vmatprep.mubr.bf16.mxu0 0
    %1894 = vmatmul.mubr.bf16.gmra.mrb[0].mxu0 %v1678
    %v1895 = vpop.f32.mrb[0].mxu0
    %v1896 = vadd.f32 %v1623, %v1895
    %v1897 = vpop.f32.mrb[0].mxu0
    %v1898 = vadd.f32 %v1623, %v1897
    %v1899 = vpop.f32.mrb[0].mxu0
    %v1900 = vadd.f32 %v1628, %v1899
    %v1901 = vpop.f32.mrb[0].mxu0
    %v1902 = vadd.f32 %v1628, %v1901
    %1903 = vmatprep.mubr.bf16.mxu0 0
    %1904 = vmatmul.mubr.bf16.gmra.mrb[0].mxu0 %v1679
    %v1905 = vpop.f32.mrb[0].mxu0
    %v1906 = vadd.f32 %v1633, %v1905
    %v1907 = vpop.f32.mrb[0].mxu0
    %v1908 = vadd.f32 %v1633, %v1907
    %v1909 = vpop.f32.mrb[0].mxu0
    %v1910 = vadd.f32 %v1638, %v1909
    %v1911 = vpop.f32.mrb[0].mxu0
    %v1912 = vadd.f32 %v1638, %v1911
    %1913 = vdwg.mxu0
    %1914 = vmatprep.subr.bf16.mxu0 %v1469
    %1915 = vmatpush1.bf16.msra.mxu0 %v1468
    %1916 = vmatprep.subr.bf16.mxu0 %v1477
    %1917 = vmatpush1.bf16.msra.mxu0 %v1476
    %1918 = vmatprep.subr.bf16.mxu0 %v1485
    %1919 = vmatpush1.bf16.msra.mxu0 %v1484
    %1920 = vmatprep.subr.bf16.mxu0 %v1493
    %1921 = vmatpush1.bf16.msra.mxu0 %v1492
    %1922 = vmatprep.subr.bf16.mxu0 %v1501
    %1923 = vmatpush1.bf16.msra.mxu0 %v1500
    %1924 = vmatprep.subr.bf16.mxu0 %v1509
    %1925 = vmatpush1.bf16.msra.mxu0 %v1508
    %1926 = vmatprep.subr.bf16.mxu0 %v1517
    %1927 = vmatpush1.bf16.msra.mxu0 %v1516
    %1928 = vmatprep.subr.bf16.mxu0 %v1525
    %1929 = vmatpush1.bf16.msra.mxu0 %v1524
    %1930 = vmatprep.subr.bf16.mxu0 0
    %1931 = vmatpush1.bf16.msra.mxu0 0
    %1932 = vmatprep.subr.bf16.mxu0 0
    %1933 = vmatpush1.bf16.msra.mxu0 0
    %1934 = vmatprep.subr.bf16.mxu0 0
    %1935 = vmatpush1.bf16.msra.mxu0 0
    %1936 = vmatprep.subr.bf16.mxu0 0
    %1937 = vmatpush1.bf16.msra.mxu0 0
    %1938 = vmatprep.subr.bf16.mxu0 0
    %1939 = vmatpush1.bf16.msra.mxu0 0
    %1940 = vmatprep.subr.bf16.mxu0 0
    %1941 = vmatpush1.bf16.msra.mxu0 0
    %1942 = vmatprep.subr.bf16.mxu0 0
    %1943 = vmatpush1.bf16.msra.mxu0 0
    %1944 = vmatprep.subr.bf16.mxu0 0
    %1945 = vmatpush1.bf16.msra.mxu0 0
    %1946 = vmatprep.mubr.bf16.mxu0 0
    %1947 = vmatmul.mubr.bf16.gmra.mrb[0].mxu0 %v1672
    %v1948 = vpop.f32.mrb[0].mxu0
    %v1949 = vadd.f32 %v1563, %v1948
    %v1950 = vpop.f32.mrb[0].mxu0
    %v1951 = vadd.f32 %v1563, %v1950
    %v1952 = vpop.f32.mrb[0].mxu0
    %v1953 = vadd.f32 %v1568, %v1952
    %v1954 = vpop.f32.mrb[0].mxu0
    %v1955 = vadd.f32 %v1568, %v1954
    %1956 = vmatprep.mubr.bf16.mxu0 0
    %1957 = vmatmul.mubr.bf16.gmra.mrb[0].mxu0 %v1673
    %v1958 = vpop.f32.mrb[0].mxu0
    %v1959 = vadd.f32 %v1573, %v1958
    %v1960 = vpop.f32.mrb[0].mxu0
    %v1961 = vadd.f32 %v1573, %v1960
    %v1962 = vpop.f32.mrb[0].mxu0
    %v1963 = vadd.f32 %v1578, %v1962
    %v1964 = vpop.f32.mrb[0].mxu0
    %v1965 = vadd.f32 %v1578, %v1964
    %1966 = vmatprep.mubr.bf16.mxu0 0
    %1967 = vmatmul.mubr.bf16.gmra.mrb[0].mxu0 %v1674
    %v1968 = vpop.f32.mrb[0].mxu0
    %v1969 = vadd.f32 %v1583, %v1968
    %v1970 = vpop.f32.mrb[0].mxu0
    %v1971 = vadd.f32 %v1583, %v1970
    %v1972 = vpop.f32.mrb[0].mxu0
    %v1973 = vadd.f32 %v1588, %v1972
    %v1974 = vpop.f32.mrb[0].mxu0
    %v1975 = vadd.f32 %v1588, %v1974
    %1976 = vmatprep.mubr.bf16.mxu0 0
    %1977 = vmatmul.mubr.bf16.gmra.mrb[0].mxu0 %v1675
    %v1978 = vpop.f32.mrb[0].mxu0
    %v1979 = vadd.f32 %v1593, %v1978
    %v1980 = vpop.f32.mrb[0].mxu0
    %v1981 = vadd.f32 %v1593, %v1980
    %v1982 = vpop.f32.mrb[0].mxu0
    %v1983 = vadd.f32 %v1598, %v1982
    %v1984 = vpop.f32.mrb[0].mxu0
    %v1985 = vadd.f32 %v1598, %v1984
    %1986 = vmatprep.mubr.bf16.mxu0 0
    %1987 = vmatmul.mubr.bf16.gmra.mrb[0].mxu0 %v1676
    %v1988 = vpop.f32.mrb[0].mxu0
    %v1989 = vadd.f32 %v1603, %v1988
    %v1990 = vpop.f32.mrb[0].mxu0
    %v1991 = vadd.f32 %v1603, %v1990
    %v1992 = vpop.f32.mrb[0].mxu0
    %v1993 = vadd.f32 %v1608, %v1992
    %v1994 = vpop.f32.mrb[0].mxu0
    %v1995 = vadd.f32 %v1608, %v1994
    %1996 = vmatprep.mubr.bf16.mxu0 0
    %1997 = vmatmul.mubr.bf16.gmra.mrb[0].mxu0 %v1677
    %v1998 = vpop.f32.mrb[0].mxu0
    %v1999 = vadd.f32 %v1613, %v1998
    %v2000 = vpop.f32.mrb[0].mxu0
    %v2001 = vadd.f32 %v1613, %v2000
    %v2002 = vpop.f32.mrb[0].mxu0
    %v2003 = vadd.f32 %v1618, %v2002
    %v2004 = vpop.f32.mrb[0].mxu0
    %v2005 = vadd.f32 %v1618, %v2004
    %2006 = vmatprep.mubr.bf16.mxu0 0
    %2007 = vmatmul.mubr.bf16.gmra.mrb[0].mxu0 %v1678
    %v2008 = vpop.f32.mrb[0].mxu0
    %v2009 = vadd.f32 %v1623, %v2008
    %v2010 = vpop.f32.mrb[0].mxu0
    %v2011 = vadd.f32 %v1623, %v2010
    %v2012 = vpop.f32.mrb[0].mxu0
    %v2013 = vadd.f32 %v1628, %v2012
    %v2014 = vpop.f32.mrb[0].mxu0
    %v2015 = vadd.f32 %v1628, %v2014
    %2016 = vmatprep.mubr.bf16.mxu0 0
    %2017 = vmatmul.mubr.bf16.gmra.mrb[0].mxu0 %v1679
    %v2018 = vpop.f32.mrb[0].mxu0
    %v2019 = vadd.f32 %v1633, %v2018
    %v2020 = vpop.f32.mrb[0].mxu0
    %v2021 = vadd.f32 %v1633, %v2020
    %v2022 = vpop.f32.mrb[0].mxu0
    %v2023 = vadd.f32 %v1638, %v2022
    %v2024 = vpop.f32.mrb[0].mxu0
    %v2025 = vadd.f32 %v1638, %v2024
    %2026 = vdwg.mxu0
    %2027 = vmatprep.subr.bf16.mxu0 %v1471
    %2028 = vmatpush1.bf16.msra.mxu0 %v1470
    %2029 = vmatprep.subr.bf16.mxu0 %v1479
    %2030 = vmatpush1.bf16.msra.mxu0 %v1478
    %2031 = vmatprep.subr.bf16.mxu0 %v1487
    %2032 = vmatpush1.bf16.msra.mxu0 %v1486
    %2033 = vmatprep.subr.bf16.mxu0 %v1495
    %2034 = vmatpush1.bf16.msra.mxu0 %v1494
    %2035 = vmatprep.subr.bf16.mxu0 %v1503
    %2036 = vmatpush1.bf16.msra.mxu0 %v1502
    %2037 = vmatprep.subr.bf16.mxu0 %v1511
    %2038 = vmatpush1.bf16.msra.mxu0 %v1510
    %2039 = vmatprep.subr.bf16.mxu0 %v1519
    %2040 = vmatpush1.bf16.msra.mxu0 %v1518
    %2041 = vmatprep.subr.bf16.mxu0 %v1527
    %2042 = vmatpush1.bf16.msra.mxu0 %v1526
    %2043 = vmatprep.subr.bf16.mxu0 0
    %2044 = vmatpush1.bf16.msra.mxu0 0
    %2045 = vmatprep.subr.bf16.mxu0 0
    %2046 = vmatpush1.bf16.msra.mxu0 0
    %2047 = vmatprep.subr.bf16.mxu0 0
    %2048 = vmatpush1.bf16.msra.mxu0 0
    %2049 = vmatprep.subr.bf16.mxu0 0
    %2050 = vmatpush1.bf16.msra.mxu0 0
    %2051 = vmatprep.subr.bf16.mxu0 0
    %2052 = vmatpush1.bf16.msra.mxu0 0
    %2053 = vmatprep.subr.bf16.mxu0 0
    %2054 = vmatpush1.bf16.msra.mxu0 0
    %2055 = vmatprep.subr.bf16.mxu0 0
    %2056 = vmatpush1.bf16.msra.mxu0 0
    %2057 = vmatprep.subr.bf16.mxu0 0
    %2058 = vmatpush1.bf16.msra.mxu0 0
    %2059 = vmatprep.mubr.bf16.mxu0 0
    %2060 = vmatmul.mubr.bf16.gmra.mrb[0].mxu0 %v1672
    %v2061 = vpop.f32.mrb[0].mxu0
    %v2062 = vadd.f32 %v1563, %v2061
    %v2063 = vpop.f32.mrb[0].mxu0
    %v2064 = vadd.f32 %v1563, %v2063
    %v2065 = vpop.f32.mrb[0].mxu0
    %v2066 = vadd.f32 %v1568, %v2065
    %v2067 = vpop.f32.mrb[0].mxu0
    %v2068 = vadd.f32 %v1568, %v2067
    %2069 = vmatprep.mubr.bf16.mxu0 0
    %2070 = vmatmul.mubr.bf16.gmra.mrb[0].mxu0 %v1673
    %v2071 = vpop.f32.mrb[0].mxu0
    %v2072 = vadd.f32 %v1573, %v2071
    %v2073 = vpop.f32.mrb[0].mxu0
    %v2074 = vadd.f32 %v1573, %v2073
    %v2075 = vpop.f32.mrb[0].mxu0
    %v2076 = vadd.f32 %v1578, %v2075
    %v2077 = vpop.f32.mrb[0].mxu0
    %v2078 = vadd.f32 %v1578, %v2077
    %2079 = vmatprep.mubr.bf16.mxu0 0
    %2080 = vmatmul.mubr.bf16.gmra.mrb[0].mxu0 %v1674
    %v2081 = vpop.f32.mrb[0].mxu0
    %v2082 = vadd.f32 %v1583, %v2081
    %v2083 = vpop.f32.mrb[0].mxu0
    %v2084 = vadd.f32 %v1583, %v2083
    %v2085 = vpop.f32.mrb[0].mxu0
    %v2086 = vadd.f32 %v1588, %v2085
    %v2087 = vpop.f32.mrb[0].mxu0
    %v2088 = vadd.f32 %v1588, %v2087
    %2089 = vmatprep.mubr.bf16.mxu0 0
    %2090 = vmatmul.mubr.bf16.gmra.mrb[0].mxu0 %v1675
    %v2091 = vpop.f32.mrb[0].mxu0
    %v2092 = vadd.f32 %v1593, %v2091
    %v2093 = vpop.f32.mrb[0].mxu0
    %v2094 = vadd.f32 %v1593, %v2093
    %v2095 = vpop.f32.mrb[0].mxu0
    %v2096 = vadd.f32 %v1598, %v2095
    %v2097 = vpop.f32.mrb[0].mxu0
    %v2098 = vadd.f32 %v1598, %v2097
    %2099 = vmatprep.mubr.bf16.mxu0 0
    %2100 = vmatmul.mubr.bf16.gmra.mrb[0].mxu0 %v1676
    %v2101 = vpop.f32.mrb[0].mxu0
    %v2102 = vadd.f32 %v1603, %v2101
    %v2103 = vpop.f32.mrb[0].mxu0
    %v2104 = vadd.f32 %v1603, %v2103
    %v2105 = vpop.f32.mrb[0].mxu0
    %v2106 = vadd.f32 %v1608, %v2105
    %v2107 = vpop.f32.mrb[0].mxu0
    %v2108 = vadd.f32 %v1608, %v2107
    %2109 = vmatprep.mubr.bf16.mxu0 0
    %2110 = vmatmul.mubr.bf16.gmra.mrb[0].mxu0 %v1677
    %v2111 = vpop.f32.mrb[0].mxu0
    %v2112 = vadd.f32 %v1613, %v2111
    %v2113 = vpop.f32.mrb[0].mxu0
    %v2114 = vadd.f32 %v1613, %v2113
    %v2115 = vpop.f32.mrb[0].mxu0
    %v2116 = vadd.f32 %v1618, %v2115
    %v2117 = vpop.f32.mrb[0].mxu0
    %v2118 = vadd.f32 %v1618, %v2117
    %2119 = vmatprep.mubr.bf16.mxu0 0
    %2120 = vmatmul.mubr.bf16.gmra.mrb[0].mxu0 %v1678
    %v2121 = vpop.f32.mrb[0].mxu0
    %v2122 = vadd.f32 %v1623, %v2121
    %v2123 = vpop.f32.mrb[0].mxu0
    %v2124 = vadd.f32 %v1623, %v2123
    %v2125 = vpop.f32.mrb[0].mxu0
    %v2126 = vadd.f32 %v1628, %v2125
    %v2127 = vpop.f32.mrb[0].mxu0
    %v2128 = vadd.f32 %v1628, %v2127
    %2129 = vmatprep.mubr.bf16.mxu0 0
    %2130 = vmatmul.mubr.bf16.gmra.mrb[0].mxu0 %v1679
    %v2131 = vpop.f32.mrb[0].mxu0
    %v2132 = vadd.f32 %v1633, %v2131
    %v2133 = vpop.f32.mrb[0].mxu0
    %v2134 = vadd.f32 %v1633, %v2133
    %v2135 = vpop.f32.mrb[0].mxu0
    %v2136 = vadd.f32 %v1638, %v2135
    %v2137 = vpop.f32.mrb[0].mxu0
    %v2138 = vadd.f32 %v1638, %v2137
    %2139 = vdwg.mxu0
    %v2140 = vmax.f32 %v1723, 0.0
    %v2141 = vmax.f32 %v1725, 0.0
    %v2142 = vmax.f32 %v1836, 0.0
    %v2143 = vmax.f32 %v1838, 0.0
    %v2144 = vmax.f32 %v1949, 0.0
    %v2145 = vmax.f32 %v1951, 0.0
    %v2146 = vmax.f32 %v2062, 0.0
    %v2147 = vmax.f32 %v2064, 0.0
    %v2148 = vmax.f32 %v1727, 0.0
    %v2149 = vmax.f32 %v1729, 0.0
    %v2150 = vmax.f32 %v1840, 0.0
    %v2151 = vmax.f32 %v1842, 0.0
    %v2152 = vmax.f32 %v1953, 0.0
    %v2153 = vmax.f32 %v1955, 0.0
    %v2154 = vmax.f32 %v2066, 0.0
    %v2155 = vmax.f32 %v2068, 0.0
    %v2156 = vmax.f32 %v1733, 0.0
    %v2157 = vmax.f32 %v1735, 0.0
    %v2158 = vmax.f32 %v1846, 0.0
    %v2159 = vmax.f32 %v1848, 0.0
    %v2160 = vmax.f32 %v1959, 0.0
    %v2161 = vmax.f32 %v1961, 0.0
    %v2162 = vmax.f32 %v2072, 0.0
    %v2163 = vmax.f32 %v2074, 0.0
    %v2164 = vmax.f32 %v1737, 0.0
    %v2165 = vmax.f32 %v1739, 0.0
    %v2166 = vmax.f32 %v1850, 0.0
    %v2167 = vmax.f32 %v1852, 0.0
    %v2168 = vmax.f32 %v1963, 0.0
    %v2169 = vmax.f32 %v1965, 0.0
    %v2170 = vmax.f32 %v2076, 0.0
    %v2171 = vmax.f32 %v2078, 0.0
    %v2172 = vmax.f32 %v1743, 0.0
    %v2173 = vmax.f32 %v1745, 0.0
    %v2174 = vmax.f32 %v1856, 0.0
    %v2175 = vmax.f32 %v1858, 0.0
    %v2176 = vmax.f32 %v1969, 0.0
    %v2177 = vmax.f32 %v1971, 0.0
    %v2178 = vmax.f32 %v2082, 0.0
    %v2179 = vmax.f32 %v2084, 0.0
    %v2180 = vmax.f32 %v1747, 0.0
    %v2181 = vmax.f32 %v1749, 0.0
    %v2182 = vmax.f32 %v1860, 0.0
    %v2183 = vmax.f32 %v1862, 0.0
    %v2184 = vmax.f32 %v1973, 0.0
    %v2185 = vmax.f32 %v1975, 0.0
    %v2186 = vmax.f32 %v2086, 0.0
    %v2187 = vmax.f32 %v2088, 0.0
    %v2188 = vmax.f32 %v1753, 0.0
    %v2189 = vmax.f32 %v1755, 0.0
    %v2190 = vmax.f32 %v1866, 0.0
    %v2191 = vmax.f32 %v1868, 0.0
    %v2192 = vmax.f32 %v1979, 0.0
    %v2193 = vmax.f32 %v1981, 0.0
    %v2194 = vmax.f32 %v2092, 0.0
    %v2195 = vmax.f32 %v2094, 0.0
    %v2196 = vmax.f32 %v1757, 0.0
    %v2197 = vmax.f32 %v1759, 0.0
    %v2198 = vmax.f32 %v1870, 0.0
    %v2199 = vmax.f32 %v1872, 0.0
    %v2200 = vmax.f32 %v1983, 0.0
    %v2201 = vmax.f32 %v1985, 0.0
    %v2202 = vmax.f32 %v2096, 0.0
    %v2203 = vmax.f32 %v2098, 0.0
    %v2204 = vmax.f32 %v1763, 0.0
    %v2205 = vmax.f32 %v1765, 0.0
    %v2206 = vmax.f32 %v1876, 0.0
    %v2207 = vmax.f32 %v1878, 0.0
    %v2208 = vmax.f32 %v1989, 0.0
    %v2209 = vmax.f32 %v1991, 0.0
    %v2210 = vmax.f32 %v2102, 0.0
    %v2211 = vmax.f32 %v2104, 0.0
    %v2212 = vmax.f32 %v1767, 0.0
    %v2213 = vmax.f32 %v1769, 0.0
    %v2214 = vmax.f32 %v1880, 0.0
    %v2215 = vmax.f32 %v1882, 0.0
    %v2216 = vmax.f32 %v1993, 0.0
    %v2217 = vmax.f32 %v1995, 0.0
    %v2218 = vmax.f32 %v2106, 0.0
    %v2219 = vmax.f32 %v2108, 0.0
    %v2220 = vmax.f32 %v1773, 0.0
    %v2221 = vmax.f32 %v1775, 0.0
    %v2222 = vmax.f32 %v1886, 0.0
    %v2223 = vmax.f32 %v1888, 0.0
    %v2224 = vmax.f32 %v1999, 0.0
    %v2225 = vmax.f32 %v2001, 0.0
    %v2226 = vmax.f32 %v2112, 0.0
    %v2227 = vmax.f32 %v2114, 0.0
    %v2228 = vmax.f32 %v1777, 0.0
    %v2229 = vmax.f32 %v1779, 0.0
    %v2230 = vmax.f32 %v1890, 0.0
    %v2231 = vmax.f32 %v1892, 0.0
    %v2232 = vmax.f32 %v2003, 0.0
    %v2233 = vmax.f32 %v2005, 0.0
    %v2234 = vmax.f32 %v2116, 0.0
    %v2235 = vmax.f32 %v2118, 0.0
    %v2236 = vmax.f32 %v1783, 0.0
    %v2237 = vmax.f32 %v1785, 0.0
    %v2238 = vmax.f32 %v1896, 0.0
    %v2239 = vmax.f32 %v1898, 0.0
    %v2240 = vmax.f32 %v2009, 0.0
    %v2241 = vmax.f32 %v2011, 0.0
    %v2242 = vmax.f32 %v2122, 0.0
    %v2243 = vmax.f32 %v2124, 0.0
    %v2244 = vmax.f32 %v1787, 0.0
    %v2245 = vmax.f32 %v1789, 0.0
    %v2246 = vmax.f32 %v1900, 0.0
    %v2247 = vmax.f32 %v1902, 0.0
    %v2248 = vmax.f32 %v2013, 0.0
    %v2249 = vmax.f32 %v2015, 0.0
    %v2250 = vmax.f32 %v2126, 0.0
    %v2251 = vmax.f32 %v2128, 0.0
    %v2252 = vmax.f32 %v1793, 0.0
    %v2253 = vmax.f32 %v1795, 0.0
    %v2254 = vmax.f32 %v1906, 0.0
    %v2255 = vmax.f32 %v1908, 0.0
    %v2256 = vmax.f32 %v2019, 0.0
    %v2257 = vmax.f32 %v2021, 0.0
    %v2258 = vmax.f32 %v2132, 0.0
    %v2259 = vmax.f32 %v2134, 0.0
    %v2260 = vmax.f32 %v1797, 0.0
    %v2261 = vmax.f32 %v1799, 0.0
    %v2262 = vmax.f32 %v1910, 0.0
    %v2263 = vmax.f32 %v1912, 0.0
    %v2264 = vmax.f32 %v2023, 0.0
    %v2265 = vmax.f32 %v2025, 0.0
    %v2266 = vmax.f32 %v2136, 0.0
    %v2267 = vmax.f32 %v2138, 0.0
    %v2268 = vld [vmem:[%s7] sm:$0xf]
    %v2269 = vld [vmem:[%s7 + $0x4] sm:$0xf]
    %v2270 = vld [vmem:[%s7 + $0x8] sm:$0xf]
    %v2271 = vld [vmem:[%s7 + $0xc] sm:$0xf]
    %v2272 = vld [vmem:[%s7 + $0x10] sm:$0xf]
    %v2273 = vld [vmem:[%s7 + $0x14] sm:$0xf]
    %v2274 = vld [vmem:[%s7 + $0x18] sm:$0xf]
    %v2275 = vld [vmem:[%s7 + $0x1c] sm:$0xf]
    %v2276 = vld [vmem:[%s7 + $0x20] sm:$0xf]
    %v2277 = vld [vmem:[%s7 + $0x24] sm:$0xf]
    %v2278 = vld [vmem:[%s7 + $0x28] sm:$0xf]
    %v2279 = vld [vmem:[%s7 + $0x2c] sm:$0xf]
    %v2280 = vld [vmem:[%s7 + $0x30] sm:$0xf]
    %v2281 = vld [vmem:[%s7 + $0x34] sm:$0xf]
    %v2282 = vld [vmem:[%s7 + $0x38] sm:$0xf]
    %v2283 = vld [vmem:[%s7 + $0x3c] sm:$0xf]
    %v2284 = vpack.c.bf16 %v2148, %v2140
    %v2285 = vpack.c.bf16 %v2149, %v2141
    %v2286 = vpack.c.bf16 %v2150, %v2142
    %v2287 = vpack.c.bf16 %v2151, %v2143
    %v2288 = vpack.c.bf16 %v2152, %v2144
    %v2289 = vpack.c.bf16 %v2153, %v2145
    %v2290 = vpack.c.bf16 %v2154, %v2146
    %v2291 = vpack.c.bf16 %v2155, %v2147
    %v2292 = vpack.c.bf16 %v2164, %v2156
    %v2293 = vpack.c.bf16 %v2165, %v2157
    %v2294 = vpack.c.bf16 %v2166, %v2158
    %v2295 = vpack.c.bf16 %v2167, %v2159
    %v2296 = vpack.c.bf16 %v2168, %v2160
    %v2297 = vpack.c.bf16 %v2169, %v2161
    %v2298 = vpack.c.bf16 %v2170, %v2162
    %v2299 = vpack.c.bf16 %v2171, %v2163
    %v2300 = vpack.c.bf16 %v2180, %v2172
    %v2301 = vpack.c.bf16 %v2181, %v2173
    %v2302 = vpack.c.bf16 %v2182, %v2174
    %v2303 = vpack.c.bf16 %v2183, %v2175
    %v2304 = vpack.c.bf16 %v2184, %v2176
    %v2305 = vpack.c.bf16 %v2185, %v2177
    %v2306 = vpack.c.bf16 %v2186, %v2178
    %v2307 = vpack.c.bf16 %v2187, %v2179
    %v2308 = vpack.c.bf16 %v2196, %v2188
    %v2309 = vpack.c.bf16 %v2197, %v2189
    %v2310 = vpack.c.bf16 %v2198, %v2190
    %v2311 = vpack.c.bf16 %v2199, %v2191
    %v2312 = vpack.c.bf16 %v2200, %v2192
    %v2313 = vpack.c.bf16 %v2201, %v2193
    %v2314 = vpack.c.bf16 %v2202, %v2194
    %v2315 = vpack.c.bf16 %v2203, %v2195
    %v2316 = vpack.c.bf16 %v2212, %v2204
    %v2317 = vpack.c.bf16 %v2213, %v2205
    %v2318 = vpack.c.bf16 %v2214, %v2206
    %v2319 = vpack.c.bf16 %v2215, %v2207
    %v2320 = vpack.c.bf16 %v2216, %v2208
    %v2321 = vpack.c.bf16 %v2217, %v2209
    %v2322 = vpack.c.bf16 %v2218, %v2210
    %v2323 = vpack.c.bf16 %v2219, %v2211
    %v2324 = vpack.c.bf16 %v2228, %v2220
    %v2325 = vpack.c.bf16 %v2229, %v2221
    %v2326 = vpack.c.bf16 %v2230, %v2222
    %v2327 = vpack.c.bf16 %v2231, %v2223
    %v2328 = vpack.c.bf16 %v2232, %v2224
    %v2329 = vpack.c.bf16 %v2233, %v2225
    %v2330 = vpack.c.bf16 %v2234, %v2226
    %v2331 = vpack.c.bf16 %v2235, %v2227
    %v2332 = vpack.c.bf16 %v2244, %v2236
    %v2333 = vpack.c.bf16 %v2245, %v2237
    %v2334 = vpack.c.bf16 %v2246, %v2238
    %v2335 = vpack.c.bf16 %v2247, %v2239
    %v2336 = vpack.c.bf16 %v2248, %v2240
    %v2337 = vpack.c.bf16 %v2249, %v2241
    %v2338 = vpack.c.bf16 %v2250, %v2242
    %v2339 = vpack.c.bf16 %v2251, %v2243
    %v2340 = vpack.c.bf16 %v2260, %v2252
    %v2341 = vpack.c.bf16 %v2261, %v2253
    %v2342 = vpack.c.bf16 %v2262, %v2254
    %v2343 = vpack.c.bf16 %v2263, %v2255
    %v2344 = vpack.c.bf16 %v2264, %v2256
    %v2345 = vpack.c.bf16 %v2265, %v2257
    %v2346 = vpack.c.bf16 %v2266, %v2258
    %v2347 = vpack.c.bf16 %v2267, %v2259
    %v2348 = vld [vmem:[%s8] sm:$0xff]
    %v2349 = vld [vmem:[%s8 + $0x8] sm:$0xff]
    %v2350 = vld [vmem:[%s8 + $0x10] sm:$0xff]
    %v2351 = vld [vmem:[%s8 + $0x18] sm:$0xff]
    %v2352 = vld [vmem:[%s8 + $0x20] sm:$0xff]
    %v2353 = vld [vmem:[%s8 + $0x28] sm:$0xff]
    %v2354 = vld [vmem:[%s8 + $0x30] sm:$0xff]
    %v2355 = vld [vmem:[%s8 + $0x38] sm:$0xff]
    %v2356 = vld [vmem:[%s8 + $0x40] sm:$0xff]
    %v2357 = vld [vmem:[%s8 + $0x48] sm:$0xff]
    %v2358 = vld [vmem:[%s8 + $0x50] sm:$0xff]
    %v2359 = vld [vmem:[%s8 + $0x58] sm:$0xff]
    %v2360 = vld [vmem:[%s8 + $0x60] sm:$0xff]
    %v2361 = vld [vmem:[%s8 + $0x68] sm:$0xff]
    %v2362 = vld [vmem:[%s8 + $0x70] sm:$0xff]
    %v2363 = vld [vmem:[%s8 + $0x78] sm:$0xff]
    %2365 = vset.pattern.permute.xlu0 0
    %2366 = vperm.xlu0 %2365, %v2348
    %v2367 = vpop.permute.xlu0 %2366
    %2370 = vset.pattern.permute.xlu0 0
    %2371 = vperm.xlu0 %2370, %v2349
    %v2372 = vpop.permute.xlu0 %2371
    %2375 = vset.pattern.permute.xlu0 0
    %2376 = vperm.xlu0 %2375, %v2350
    %v2377 = vpop.permute.xlu0 %2376
    %2380 = vset.pattern.permute.xlu0 0
    %2381 = vperm.xlu0 %2380, %v2351
    %v2382 = vpop.permute.xlu0 %2381
    %2385 = vset.pattern.permute.xlu0 0
    %2386 = vperm.xlu0 %2385, %v2352
    %v2387 = vpop.permute.xlu0 %2386
    %2390 = vset.pattern.permute.xlu0 0
    %2391 = vperm.xlu0 %2390, %v2353
    %v2392 = vpop.permute.xlu0 %2391
    %2395 = vset.pattern.permute.xlu0 0
    %2396 = vperm.xlu0 %2395, %v2354
    %v2397 = vpop.permute.xlu0 %2396
    %2400 = vset.pattern.permute.xlu0 0
    %2401 = vperm.xlu0 %2400, %v2355
    %v2402 = vpop.permute.xlu0 %2401
    %2405 = vset.pattern.permute.xlu0 0
    %2406 = vperm.xlu0 %2405, %v2356
    %v2407 = vpop.permute.xlu0 %2406
    %2410 = vset.pattern.permute.xlu0 0
    %2411 = vperm.xlu0 %2410, %v2357
    %v2412 = vpop.permute.xlu0 %2411
    %2415 = vset.pattern.permute.xlu0 0
    %2416 = vperm.xlu0 %2415, %v2358
    %v2417 = vpop.permute.xlu0 %2416
    %2420 = vset.pattern.permute.xlu0 0
    %2421 = vperm.xlu0 %2420, %v2359
    %v2422 = vpop.permute.xlu0 %2421
    %2425 = vset.pattern.permute.xlu0 0
    %2426 = vperm.xlu0 %2425, %v2360
    %v2427 = vpop.permute.xlu0 %2426
    %2430 = vset.pattern.permute.xlu0 0
    %2431 = vperm.xlu0 %2430, %v2361
    %v2432 = vpop.permute.xlu0 %2431
    %2435 = vset.pattern.permute.xlu0 0
    %2436 = vperm.xlu0 %2435, %v2362
    %v2437 = vpop.permute.xlu0 %2436
    %2440 = vset.pattern.permute.xlu0 0
    %2441 = vperm.xlu0 %2440, %v2363
    %v2442 = vpop.permute.xlu0 %2441
    %v2460 = vunpack.c.l.b16 %v2268
    %v2461 = vunpack.c.l.b16 %v2269
    %v2462 = vunpack.c.l.b16 %v2270
    %v2463 = vunpack.c.l.b16 %v2271
    %v2464 = vunpack.c.l.b16 %v2272
    %v2465 = vunpack.c.l.b16 %v2273
    %v2466 = vunpack.c.l.b16 %v2274
    %v2467 = vunpack.c.l.b16 %v2275
    %v2468 = vunpack.c.l.b16 %v2276
    %v2469 = vunpack.c.l.b16 %v2277
    %v2470 = vunpack.c.l.b16 %v2278
    %v2471 = vunpack.c.l.b16 %v2279
    %v2472 = vunpack.c.l.b16 %v2280
    %v2473 = vunpack.c.l.b16 %v2281
    %v2474 = vunpack.c.l.b16 %v2282
    %v2475 = vunpack.c.l.b16 %v2283
    %v2476 = vpack.c.b16 %v2461, %v2460
    %v2477 = vpack.c.b16 %v2463, %v2462
    %v2478 = vpack.c.b16 %v2465, %v2464
    %v2479 = vpack.c.b16 %v2467, %v2466
    %v2480 = vpack.c.b16 %v2469, %v2468
    %v2481 = vpack.c.b16 %v2471, %v2470
    %v2482 = vpack.c.b16 %v2473, %v2472
    %v2483 = vpack.c.b16 %v2475, %v2474
    %2492 = vmatprep.subr.bf16.mxu0 %v2285
    %2493 = vmatpush1.bf16.msra.mxu0 %v2284
    %2494 = vmatprep.subr.bf16.mxu0 %v2293
    %2495 = vmatpush1.bf16.msra.mxu0 %v2292
    %2496 = vmatprep.subr.bf16.mxu0 %v2301
    %2497 = vmatpush1.bf16.msra.mxu0 %v2300
    %2498 = vmatprep.subr.bf16.mxu0 %v2309
    %2499 = vmatpush1.bf16.msra.mxu0 %v2308
    %2500 = vmatprep.subr.bf16.mxu0 %v2317
    %2501 = vmatpush1.bf16.msra.mxu0 %v2316
    %2502 = vmatprep.subr.bf16.mxu0 %v2325
    %2503 = vmatpush1.bf16.msra.mxu0 %v2324
    %2504 = vmatprep.subr.bf16.mxu0 %v2333
    %2505 = vmatpush1.bf16.msra.mxu0 %v2332
    %2506 = vmatprep.subr.bf16.mxu0 %v2341
    %2507 = vmatpush1.bf16.msra.mxu0 %v2340
    %2508 = vmatprep.subr.bf16.mxu0 0
    %2509 = vmatpush1.bf16.msra.mxu0 0
    %2510 = vmatprep.subr.bf16.mxu0 0
    %2511 = vmatpush1.bf16.msra.mxu0 0
    %2512 = vmatprep.subr.bf16.mxu0 0
    %2513 = vmatpush1.bf16.msra.mxu0 0
    %2514 = vmatprep.subr.bf16.mxu0 0
    %2515 = vmatpush1.bf16.msra.mxu0 0
    %2516 = vmatprep.subr.bf16.mxu0 0
    %2517 = vmatpush1.bf16.msra.mxu0 0
    %2518 = vmatprep.subr.bf16.mxu0 0
    %2519 = vmatpush1.bf16.msra.mxu0 0
    %2520 = vmatprep.subr.bf16.mxu0 0
    %2521 = vmatpush1.bf16.msra.mxu0 0
    %2522 = vmatprep.subr.bf16.mxu0 0
    %2523 = vmatpush1.bf16.msra.mxu0 0
    %2524 = vmatprep.mubr.bf16.mxu0 0
    %2525 = vmatmul.mubr.bf16.gmra.mrb[0].mxu0 %v2476
    %v2526 = vpop.f32.mrb[0].mxu0
    %v2527 = vadd.f32 %v2367, %v2526
    %v2528 = vpop.f32.mrb[0].mxu0
    %v2529 = vadd.f32 %v2367, %v2528
    %v2530 = vpop.f32.mrb[0].mxu0
    %v2531 = vadd.f32 %v2372, %v2530
    %v2532 = vpop.f32.mrb[0].mxu0
    %v2533 = vadd.f32 %v2372, %v2532
    %2534 = vmatprep.mubr.bf16.mxu0 0
    %2535 = vmatmul.mubr.bf16.gmra.mrb[0].mxu0 %v2477
    %v2536 = vpop.f32.mrb[0].mxu0
    %v2537 = vadd.f32 %v2377, %v2536
    %v2538 = vpop.f32.mrb[0].mxu0
    %v2539 = vadd.f32 %v2377, %v2538
    %v2540 = vpop.f32.mrb[0].mxu0
    %v2541 = vadd.f32 %v2382, %v2540
    %v2542 = vpop.f32.mrb[0].mxu0
    %v2543 = vadd.f32 %v2382, %v2542
    %2544 = vmatprep.mubr.bf16.mxu0 0
    %2545 = vmatmul.mubr.bf16.gmra.mrb[0].mxu0 %v2478
    %v2546 = vpop.f32.mrb[0].mxu0
    %v2547 = vadd.f32 %v2387, %v2546
    %v2548 = vpop.f32.mrb[0].mxu0
    %v2549 = vadd.f32 %v2387, %v2548
    %v2550 = vpop.f32.mrb[0].mxu0
    %v2551 = vadd.f32 %v2392, %v2550
    %v2552 = vpop.f32.mrb[0].mxu0
    %v2553 = vadd.f32 %v2392, %v2552
    %2554 = vmatprep.mubr.bf16.mxu0 0
    %2555 = vmatmul.mubr.bf16.gmra.mrb[0].mxu0 %v2479
    %v2556 = vpop.f32.mrb[0].mxu0
    %v2557 = vadd.f32 %v2397, %v2556
    %v2558 = vpop.f32.mrb[0].mxu0
    %v2559 = vadd.f32 %v2397, %v2558
    %v2560 = vpop.f32.mrb[0].mxu0
    %v2561 = vadd.f32 %v2402, %v2560
    %v2562 = vpop.f32.mrb[0].mxu0
    %v2563 = vadd.f32 %v2402, %v2562
    %2564 = vmatprep.mubr.bf16.mxu0 0
    %2565 = vmatmul.mubr.bf16.gmra.mrb[0].mxu0 %v2480
    %v2566 = vpop.f32.mrb[0].mxu0
    %v2567 = vadd.f32 %v2407, %v2566
    %v2568 = vpop.f32.mrb[0].mxu0
    %v2569 = vadd.f32 %v2407, %v2568
    %v2570 = vpop.f32.mrb[0].mxu0
    %v2571 = vadd.f32 %v2412, %v2570
    %v2572 = vpop.f32.mrb[0].mxu0
    %v2573 = vadd.f32 %v2412, %v2572
    %2574 = vmatprep.mubr.bf16.mxu0 0
    %2575 = vmatmul.mubr.bf16.gmra.mrb[0].mxu0 %v2481
    %v2576 = vpop.f32.mrb[0].mxu0
    %v2577 = vadd.f32 %v2417, %v2576
    %v2578 = vpop.f32.mrb[0].mxu0
    %v2579 = vadd.f32 %v2417, %v2578
    %v2580 = vpop.f32.mrb[0].mxu0
    %v2581 = vadd.f32 %v2422, %v2580
    %v2582 = vpop.f32.mrb[0].mxu0
    %v2583 = vadd.f32 %v2422, %v2582
    %2584 = vmatprep.mubr.bf16.mxu0 0
    %2585 = vmatmul.mubr.bf16.gmra.mrb[0].mxu0 %v2482
    %v2586 = vpop.f32.mrb[0].mxu0
    %v2587 = vadd.f32 %v2427, %v2586
    %v2588 = vpop.f32.mrb[0].mxu0
    %v2589 = vadd.f32 %v2427, %v2588
    %v2590 = vpop.f32.mrb[0].mxu0
    %v2591 = vadd.f32 %v2432, %v2590
    %v2592 = vpop.f32.mrb[0].mxu0
    %v2593 = vadd.f32 %v2432, %v2592
    %2594 = vmatprep.mubr.bf16.mxu0 0
    %2595 = vmatmul.mubr.bf16.gmra.mrb[0].mxu0 %v2483
    %v2596 = vpop.f32.mrb[0].mxu0
    %v2597 = vadd.f32 %v2437, %v2596
    %v2598 = vpop.f32.mrb[0].mxu0
    %v2599 = vadd.f32 %v2437, %v2598
    %v2600 = vpop.f32.mrb[0].mxu0
    %v2601 = vadd.f32 %v2442, %v2600
    %v2602 = vpop.f32.mrb[0].mxu0
    %v2603 = vadd.f32 %v2442, %v2602
    %2604 = vdwg.mxu0
    %2605 = vmatprep.subr.bf16.mxu0 %v2287
    %2606 = vmatpush1.bf16.msra.mxu0 %v2286
    %2607 = vmatprep.subr.bf16.mxu0 %v2295
    %2608 = vmatpush1.bf16.msra.mxu0 %v2294
    %2609 = vmatprep.subr.bf16.mxu0 %v2303
    %2610 = vmatpush1.bf16.msra.mxu0 %v2302
    %2611 = vmatprep.subr.bf16.mxu0 %v2311
    %2612 = vmatpush1.bf16.msra.mxu0 %v2310
    %2613 = vmatprep.subr.bf16.mxu0 %v2319
    %2614 = vmatpush1.bf16.msra.mxu0 %v2318
    %2615 = vmatprep.subr.bf16.mxu0 %v2327
    %2616 = vmatpush1.bf16.msra.mxu0 %v2326
    %2617 = vmatprep.subr.bf16.mxu0 %v2335
    %2618 = vmatpush1.bf16.msra.mxu0 %v2334
    %2619 = vmatprep.subr.bf16.mxu0 %v2343
    %2620 = vmatpush1.bf16.msra.mxu0 %v2342
    %2621 = vmatprep.subr.bf16.mxu0 0
    %2622 = vmatpush1.bf16.msra.mxu0 0
    %2623 = vmatprep.subr.bf16.mxu0 0
    %2624 = vmatpush1.bf16.msra.mxu0 0
    %2625 = vmatprep.subr.bf16.mxu0 0
    %2626 = vmatpush1.bf16.msra.mxu0 0
    %2627 = vmatprep.subr.bf16.mxu0 0
    %2628 = vmatpush1.bf16.msra.mxu0 0
    %2629 = vmatprep.subr.bf16.mxu0 0
    %2630 = vmatpush1.bf16.msra.mxu0 0
    %2631 = vmatprep.subr.bf16.mxu0 0
    %2632 = vmatpush1.bf16.msra.mxu0 0
    %2633 = vmatprep.subr.bf16.mxu0 0
    %2634 = vmatpush1.bf16.msra.mxu0 0
    %2635 = vmatprep.subr.bf16.mxu0 0
    %2636 = vmatpush1.bf16.msra.mxu0 0
    %2637 = vmatprep.mubr.bf16.mxu0 0
    %2638 = vmatmul.mubr.bf16.gmra.mrb[0].mxu0 %v2476
    %v2639 = vpop.f32.mrb[0].mxu0
    %v2640 = vadd.f32 %v2367, %v2639
    %v2641 = vpop.f32.mrb[0].mxu0
    %v2642 = vadd.f32 %v2367, %v2641
    %v2643 = vpop.f32.mrb[0].mxu0
    %v2644 = vadd.f32 %v2372, %v2643
    %v2645 = vpop.f32.mrb[0].mxu0
    %v2646 = vadd.f32 %v2372, %v2645
    %2647 = vmatprep.mubr.bf16.mxu0 0
    %2648 = vmatmul.mubr.bf16.gmra.mrb[0].mxu0 %v2477
    %v2649 = vpop.f32.mrb[0].mxu0
    %v2650 = vadd.f32 %v2377, %v2649
    %v2651 = vpop.f32.mrb[0].mxu0
    %v2652 = vadd.f32 %v2377, %v2651
    %v2653 = vpop.f32.mrb[0].mxu0
    %v2654 = vadd.f32 %v2382, %v2653
    %v2655 = vpop.f32.mrb[0].mxu0
    %v2656 = vadd.f32 %v2382, %v2655
    %2657 = vmatprep.mubr.bf16.mxu0 0
    %2658 = vmatmul.mubr.bf16.gmra.mrb[0].mxu0 %v2478
    %v2659 = vpop.f32.mrb[0].mxu0
    %v2660 = vadd.f32 %v2387, %v2659
    %v2661 = vpop.f32.mrb[0].mxu0
    %v2662 = vadd.f32 %v2387, %v2661
    %v2663 = vpop.f32.mrb[0].mxu0
    %v2664 = vadd.f32 %v2392, %v2663
    %v2665 = vpop.f32.mrb[0].mxu0
    %v2666 = vadd.f32 %v2392, %v2665
    %2667 = vmatprep.mubr.bf16.mxu0 0
    %2668 = vmatmul.mubr.bf16.gmra.mrb[0].mxu0 %v2479
    %v2669 = vpop.f32.mrb[0].mxu0
    %v2670 = vadd.f32 %v2397, %v2669
    %v2671 = vpop.f32.mrb[0].mxu0
    %v2672 = vadd.f32 %v2397, %v2671
    %v2673 = vpop.f32.mrb[0].mxu0
    %v2674 = vadd.f32 %v2402, %v2673
    %v2675 = vpop.f32.mrb[0].mxu0
    %v2676 = vadd.f32 %v2402, %v2675
    %2677 = vmatprep.mubr.bf16.mxu0 0
    %2678 = vmatmul.mubr.bf16.gmra.mrb[0].mxu0 %v2480
    %v2679 = vpop.f32.mrb[0].mxu0
    %v2680 = vadd.f32 %v2407, %v2679
    %v2681 = vpop.f32.mrb[0].mxu0
    %v2682 = vadd.f32 %v2407, %v2681
    %v2683 = vpop.f32.mrb[0].mxu0
    %v2684 = vadd.f32 %v2412, %v2683
    %v2685 = vpop.f32.mrb[0].mxu0
    %v2686 = vadd.f32 %v2412, %v2685
    %2687 = vmatprep.mubr.bf16.mxu0 0
    %2688 = vmatmul.mubr.bf16.gmra.mrb[0].mxu0 %v2481
    %v2689 = vpop.f32.mrb[0].mxu0
    %v2690 = vadd.f32 %v2417, %v2689
    %v2691 = vpop.f32.mrb[0].mxu0
    %v2692 = vadd.f32 %v2417, %v2691
    %v2693 = vpop.f32.mrb[0].mxu0
    %v2694 = vadd.f32 %v2422, %v2693
    %v2695 = vpop.f32.mrb[0].mxu0
    %v2696 = vadd.f32 %v2422, %v2695
    %2697 = vmatprep.mubr.bf16.mxu0 0
    %2698 = vmatmul.mubr.bf16.gmra.mrb[0].mxu0 %v2482
    %v2699 = vpop.f32.mrb[0].mxu0
    %v2700 = vadd.f32 %v2427, %v2699
    %v2701 = vpop.f32.mrb[0].mxu0
    %v2702 = vadd.f32 %v2427, %v2701
    %v2703 = vpop.f32.mrb[0].mxu0
    %v2704 = vadd.f32 %v2432, %v2703
    %v2705 = vpop.f32.mrb[0].mxu0
    %v2706 = vadd.f32 %v2432, %v2705
    %2707 = vmatprep.mubr.bf16.mxu0 0
    %2708 = vmatmul.mubr.bf16.gmra.mrb[0].mxu0 %v2483
    %v2709 = vpop.f32.mrb[0].mxu0
    %v2710 = vadd.f32 %v2437, %v2709
    %v2711 = vpop.f32.mrb[0].mxu0
    %v2712 = vadd.f32 %v2437, %v2711
    %v2713 = vpop.f32.mrb[0].mxu0
    %v2714 = vadd.f32 %v2442, %v2713
    %v2715 = vpop.f32.mrb[0].mxu0
    %v2716 = vadd.f32 %v2442, %v2715
    %2717 = vdwg.mxu0
    %2718 = vmatprep.subr.bf16.mxu0 %v2289
    %2719 = vmatpush1.bf16.msra.mxu0 %v2288
    %2720 = vmatprep.subr.bf16.mxu0 %v2297
    %2721 = vmatpush1.bf16.msra.mxu0 %v2296
    %2722 = vmatprep.subr.bf16.mxu0 %v2305
    %2723 = vmatpush1.bf16.msra.mxu0 %v2304
    %2724 = vmatprep.subr.bf16.mxu0 %v2313
    %2725 = vmatpush1.bf16.msra.mxu0 %v2312
    %2726 = vmatprep.subr.bf16.mxu0 %v2321
    %2727 = vmatpush1.bf16.msra.mxu0 %v2320
    %2728 = vmatprep.subr.bf16.mxu0 %v2329
    %2729 = vmatpush1.bf16.msra.mxu0 %v2328
    %2730 = vmatprep.subr.bf16.mxu0 %v2337
    %2731 = vmatpush1.bf16.msra.mxu0 %v2336
    %2732 = vmatprep.subr.bf16.mxu0 %v2345
    %2733 = vmatpush1.bf16.msra.mxu0 %v2344
    %2734 = vmatprep.subr.bf16.mxu0 0
    %2735 = vmatpush1.bf16.msra.mxu0 0
    %2736 = vmatprep.subr.bf16.mxu0 0
    %2737 = vmatpush1.bf16.msra.mxu0 0
    %2738 = vmatprep.subr.bf16.mxu0 0
    %2739 = vmatpush1.bf16.msra.mxu0 0
    %2740 = vmatprep.subr.bf16.mxu0 0
    %2741 = vmatpush1.bf16.msra.mxu0 0
    %2742 = vmatprep.subr.bf16.mxu0 0
    %2743 = vmatpush1.bf16.msra.mxu0 0
    %2744 = vmatprep.subr.bf16.mxu0 0
    %2745 = vmatpush1.bf16.msra.mxu0 0
    %2746 = vmatprep.subr.bf16.mxu0 0
    %2747 = vmatpush1.bf16.msra.mxu0 0
    %2748 = vmatprep.subr.bf16.mxu0 0
    %2749 = vmatpush1.bf16.msra.mxu0 0
    %2750 = vmatprep.mubr.bf16.mxu0 0
    %2751 = vmatmul.mubr.bf16.gmra.mrb[0].mxu0 %v2476
    %v2752 = vpop.f32.mrb[0].mxu0
    %v2753 = vadd.f32 %v2367, %v2752
    %v2754 = vpop.f32.mrb[0].mxu0
    %v2755 = vadd.f32 %v2367, %v2754
    %v2756 = vpop.f32.mrb[0].mxu0
    %v2757 = vadd.f32 %v2372, %v2756
    %v2758 = vpop.f32.mrb[0].mxu0
    %v2759 = vadd.f32 %v2372, %v2758
    %2760 = vmatprep.mubr.bf16.mxu0 0
    %2761 = vmatmul.mubr.bf16.gmra.mrb[0].mxu0 %v2477
    %v2762 = vpop.f32.mrb[0].mxu0
    %v2763 = vadd.f32 %v2377, %v2762
    %v2764 = vpop.f32.mrb[0].mxu0
    %v2765 = vadd.f32 %v2377, %v2764
    %v2766 = vpop.f32.mrb[0].mxu0
    %v2767 = vadd.f32 %v2382, %v2766
    %v2768 = vpop.f32.mrb[0].mxu0
    %v2769 = vadd.f32 %v2382, %v2768
    %2770 = vmatprep.mubr.bf16.mxu0 0
    %2771 = vmatmul.mubr.bf16.gmra.mrb[0].mxu0 %v2478
    %v2772 = vpop.f32.mrb[0].mxu0
    %v2773 = vadd.f32 %v2387, %v2772
    %v2774 = vpop.f32.mrb[0].mxu0
    %v2775 = vadd.f32 %v2387, %v2774
    %v2776 = vpop.f32.mrb[0].mxu0
    %v2777 = vadd.f32 %v2392, %v2776
    %v2778 = vpop.f32.mrb[0].mxu0
    %v2779 = vadd.f32 %v2392, %v2778
    %2780 = vmatprep.mubr.bf16.mxu0 0
    %2781 = vmatmul.mubr.bf16.gmra.mrb[0].mxu0 %v2479
    %v2782 = vpop.f32.mrb[0].mxu0
    %v2783 = vadd.f32 %v2397, %v2782
    %v2784 = vpop.f32.mrb[0].mxu0
    %v2785 = vadd.f32 %v2397, %v2784
    %v2786 = vpop.f32.mrb[0].mxu0
    %v2787 = vadd.f32 %v2402, %v2786
    %v2788 = vpop.f32.mrb[0].mxu0
    %v2789 = vadd.f32 %v2402, %v2788
    %2790 = vmatprep.mubr.bf16.mxu0 0
    %2791 = vmatmul.mubr.bf16.gmra.mrb[0].mxu0 %v2480
    %v2792 = vpop.f32.mrb[0].mxu0
    %v2793 = vadd.f32 %v2407, %v2792
    %v2794 = vpop.f32.mrb[0].mxu0
    %v2795 = vadd.f32 %v2407, %v2794
    %v2796 = vpop.f32.mrb[0].mxu0
    %v2797 = vadd.f32 %v2412, %v2796
    %v2798 = vpop.f32.mrb[0].mxu0
    %v2799 = vadd.f32 %v2412, %v2798
    %2800 = vmatprep.mubr.bf16.mxu0 0
    %2801 = vmatmul.mubr.bf16.gmra.mrb[0].mxu0 %v2481
    %v2802 = vpop.f32.mrb[0].mxu0
    %v2803 = vadd.f32 %v2417, %v2802
    %v2804 = vpop.f32.mrb[0].mxu0
    %v2805 = vadd.f32 %v2417, %v2804
    %v2806 = vpop.f32.mrb[0].mxu0
    %v2807 = vadd.f32 %v2422, %v2806
    %v2808 = vpop.f32.mrb[0].mxu0
    %v2809 = vadd.f32 %v2422, %v2808
    %2810 = vmatprep.mubr.bf16.mxu0 0
    %2811 = vmatmul.mubr.bf16.gmra.mrb[0].mxu0 %v2482
    %v2812 = vpop.f32.mrb[0].mxu0
    %v2813 = vadd.f32 %v2427, %v2812
    %v2814 = vpop.f32.mrb[0].mxu0
    %v2815 = vadd.f32 %v2427, %v2814
    %v2816 = vpop.f32.mrb[0].mxu0
    %v2817 = vadd.f32 %v2432, %v2816
    %v2818 = vpop.f32.mrb[0].mxu0
    %v2819 = vadd.f32 %v2432, %v2818
    %2820 = vmatprep.mubr.bf16.mxu0 0
    %2821 = vmatmul.mubr.bf16.gmra.mrb[0].mxu0 %v2483
    %v2822 = vpop.f32.mrb[0].mxu0
    %v2823 = vadd.f32 %v2437, %v2822
    %v2824 = vpop.f32.mrb[0].mxu0
    %v2825 = vadd.f32 %v2437, %v2824
    %v2826 = vpop.f32.mrb[0].mxu0
    %v2827 = vadd.f32 %v2442, %v2826
    %v2828 = vpop.f32.mrb[0].mxu0
    %v2829 = vadd.f32 %v2442, %v2828
    %2830 = vdwg.mxu0
    %2831 = vmatprep.subr.bf16.mxu0 %v2291
    %2832 = vmatpush1.bf16.msra.mxu0 %v2290
    %2833 = vmatprep.subr.bf16.mxu0 %v2299
    %2834 = vmatpush1.bf16.msra.mxu0 %v2298
    %2835 = vmatprep.subr.bf16.mxu0 %v2307
    %2836 = vmatpush1.bf16.msra.mxu0 %v2306
    %2837 = vmatprep.subr.bf16.mxu0 %v2315
    %2838 = vmatpush1.bf16.msra.mxu0 %v2314
    %2839 = vmatprep.subr.bf16.mxu0 %v2323
    %2840 = vmatpush1.bf16.msra.mxu0 %v2322
    %2841 = vmatprep.subr.bf16.mxu0 %v2331
    %2842 = vmatpush1.bf16.msra.mxu0 %v2330
    %2843 = vmatprep.subr.bf16.mxu0 %v2339
    %2844 = vmatpush1.bf16.msra.mxu0 %v2338
    %2845 = vmatprep.subr.bf16.mxu0 %v2347
    %2846 = vmatpush1.bf16.msra.mxu0 %v2346
    %2847 = vmatprep.subr.bf16.mxu0 0
    %2848 = vmatpush1.bf16.msra.mxu0 0
    %2849 = vmatprep.subr.bf16.mxu0 0
    %2850 = vmatpush1.bf16.msra.mxu0 0
    %2851 = vmatprep.subr.bf16.mxu0 0
    %2852 = vmatpush1.bf16.msra.mxu0 0
    %2853 = vmatprep.subr.bf16.mxu0 0
    %2854 = vmatpush1.bf16.msra.mxu0 0
    %2855 = vmatprep.subr.bf16.mxu0 0
    %2856 = vmatpush1.bf16.msra.mxu0 0
    %2857 = vmatprep.subr.bf16.mxu0 0
    %2858 = vmatpush1.bf16.msra.mxu0 0
    %2859 = vmatprep.subr.bf16.mxu0 0
    %2860 = vmatpush1.bf16.msra.mxu0 0
    %2861 = vmatprep.subr.bf16.mxu0 0
    %2862 = vmatpush1.bf16.msra.mxu0 0
    %2863 = vmatprep.mubr.bf16.mxu0 0
    %2864 = vmatmul.mubr.bf16.gmra.mrb[0].mxu0 %v2476
    %v2865 = vpop.f32.mrb[0].mxu0
    %v2866 = vadd.f32 %v2367, %v2865
    %v2867 = vpop.f32.mrb[0].mxu0
    %v2868 = vadd.f32 %v2367, %v2867
    %v2869 = vpop.f32.mrb[0].mxu0
    %v2870 = vadd.f32 %v2372, %v2869
    %v2871 = vpop.f32.mrb[0].mxu0
    %v2872 = vadd.f32 %v2372, %v2871
    %2873 = vmatprep.mubr.bf16.mxu0 0
    %2874 = vmatmul.mubr.bf16.gmra.mrb[0].mxu0 %v2477
    %v2875 = vpop.f32.mrb[0].mxu0
    %v2876 = vadd.f32 %v2377, %v2875
    %v2877 = vpop.f32.mrb[0].mxu0
    %v2878 = vadd.f32 %v2377, %v2877
    %v2879 = vpop.f32.mrb[0].mxu0
    %v2880 = vadd.f32 %v2382, %v2879
    %v2881 = vpop.f32.mrb[0].mxu0
    %v2882 = vadd.f32 %v2382, %v2881
    %2883 = vmatprep.mubr.bf16.mxu0 0
    %2884 = vmatmul.mubr.bf16.gmra.mrb[0].mxu0 %v2478
    %v2885 = vpop.f32.mrb[0].mxu0
    %v2886 = vadd.f32 %v2387, %v2885
    %v2887 = vpop.f32.mrb[0].mxu0
    %v2888 = vadd.f32 %v2387, %v2887
    %v2889 = vpop.f32.mrb[0].mxu0
    %v2890 = vadd.f32 %v2392, %v2889
    %v2891 = vpop.f32.mrb[0].mxu0
    %v2892 = vadd.f32 %v2392, %v2891
    %2893 = vmatprep.mubr.bf16.mxu0 0
    %2894 = vmatmul.mubr.bf16.gmra.mrb[0].mxu0 %v2479
    %v2895 = vpop.f32.mrb[0].mxu0
    %v2896 = vadd.f32 %v2397, %v2895
    %v2897 = vpop.f32.mrb[0].mxu0
    %v2898 = vadd.f32 %v2397, %v2897
    %v2899 = vpop.f32.mrb[0].mxu0
    %v2900 = vadd.f32 %v2402, %v2899
    %v2901 = vpop.f32.mrb[0].mxu0
    %v2902 = vadd.f32 %v2402, %v2901
    %2903 = vmatprep.mubr.bf16.mxu0 0
    %2904 = vmatmul.mubr.bf16.gmra.mrb[0].mxu0 %v2480
    %v2905 = vpop.f32.mrb[0].mxu0
    %v2906 = vadd.f32 %v2407, %v2905
    %v2907 = vpop.f32.mrb[0].mxu0
    %v2908 = vadd.f32 %v2407, %v2907
    %v2909 = vpop.f32.mrb[0].mxu0
    %v2910 = vadd.f32 %v2412, %v2909
    %v2911 = vpop.f32.mrb[0].mxu0
    %v2912 = vadd.f32 %v2412, %v2911
    %2913 = vmatprep.mubr.bf16.mxu0 0
    %2914 = vmatmul.mubr.bf16.gmra.mrb[0].mxu0 %v2481
    %v2915 = vpop.f32.mrb[0].mxu0
    %v2916 = vadd.f32 %v2417, %v2915
    %v2917 = vpop.f32.mrb[0].mxu0
    %v2918 = vadd.f32 %v2417, %v2917
    %v2919 = vpop.f32.mrb[0].mxu0
    %v2920 = vadd.f32 %v2422, %v2919
    %v2921 = vpop.f32.mrb[0].mxu0
    %v2922 = vadd.f32 %v2422, %v2921
    %2923 = vmatprep.mubr.bf16.mxu0 0
    %2924 = vmatmul.mubr.bf16.gmra.mrb[0].mxu0 %v2482
    %v2925 = vpop.f32.mrb[0].mxu0
    %v2926 = vadd.f32 %v2427, %v2925
    %v2927 = vpop.f32.mrb[0].mxu0
    %v2928 = vadd.f32 %v2427, %v2927
    %v2929 = vpop.f32.mrb[0].mxu0
    %v2930 = vadd.f32 %v2432, %v2929
    %v2931 = vpop.f32.mrb[0].mxu0
    %v2932 = vadd.f32 %v2432, %v2931
    %2933 = vmatprep.mubr.bf16.mxu0 0
    %2934 = vmatmul.mubr.bf16.gmra.mrb[0].mxu0 %v2483
    %v2935 = vpop.f32.mrb[0].mxu0
    %v2936 = vadd.f32 %v2437, %v2935
    %v2937 = vpop.f32.mrb[0].mxu0
    %v2938 = vadd.f32 %v2437, %v2937
    %v2939 = vpop.f32.mrb[0].mxu0
    %v2940 = vadd.f32 %v2442, %v2939
    %v2941 = vpop.f32.mrb[0].mxu0
    %v2942 = vadd.f32 %v2442, %v2941
    %2943 = vdwg.mxu0
    %v2944 = vmax.f32 %v2527, 0.0
    %v2945 = vmax.f32 %v2529, 0.0
    %v2946 = vmax.f32 %v2640, 0.0
    %v2947 = vmax.f32 %v2642, 0.0
    %v2948 = vmax.f32 %v2753, 0.0
    %v2949 = vmax.f32 %v2755, 0.0
    %v2950 = vmax.f32 %v2866, 0.0
    %v2951 = vmax.f32 %v2868, 0.0
    %v2952 = vmax.f32 %v2531, 0.0
    %v2953 = vmax.f32 %v2533, 0.0
    %v2954 = vmax.f32 %v2644, 0.0
    %v2955 = vmax.f32 %v2646, 0.0
    %v2956 = vmax.f32 %v2757, 0.0
    %v2957 = vmax.f32 %v2759, 0.0
    %v2958 = vmax.f32 %v2870, 0.0
    %v2959 = vmax.f32 %v2872, 0.0
    %v2960 = vmax.f32 %v2537, 0.0
    %v2961 = vmax.f32 %v2539, 0.0
    %v2962 = vmax.f32 %v2650, 0.0
    %v2963 = vmax.f32 %v2652, 0.0
    %v2964 = vmax.f32 %v2763, 0.0
    %v2965 = vmax.f32 %v2765, 0.0
    %v2966 = vmax.f32 %v2876, 0.0
    %v2967 = vmax.f32 %v2878, 0.0
    %v2968 = vmax.f32 %v2541, 0.0
    %v2969 = vmax.f32 %v2543, 0.0
    %v2970 = vmax.f32 %v2654, 0.0
    %v2971 = vmax.f32 %v2656, 0.0
    %v2972 = vmax.f32 %v2767, 0.0
    %v2973 = vmax.f32 %v2769, 0.0
    %v2974 = vmax.f32 %v2880, 0.0
    %v2975 = vmax.f32 %v2882, 0.0
    %v2976 = vmax.f32 %v2547, 0.0
    %v2977 = vmax.f32 %v2549, 0.0
    %v2978 = vmax.f32 %v2660, 0.0
    %v2979 = vmax.f32 %v2662, 0.0
    %v2980 = vmax.f32 %v2773, 0.0
    %v2981 = vmax.f32 %v2775, 0.0
    %v2982 = vmax.f32 %v2886, 0.0
    %v2983 = vmax.f32 %v2888, 0.0
    %v2984 = vmax.f32 %v2551, 0.0
    %v2985 = vmax.f32 %v2553, 0.0
    %v2986 = vmax.f32 %v2664, 0.0
    %v2987 = vmax.f32 %v2666, 0.0
    %v2988 = vmax.f32 %v2777, 0.0
    %v2989 = vmax.f32 %v2779, 0.0
    %v2990 = vmax.f32 %v2890, 0.0
    %v2991 = vmax.f32 %v2892, 0.0
    %v2992 = vmax.f32 %v2557, 0.0
    %v2993 = vmax.f32 %v2559, 0.0
    %v2994 = vmax.f32 %v2670, 0.0
    %v2995 = vmax.f32 %v2672, 0.0
    %v2996 = vmax.f32 %v2783, 0.0
    %v2997 = vmax.f32 %v2785, 0.0
    %v2998 = vmax.f32 %v2896, 0.0
    %v2999 = vmax.f32 %v2898, 0.0
    %v3000 = vmax.f32 %v2561, 0.0
    %v3001 = vmax.f32 %v2563, 0.0
    %v3002 = vmax.f32 %v2674, 0.0
    %v3003 = vmax.f32 %v2676, 0.0
    %v3004 = vmax.f32 %v2787, 0.0
    %v3005 = vmax.f32 %v2789, 0.0
    %v3006 = vmax.f32 %v2900, 0.0
    %v3007 = vmax.f32 %v2902, 0.0
    %v3008 = vmax.f32 %v2567, 0.0
    %v3009 = vmax.f32 %v2569, 0.0
    %v3010 = vmax.f32 %v2680, 0.0
    %v3011 = vmax.f32 %v2682, 0.0
    %v3012 = vmax.f32 %v2793, 0.0
    %v3013 = vmax.f32 %v2795, 0.0
    %v3014 = vmax.f32 %v2906, 0.0
    %v3015 = vmax.f32 %v2908, 0.0
    %v3016 = vmax.f32 %v2571, 0.0
    %v3017 = vmax.f32 %v2573, 0.0
    %v3018 = vmax.f32 %v2684, 0.0
    %v3019 = vmax.f32 %v2686, 0.0
    %v3020 = vmax.f32 %v2797, 0.0
    %v3021 = vmax.f32 %v2799, 0.0
    %v3022 = vmax.f32 %v2910, 0.0
    %v3023 = vmax.f32 %v2912, 0.0
    %v3024 = vmax.f32 %v2577, 0.0
    %v3025 = vmax.f32 %v2579, 0.0
    %v3026 = vmax.f32 %v2690, 0.0
    %v3027 = vmax.f32 %v2692, 0.0
    %v3028 = vmax.f32 %v2803, 0.0
    %v3029 = vmax.f32 %v2805, 0.0
    %v3030 = vmax.f32 %v2916, 0.0
    %v3031 = vmax.f32 %v2918, 0.0
    %v3032 = vmax.f32 %v2581, 0.0
    %v3033 = vmax.f32 %v2583, 0.0
    %v3034 = vmax.f32 %v2694, 0.0
    %v3035 = vmax.f32 %v2696, 0.0
    %v3036 = vmax.f32 %v2807, 0.0
    %v3037 = vmax.f32 %v2809, 0.0
    %v3038 = vmax.f32 %v2920, 0.0
    %v3039 = vmax.f32 %v2922, 0.0
    %v3040 = vmax.f32 %v2587, 0.0
    %v3041 = vmax.f32 %v2589, 0.0
    %v3042 = vmax.f32 %v2700, 0.0
    %v3043 = vmax.f32 %v2702, 0.0
    %v3044 = vmax.f32 %v2813, 0.0
    %v3045 = vmax.f32 %v2815, 0.0
    %v3046 = vmax.f32 %v2926, 0.0
    %v3047 = vmax.f32 %v2928, 0.0
    %v3048 = vmax.f32 %v2591, 0.0
    %v3049 = vmax.f32 %v2593, 0.0
    %v3050 = vmax.f32 %v2704, 0.0
    %v3051 = vmax.f32 %v2706, 0.0
    %v3052 = vmax.f32 %v2817, 0.0
    %v3053 = vmax.f32 %v2819, 0.0
    %v3054 = vmax.f32 %v2930, 0.0
    %v3055 = vmax.f32 %v2932, 0.0
    %v3056 = vmax.f32 %v2597, 0.0
    %v3057 = vmax.f32 %v2599, 0.0
    %v3058 = vmax.f32 %v2710, 0.0
    %v3059 = vmax.f32 %v2712, 0.0
    %v3060 = vmax.f32 %v2823, 0.0
    %v3061 = vmax.f32 %v2825, 0.0
    %v3062 = vmax.f32 %v2936, 0.0
    %v3063 = vmax.f32 %v2938, 0.0
    %v3064 = vmax.f32 %v2601, 0.0
    %v3065 = vmax.f32 %v2603, 0.0
    %v3066 = vmax.f32 %v2714, 0.0
    %v3067 = vmax.f32 %v2716, 0.0
    %v3068 = vmax.f32 %v2827, 0.0
    %v3069 = vmax.f32 %v2829, 0.0
    %v3070 = vmax.f32 %v2940, 0.0
    %v3071 = vmax.f32 %v2942, 0.0
    %v3072 = vadd.f32 %v2140, %v2944
    %v3073 = vadd.f32 %v2141, %v2945
    %v3074 = vadd.f32 %v2142, %v2946
    %v3075 = vadd.f32 %v2143, %v2947
    %v3076 = vadd.f32 %v2144, %v2948
    %v3077 = vadd.f32 %v2145, %v2949
    %v3078 = vadd.f32 %v2146, %v2950
    %v3079 = vadd.f32 %v2147, %v2951
    %v3080 = vadd.f32 %v2148, %v2952
    %v3081 = vadd.f32 %v2149, %v2953
    %v3082 = vadd.f32 %v2150, %v2954
    %v3083 = vadd.f32 %v2151, %v2955
    %v3084 = vadd.f32 %v2152, %v2956
    %v3085 = vadd.f32 %v2153, %v2957
    %v3086 = vadd.f32 %v2154, %v2958
    %v3087 = vadd.f32 %v2155, %v2959
    %v3088 = vadd.f32 %v2156, %v2960
    %v3089 = vadd.f32 %v2157, %v2961
    %v3090 = vadd.f32 %v2158, %v2962
    %v3091 = vadd.f32 %v2159, %v2963
    %v3092 = vadd.f32 %v2160, %v2964
    %v3093 = vadd.f32 %v2161, %v2965
    %v3094 = vadd.f32 %v2162, %v2966
    %v3095 = vadd.f32 %v2163, %v2967
    %v3096 = vadd.f32 %v2164, %v2968
    %v3097 = vadd.f32 %v2165, %v2969
    %v3098 = vadd.f32 %v2166, %v2970
    %v3099 = vadd.f32 %v2167, %v2971
    %v3100 = vadd.f32 %v2168, %v2972
    %v3101 = vadd.f32 %v2169, %v2973
    %v3102 = vadd.f32 %v2170, %v2974
    %v3103 = vadd.f32 %v2171, %v2975
    %v3104 = vadd.f32 %v2172, %v2976
    %v3105 = vadd.f32 %v2173, %v2977
    %v3106 = vadd.f32 %v2174, %v2978
    %v3107 = vadd.f32 %v2175, %v2979
    %v3108 = vadd.f32 %v2176, %v2980
    %v3109 = vadd.f32 %v2177, %v2981
    %v3110 = vadd.f32 %v2178, %v2982
    %v3111 = vadd.f32 %v2179, %v2983
    %v3112 = vadd.f32 %v2180, %v2984
    %v3113 = vadd.f32 %v2181, %v2985
    %v3114 = vadd.f32 %v2182, %v2986
    %v3115 = vadd.f32 %v2183, %v2987
    %v3116 = vadd.f32 %v2184, %v2988
    %v3117 = vadd.f32 %v2185, %v2989
    %v3118 = vadd.f32 %v2186, %v2990
    %v3119 = vadd.f32 %v2187, %v2991
    %v3120 = vadd.f32 %v2188, %v2992
    %v3121 = vadd.f32 %v2189, %v2993
    %v3122 = vadd.f32 %v2190, %v2994
    %v3123 = vadd.f32 %v2191, %v2995
    %v3124 = vadd.f32 %v2192, %v2996
    %v3125 = vadd.f32 %v2193, %v2997
    %v3126 = vadd.f32 %v2194, %v2998
    %v3127 = vadd.f32 %v2195, %v2999
    %v3128 = vadd.f32 %v2196, %v3000
    %v3129 = vadd.f32 %v2197, %v3001
    %v3130 = vadd.f32 %v2198, %v3002
    %v3131 = vadd.f32 %v2199, %v3003
    %v3132 = vadd.f32 %v2200, %v3004
    %v3133 = vadd.f32 %v2201, %v3005
    %v3134 = vadd.f32 %v2202, %v3006
    %v3135 = vadd.f32 %v2203, %v3007
    %v3136 = vadd.f32 %v2204, %v3008
    %v3137 = vadd.f32 %v2205, %v3009
    %v3138 = vadd.f32 %v2206, %v3010
    %v3139 = vadd.f32 %v2207, %v3011
    %v3140 = vadd.f32 %v2208, %v3012
    %v3141 = vadd.f32 %v2209, %v3013
    %v3142 = vadd.f32 %v2210, %v3014
    %v3143 = vadd.f32 %v2211, %v3015
    %v3144 = vadd.f32 %v2212, %v3016
    %v3145 = vadd.f32 %v2213, %v3017
    %v3146 = vadd.f32 %v2214, %v3018
    %v3147 = vadd.f32 %v2215, %v3019
    %v3148 = vadd.f32 %v2216, %v3020
    %v3149 = vadd.f32 %v2217, %v3021
    %v3150 = vadd.f32 %v2218, %v3022
    %v3151 = vadd.f32 %v2219, %v3023
    %v3152 = vadd.f32 %v2220, %v3024
    %v3153 = vadd.f32 %v2221, %v3025
    %v3154 = vadd.f32 %v2222, %v3026
    %v3155 = vadd.f32 %v2223, %v3027
    %v3156 = vadd.f32 %v2224, %v3028
    %v3157 = vadd.f32 %v2225, %v3029
    %v3158 = vadd.f32 %v2226, %v3030
    %v3159 = vadd.f32 %v2227, %v3031
    %v3160 = vadd.f32 %v2228, %v3032
    %v3161 = vadd.f32 %v2229, %v3033
    %v3162 = vadd.f32 %v2230, %v3034
    %v3163 = vadd.f32 %v2231, %v3035
    %v3164 = vadd.f32 %v2232, %v3036
    %v3165 = vadd.f32 %v2233, %v3037
    %v3166 = vadd.f32 %v2234, %v3038
    %v3167 = vadd.f32 %v2235, %v3039
    %v3168 = vadd.f32 %v2236, %v3040
    %v3169 = vadd.f32 %v2237, %v3041
    %v3170 = vadd.f32 %v2238, %v3042
    %v3171 = vadd.f32 %v2239, %v3043
    %v3172 = vadd.f32 %v2240, %v3044
    %v3173 = vadd.f32 %v2241, %v3045
    %v3174 = vadd.f32 %v2242, %v3046
    %v3175 = vadd.f32 %v2243, %v3047
    %v3176 = vadd.f32 %v2244, %v3048
    %v3177 = vadd.f32 %v2245, %v3049
    %v3178 = vadd.f32 %v2246, %v3050
    %v3179 = vadd.f32 %v2247, %v3051
    %v3180 = vadd.f32 %v2248, %v3052
    %v3181 = vadd.f32 %v2249, %v3053
    %v3182 = vadd.f32 %v2250, %v3054
    %v3183 = vadd.f32 %v2251, %v3055
    %v3184 = vadd.f32 %v2252, %v3056
    %v3185 = vadd.f32 %v2253, %v3057
    %v3186 = vadd.f32 %v2254, %v3058
    %v3187 = vadd.f32 %v2255, %v3059
    %v3188 = vadd.f32 %v2256, %v3060
    %v3189 = vadd.f32 %v2257, %v3061
    %v3190 = vadd.f32 %v2258, %v3062
    %v3191 = vadd.f32 %v2259, %v3063
    %v3192 = vadd.f32 %v2260, %v3064
    %v3193 = vadd.f32 %v2261, %v3065
    %v3194 = vadd.f32 %v2262, %v3066
    %v3195 = vadd.f32 %v2263, %v3067
    %v3196 = vadd.f32 %v2264, %v3068
    %v3197 = vadd.f32 %v2265, %v3069
    %v3198 = vadd.f32 %v2266, %v3070
    %v3199 = vadd.f32 %v2267, %v3071
    %v3200 = vpack.c.bf16 %v3080, %v3072
    %v3201 = vpack.c.bf16 %v3081, %v3073
    %v3202 = vpack.c.bf16 %v3082, %v3074
    %v3203 = vpack.c.bf16 %v3083, %v3075
    %v3204 = vpack.c.bf16 %v3084, %v3076
    %v3205 = vpack.c.bf16 %v3085, %v3077
    %v3206 = vpack.c.bf16 %v3086, %v3078
    %v3207 = vpack.c.bf16 %v3087, %v3079
    %v3208 = vpack.c.bf16 %v3096, %v3088
    %v3209 = vpack.c.bf16 %v3097, %v3089
    %v3210 = vpack.c.bf16 %v3098, %v3090
    %v3211 = vpack.c.bf16 %v3099, %v3091
    %v3212 = vpack.c.bf16 %v3100, %v3092
    %v3213 = vpack.c.bf16 %v3101, %v3093
    %v3214 = vpack.c.bf16 %v3102, %v3094
    %v3215 = vpack.c.bf16 %v3103, %v3095
    %v3216 = vpack.c.bf16 %v3112, %v3104
    %v3217 = vpack.c.bf16 %v3113, %v3105
    %v3218 = vpack.c.bf16 %v3114, %v3106
    %v3219 = vpack.c.bf16 %v3115, %v3107
    %v3220 = vpack.c.bf16 %v3116, %v3108
    %v3221 = vpack.c.bf16 %v3117, %v3109
    %v3222 = vpack.c.bf16 %v3118, %v3110
    %v3223 = vpack.c.bf16 %v3119, %v3111
    %v3224 = vpack.c.bf16 %v3128, %v3120
    %v3225 = vpack.c.bf16 %v3129, %v3121
    %v3226 = vpack.c.bf16 %v3130, %v3122
    %v3227 = vpack.c.bf16 %v3131, %v3123
    %v3228 = vpack.c.bf16 %v3132, %v3124
    %v3229 = vpack.c.bf16 %v3133, %v3125
    %v3230 = vpack.c.bf16 %v3134, %v3126
    %v3231 = vpack.c.bf16 %v3135, %v3127
    %v3232 = vpack.c.bf16 %v3144, %v3136
    %v3233 = vpack.c.bf16 %v3145, %v3137
    %v3234 = vpack.c.bf16 %v3146, %v3138
    %v3235 = vpack.c.bf16 %v3147, %v3139
    %v3236 = vpack.c.bf16 %v3148, %v3140
    %v3237 = vpack.c.bf16 %v3149, %v3141
    %v3238 = vpack.c.bf16 %v3150, %v3142
    %v3239 = vpack.c.bf16 %v3151, %v3143
    %v3240 = vpack.c.bf16 %v3160, %v3152
    %v3241 = vpack.c.bf16 %v3161, %v3153
    %v3242 = vpack.c.bf16 %v3162, %v3154
    %v3243 = vpack.c.bf16 %v3163, %v3155
    %v3244 = vpack.c.bf16 %v3164, %v3156
    %v3245 = vpack.c.bf16 %v3165, %v3157
    %v3246 = vpack.c.bf16 %v3166, %v3158
    %v3247 = vpack.c.bf16 %v3167, %v3159
    %v3248 = vpack.c.bf16 %v3176, %v3168
    %v3249 = vpack.c.bf16 %v3177, %v3169
    %v3250 = vpack.c.bf16 %v3178, %v3170
    %v3251 = vpack.c.bf16 %v3179, %v3171
    %v3252 = vpack.c.bf16 %v3180, %v3172
    %v3253 = vpack.c.bf16 %v3181, %v3173
    %v3254 = vpack.c.bf16 %v3182, %v3174
    %v3255 = vpack.c.bf16 %v3183, %v3175
    %v3256 = vpack.c.bf16 %v3192, %v3184
    %v3257 = vpack.c.bf16 %v3193, %v3185
    %v3258 = vpack.c.bf16 %v3194, %v3186
    %v3259 = vpack.c.bf16 %v3195, %v3187
    %v3260 = vpack.c.bf16 %v3196, %v3188
    %v3261 = vpack.c.bf16 %v3197, %v3189
    %v3262 = vpack.c.bf16 %v3198, %v3190
    %v3263 = vpack.c.bf16 %v3199, %v3191
    %v3264 = vld [vmem:[%s9] sm:$0xf]
    %3265 = vmatprep.subr.bf16.mxu0 %v3201
    %3266 = vmatpush1.bf16.msra.mxu0 %v3200
    %3267 = vmatprep.subr.bf16.mxu0 %v3209
    %3268 = vmatpush1.bf16.msra.mxu0 %v3208
    %3269 = vmatprep.subr.bf16.mxu0 %v3217
    %3270 = vmatpush1.bf16.msra.mxu0 %v3216
    %3271 = vmatprep.subr.bf16.mxu0 %v3225
    %3272 = vmatpush1.bf16.msra.mxu0 %v3224
    %3273 = vmatprep.subr.bf16.mxu0 %v3233
    %3274 = vmatpush1.bf16.msra.mxu0 %v3232
    %3275 = vmatprep.subr.bf16.mxu0 %v3241
    %3276 = vmatpush1.bf16.msra.mxu0 %v3240
    %3277 = vmatprep.subr.bf16.mxu0 %v3249
    %3278 = vmatpush1.bf16.msra.mxu0 %v3248
    %3279 = vmatprep.subr.bf16.mxu0 %v3257
    %3280 = vmatpush1.bf16.msra.mxu0 %v3256
    %3281 = vmatprep.subr.bf16.mxu0 0
    %3282 = vmatpush1.bf16.msra.mxu0 0
    %3283 = vmatprep.subr.bf16.mxu0 0
    %3284 = vmatpush1.bf16.msra.mxu0 0
    %3285 = vmatprep.subr.bf16.mxu0 0
    %3286 = vmatpush1.bf16.msra.mxu0 0
    %3287 = vmatprep.subr.bf16.mxu0 0
    %3288 = vmatpush1.bf16.msra.mxu0 0
    %3289 = vmatprep.subr.bf16.mxu0 0
    %3290 = vmatpush1.bf16.msra.mxu0 0
    %3291 = vmatprep.subr.bf16.mxu0 0
    %3292 = vmatpush1.bf16.msra.mxu0 0
    %3293 = vmatprep.subr.bf16.mxu0 0
    %3294 = vmatpush1.bf16.msra.mxu0 0
    %3295 = vmatprep.subr.bf16.mxu0 0
    %3296 = vmatpush1.bf16.msra.mxu0 0
    %3297 = vmatprep.mubr.bf16.mxu0 0
    %3298 = vmatmul.mubr.bf16.gmra.mrb[0].mxu0 %v3264
    %v3299 = vpop.f32.mrb[0].mxu0
    %v3300 = vadd.f32 0.0, %v3299
    %v3301 = vpop.f32.mrb[0].mxu0
    %v3302 = vadd.f32 0.0, %v3301
    %v3303 = vpop.f32.mrb[0].mxu0
    %v3304 = vpop.f32.mrb[0].mxu0
    %3305 = vdwg.mxu0
    %3306 = vmatprep.subr.bf16.mxu0 %v3203
    %3307 = vmatpush1.bf16.msra.mxu0 %v3202
    %3308 = vmatprep.subr.bf16.mxu0 %v3211
    %3309 = vmatpush1.bf16.msra.mxu0 %v3210
    %3310 = vmatprep.subr.bf16.mxu0 %v3219
    %3311 = vmatpush1.bf16.msra.mxu0 %v3218
    %3312 = vmatprep.subr.bf16.mxu0 %v3227
    %3313 = vmatpush1.bf16.msra.mxu0 %v3226
    %3314 = vmatprep.subr.bf16.mxu0 %v3235
    %3315 = vmatpush1.bf16.msra.mxu0 %v3234
    %3316 = vmatprep.subr.bf16.mxu0 %v3243
    %3317 = vmatpush1.bf16.msra.mxu0 %v3242
    %3318 = vmatprep.subr.bf16.mxu0 %v3251
    %3319 = vmatpush1.bf16.msra.mxu0 %v3250
    %3320 = vmatprep.subr.bf16.mxu0 %v3259
    %3321 = vmatpush1.bf16.msra.mxu0 %v3258
    %3322 = vmatprep.subr.bf16.mxu0 0
    %3323 = vmatpush1.bf16.msra.mxu0 0
    %3324 = vmatprep.subr.bf16.mxu0 0
    %3325 = vmatpush1.bf16.msra.mxu0 0
    %3326 = vmatprep.subr.bf16.mxu0 0
    %3327 = vmatpush1.bf16.msra.mxu0 0
    %3328 = vmatprep.subr.bf16.mxu0 0
    %3329 = vmatpush1.bf16.msra.mxu0 0
    %3330 = vmatprep.subr.bf16.mxu0 0
    %3331 = vmatpush1.bf16.msra.mxu0 0
    %3332 = vmatprep.subr.bf16.mxu0 0
    %3333 = vmatpush1.bf16.msra.mxu0 0
    %3334 = vmatprep.subr.bf16.mxu0 0
    %3335 = vmatpush1.bf16.msra.mxu0 0
    %3336 = vmatprep.subr.bf16.mxu0 0
    %3337 = vmatpush1.bf16.msra.mxu0 0
    %3338 = vmatprep.mubr.bf16.mxu0 0
    %3339 = vmatmul.mubr.bf16.gmra.mrb[0].mxu0 %v3264
    %v3340 = vpop.f32.mrb[0].mxu0
    %v3341 = vadd.f32 0.0, %v3340
    %v3342 = vpop.f32.mrb[0].mxu0
    %v3343 = vadd.f32 0.0, %v3342
    %v3344 = vpop.f32.mrb[0].mxu0
    %v3345 = vpop.f32.mrb[0].mxu0
    %3346 = vdwg.mxu0
    %3347 = vmatprep.subr.bf16.mxu0 %v3205
    %3348 = vmatpush1.bf16.msra.mxu0 %v3204
    %3349 = vmatprep.subr.bf16.mxu0 %v3213
    %3350 = vmatpush1.bf16.msra.mxu0 %v3212
    %3351 = vmatprep.subr.bf16.mxu0 %v3221
    %3352 = vmatpush1.bf16.msra.mxu0 %v3220
    %3353 = vmatprep.subr.bf16.mxu0 %v3229
    %3354 = vmatpush1.bf16.msra.mxu0 %v3228
    %3355 = vmatprep.subr.bf16.mxu0 %v3237
    %3356 = vmatpush1.bf16.msra.mxu0 %v3236
    %3357 = vmatprep.subr.bf16.mxu0 %v3245
    %3358 = vmatpush1.bf16.msra.mxu0 %v3244
    %3359 = vmatprep.subr.bf16.mxu0 %v3253
    %3360 = vmatpush1.bf16.msra.mxu0 %v3252
    %3361 = vmatprep.subr.bf16.mxu0 %v3261
    %3362 = vmatpush1.bf16.msra.mxu0 %v3260
    %3363 = vmatprep.subr.bf16.mxu0 0
    %3364 = vmatpush1.bf16.msra.mxu0 0
    %3365 = vmatprep.subr.bf16.mxu0 0
    %3366 = vmatpush1.bf16.msra.mxu0 0
    %3367 = vmatprep.subr.bf16.mxu0 0
    %3368 = vmatpush1.bf16.msra.mxu0 0
    %3369 = vmatprep.subr.bf16.mxu0 0
    %3370 = vmatpush1.bf16.msra.mxu0 0
    %3371 = vmatprep.subr.bf16.mxu0 0
    %3372 = vmatpush1.bf16.msra.mxu0 0
    %3373 = vmatprep.subr.bf16.mxu0 0
    %3374 = vmatpush1.bf16.msra.mxu0 0
    %3375 = vmatprep.subr.bf16.mxu0 0
    %3376 = vmatpush1.bf16.msra.mxu0 0
    %3377 = vmatprep.subr.bf16.mxu0 0
    %3378 = vmatpush1.bf16.msra.mxu0 0
    %3379 = vmatprep.mubr.bf16.mxu0 0
    %3380 = vmatmul.mubr.bf16.gmra.mrb[0].mxu0 %v3264
    %v3381 = vpop.f32.mrb[0].mxu0
    %v3382 = vadd.f32 0.0, %v3381
    %v3383 = vpop.f32.mrb[0].mxu0
    %v3384 = vadd.f32 0.0, %v3383
    %v3385 = vpop.f32.mrb[0].mxu0
    %v3386 = vpop.f32.mrb[0].mxu0
    %3387 = vdwg.mxu0
    %3388 = vmatprep.subr.bf16.mxu0 %v3207
    %3389 = vmatpush1.bf16.msra.mxu0 %v3206
    %3390 = vmatprep.subr.bf16.mxu0 %v3215
    %3391 = vmatpush1.bf16.msra.mxu0 %v3214
    %3392 = vmatprep.subr.bf16.mxu0 %v3223
    %3393 = vmatpush1.bf16.msra.mxu0 %v3222
    %3394 = vmatprep.subr.bf16.mxu0 %v3231
    %3395 = vmatpush1.bf16.msra.mxu0 %v3230
    %3396 = vmatprep.subr.bf16.mxu0 %v3239
    %3397 = vmatpush1.bf16.msra.mxu0 %v3238
    %3398 = vmatprep.subr.bf16.mxu0 %v3247
    %3399 = vmatpush1.bf16.msra.mxu0 %v3246
    %3400 = vmatprep.subr.bf16.mxu0 %v3255
    %3401 = vmatpush1.bf16.msra.mxu0 %v3254
    %3402 = vmatprep.subr.bf16.mxu0 %v3263
    %3403 = vmatpush1.bf16.msra.mxu0 %v3262
    %3404 = vmatprep.subr.bf16.mxu0 0
    %3405 = vmatpush1.bf16.msra.mxu0 0
    %3406 = vmatprep.subr.bf16.mxu0 0
    %3407 = vmatpush1.bf16.msra.mxu0 0
    %3408 = vmatprep.subr.bf16.mxu0 0
    %3409 = vmatpush1.bf16.msra.mxu0 0
    %3410 = vmatprep.subr.bf16.mxu0 0
    %3411 = vmatpush1.bf16.msra.mxu0 0
    %3412 = vmatprep.subr.bf16.mxu0 0
    %3413 = vmatpush1.bf16.msra.mxu0 0
    %3414 = vmatprep.subr.bf16.mxu0 0
    %3415 = vmatpush1.bf16.msra.mxu0 0
    %3416 = vmatprep.subr.bf16.mxu0 0
    %3417 = vmatpush1.bf16.msra.mxu0 0
    %3418 = vmatprep.subr.bf16.mxu0 0
    %3419 = vmatpush1.bf16.msra.mxu0 0
    %3420 = vmatprep.mubr.bf16.mxu0 0
    %3421 = vmatmul.mubr.bf16.gmra.mrb[0].mxu0 %v3264
    %v3422 = vpop.f32.mrb[0].mxu0
    %v3423 = vadd.f32 0.0, %v3422
    %v3424 = vpop.f32.mrb[0].mxu0
    %v3425 = vadd.f32 0.0, %v3424
    %v3426 = vpop.f32.mrb[0].mxu0
    %v3427 = vpop.f32.mrb[0].mxu0
    %3428 = vdwg.mxu0
    %v3429 = vld [vmem:[#allocation2] sm:$0x1]
    %3431 = vset.pattern.permute.xlu0 0
    %3432 = vperm.xlu0 %3431, %v3429
    %v3433 = vpop.permute.xlu0 %3432
    %v3435 = vlaneseq
    %v3436 = vshrl.u32 %v3435, 7
    %v3437 = vsub.s32 0, %v3436
    %v3438 = vrot.slane %v3433, %v3437
    %v3439 = vadd.f32 %v3300, %v3438
    %v3440 = vadd.f32 %v3302, %v3438
    %v3441 = vadd.f32 %v3341, %v3438
    %v3442 = vadd.f32 %v3343, %v3438
    %v3443 = vadd.f32 %v3382, %v3438
    %v3444 = vadd.f32 %v3384, %v3438
    %v3445 = vadd.f32 %v3423, %v3438
    %v3446 = vadd.f32 %v3425, %v3438
    %v3447 = vxor.u32 %v3439, 2147483648
    %v3448 = vxor.u32 %v3440, 2147483648
    %v3449 = vxor.u32 %v3441, 2147483648
    %v3450 = vxor.u32 %v3442, 2147483648
    %v3451 = vxor.u32 %v3443, 2147483648
    %v3452 = vxor.u32 %v3444, 2147483648
    %v3453 = vxor.u32 %v3445, 2147483648
    %v3454 = vxor.u32 %v3446, 2147483648
    %v3455 = vmul.f32 %v3447, 1.442695
    %v3456 = vpow.pop %v3455
    %v3457 = vmul.f32 %v3448, 1.442695
    %v3458 = vpow.pop %v3457
    %v3459 = vmul.f32 %v3449, 1.442695
    %v3460 = vpow.pop %v3459
    %v3461 = vmul.f32 %v3450, 1.442695
    %v3462 = vpow.pop %v3461
    %v3463 = vmul.f32 %v3451, 1.442695
    %v3464 = vpow.pop %v3463
    %v3465 = vmul.f32 %v3452, 1.442695
    %v3466 = vpow.pop %v3465
    %v3467 = vmul.f32 %v3453, 1.442695
    %v3468 = vpow.pop %v3467
    %v3469 = vmul.f32 %v3454, 1.442695
    %v3470 = vpow.pop %v3469
    %v3471 = vadd.f32 %v3456, 1.0
    %v3472 = vadd.f32 %v3458, 1.0
    %v3473 = vadd.f32 %v3460, 1.0
    %v3474 = vadd.f32 %v3462, 1.0
    %v3475 = vadd.f32 %v3464, 1.0
    %v3476 = vadd.f32 %v3466, 1.0
    %v3477 = vadd.f32 %v3468, 1.0
    %v3478 = vadd.f32 %v3470, 1.0
    %v3479 = vrcp.pop %v3471
    %v3480 = vmul.f32 1.0, %v3479
    %v3481 = vrcp.pop %v3472
    %v3482 = vmul.f32 1.0, %v3481
    %v3483 = vrcp.pop %v3473
    %v3484 = vmul.f32 1.0, %v3483
    %v3485 = vrcp.pop %v3474
    %v3486 = vmul.f32 1.0, %v3485
    %v3487 = vrcp.pop %v3475
    %v3488 = vmul.f32 1.0, %v3487
    %v3489 = vrcp.pop %v3476
    %v3490 = vmul.f32 1.0, %v3489
    %v3491 = vrcp.pop %v3477
    %v3492 = vmul.f32 1.0, %v3491
    %v3493 = vrcp.pop %v3478
    %v3494 = vmul.f32 1.0, %v3493
    %v3495 = vmul.f32 %v3480, 12.5
    %v3496 = vmul.f32 %v3482, 12.5
    %v3497 = vmul.f32 %v3484, 12.5
    %v3498 = vmul.f32 %v3486, 12.5
    %v3499 = vmul.f32 %v3488, 12.5
    %v3500 = vmul.f32 %v3490, 12.5
    %v3501 = vmul.f32 %v3492, 12.5
    %v3502 = vmul.f32 %v3494, 12.5
    %v3511 = vcombine.low %v3495, %v3496
    %v3512 = vcombine.low %v3497, %v3498
    %v3513 = vcombine.low %v3499, %v3500
    %v3514 = vcombine.low %v3501, %v3502
    %v3516 = vunpack.c.l.s4 1966171168
    %v3517 = vunpack.c.0.s8 %v3516
    %v3518 = vlaneseq
    %v3519 = vshrl.u32 %v3518, 7
    %v3520 = vsub.s32 %v3517, %v3519
    %v3521 = vrot.slane %v3511, %v3520
    %v3523 = vunpack.c.l.s4 1966171168
    %v3524 = vunpack.c.0.s8 %v3523
    %v3525 = vlaneseq
    %v3526 = vshrl.u32 %v3525, 7
    %v3527 = vsub.s32 %v3524, %v3526
    %v3528 = vrot.slane %v3512, %v3527
    %v3530 = vunpack.c.l.s4 1966171168
    %v3531 = vunpack.c.0.s8 %v3530
    %v3532 = vlaneseq
    %v3533 = vshrl.u32 %v3532, 7
    %v3534 = vsub.s32 %v3531, %v3533
    %v3535 = vrot.slane %v3513, %v3534
    %v3537 = vunpack.c.l.s4 1966171168
    %v3538 = vunpack.c.0.s8 %v3537
    %v3539 = vlaneseq
    %v3540 = vshrl.u32 %v3539, 7
    %v3541 = vsub.s32 %v3538, %v3540
    %v3542 = vrot.slane %v3514, %v3541
    %v3543 = vcombine.low %v3521, %v3528
    %v3544 = vcombine.low %v3535, %v3542
    %v3546 = vunpack.c.l.s4 1966171168
    %v3547 = vunpack.c.0.s8 %v3546
    %v3548 = vlaneseq
    %v3549 = vshrl.u32 %v3548, 7
    %v3550 = vsub.s32 %v3547, %v3549
    %v3551 = vrot.slane %v3543, %v3550
    %v3553 = vunpack.c.l.s4 1966171168
    %v3554 = vunpack.c.0.s8 %v3553
    %v3555 = vlaneseq
    %v3556 = vshrl.u32 %v3555, 7
    %v3557 = vsub.s32 %v3554, %v3556
    %v3558 = vrot.slane %v3544, %v3557
    %v3559 = vcombine.low %v3551, %v3558
    %3561 = vst [vmem:[#allocation3] sm:$0xff] %v3559
    // Predicated region
    $region46: #{tpu_custom_call.1} parent=1 // pred_check
      _
    $region47: #{tpu_custom_call.1} parent=1 // pred_check_branch
      %3563 = sbr.rel (0) target = $region49
    $region48: #{tpu_custom_call.1} parent=1 // pred_region
      %s3565 = ssub.s32 128, 128
      %3566 = vsyncadd [#allocation4], %s3565
      %s3568 = sshll.u32 [#allocation3], 4
      %s3569 = int_to_ptr.vmem [resolvable:$true] %s3568
      %3571 = dma.vmem_to_hbm [thread:$0]  %s3569, 128, %s11, [#allocation4]
    $region49: #{tpu_custom_call.1} parent=1 // pred_fallthru
      _
    // Predicated region
    $region50: #{tpu_custom_call.1} parent=1 // pred_check
      _
    $region51: #{tpu_custom_call.1} parent=1 // pred_check_branch
      %3573 = sbr.rel (0) target = $region53
    $region52: #{tpu_custom_call.1} parent=1 // pred_region
      %3574 = dma.done [#allocation4], 128
    $region53: #{tpu_custom_call.1} parent=1 // pred_fallthru
      _
    %3575 = vsyncpa [#allocation4], 1

</llo_original>
